<compile_context>
chip_gen: v5e
topology: v5e:2x2
jax: 0.10.0
libtpu: 0.0.40
codegen_flags: <defaults>
</compile_context>

<pallas_src>
import jax
import jax.numpy as jnp
from jax import lax
from jax.experimental import pallas as pl
from jax.experimental.pallas import tpu as pltpu

EXPANSION = 4
BN_EPS = 1e-5
LANE = 128


def _round_up(x, m):
    return ((x + m - 1) // m) * m


def _pick_row_tile(h, target=8):
    # Largest divisor of h that is <= target (keeps TH*W*C tiles VMEM-friendly).
    for th in range(min(target, h), 0, -1):
        if h % th == 0:
            return th
    return h


# ----------------------------------------------------------------------------
# Fused bottleneck kernel (one grid step = one (n, TH-row) tile)
# ----------------------------------------------------------------------------
def _make_bottleneck_kernel(TH, W, cm_p, co_p, has_projection, compute_dtype):
    nrows = (TH + 2) * W          # h1 rows incl. 1-row halo top/bottom (flattened H*W)
    cdt = compute_dtype

    def kernel(x_c, x_t, x_b, col_ref, w1, s1, b1, w2, s2, b2, w3, s3, b3, *rest):
        if has_projection:
            ws, ss, bs, o_ref, h1_scr = rest
        else:
            o_ref, h1_scr = rest

        t = pl.program_id(1)
        nt = pl.num_programs(1)
        cin_p = x_c.shape[-1]

        # ---------------- stage 1: 1x1 conv + BN + ReLU -------------------
        # Stage-1 weights / folded-BN read once per step and reused for the halos.
        w1v, s1v, b1v = w1[...], s1[...], b1[...]

        # center rows (TH*W, Cin_p)
        xc2d = x_c[0].reshape(TH * W, cin_p)
        h = jnp.dot(xc2d, w1v, preferred_element_type=jnp.float32)
        h = jnp.maximum(h * s1v + b1v, 0.0)
        h1_scr[W:(TH + 1) * W, :] = h

        def h1_row(xrow):  # (W, Cin_p) -> (W, Cm_p) f32
            r = jnp.dot(xrow, w1v, preferred_element_type=jnp.float32)
            return jnp.maximum(r * s1v + b1v, 0.0)

        # halo rows: pl.when skips the matmul entirely at the image boundary
        # (implements the pad=1 zero rows of the 3x3 conv).
        @pl.when(t == 0)
        def _():
            h1_scr[0:W, :] = jnp.zeros((W, cm_p), h1_scr.dtype)

        @pl.when(t > 0)
        def _():
            h1_scr[0:W, :] = h1_row(x_t[0, 0])

        @pl.when(t == nt - 1)
        def _():
            h1_scr[(TH + 1) * W:, :] = jnp.zeros((W, cm_p), h1_scr.dtype)

        @pl.when(t < nt - 1)
        def _():
            h1_scr[(TH + 1) * W:, :] = h1_row(x_b[0, 0])

        # ---------------- stage 2: 3x3 conv (stride 1, pad 1) + BN + ReLU --
        col = col_ref[...]               # (nrows, 1) int32, value = index % W
        slab0 = h1_scr[...]              # single read of the halo'd h1 slab (f32)
        acc = jnp.zeros((TH * W, cm_p), jnp.float32)   # register-resident accumulator
        for kw in range(3):
            if kw == 1:
                slab = slab0
            else:
                # column shift via XLU roll on the flattened (row*W + col) axis;
                # the wrapped / out-of-image column is exactly the edge we zero.
                slab = pltpu.roll(slab0, shift=(1 - kw) % nrows, axis=0)
                edge = 0 if kw == 0 else W - 1
                slab = jnp.where(col == edge, 0.0, slab)
            slab = slab.astype(cdt)
            for kh in range(3):
                blk = slab[kh * W:(kh + TH) * W, :]      # aligned leading-dim slice
                acc = acc + jnp.dot(blk, w2[kh * 3 + kw],
                                    preferred_element_type=jnp.float32)

        h2 = jnp.maximum(acc * s2[...] + b2[...], 0.0).astype(cdt)

        # ---------------- stage 3: 1x1 conv + BN + shortcut + ReLU ---------
        y = jnp.dot(h2, w3[...], preferred_element_type=jnp.float32)
        y = y * s3[...] + b3[...]
        if has_projection:
            sc = jnp.dot(xc2d, ws[...], preferred_element_type=jnp.float32)
            y = y + (sc * ss[...] + bs[...])
        else:
            y = y + xc2d.astype(jnp.float32)    # identity shortcut: plain add
        o_ref[0] = jnp.maximum(y, 0.0).reshape(TH, W, co_p).astype(o_ref.dtype)

    return kernel


# ----------------------------------------------------------------------------
# Wrapper: NCHW in/out (PyTorch layout).  Internally NHWC, channels padded to 128.
# ----------------------------------------------------------------------------
def bottleneck_forward(x_nchw, params, *, compute_dtype=jnp.float32, row_tile=8):
    N, Cin, H, W = x_nchw.shape
    planes = params["w1"].shape[1]
    out_planes = params["w3"].shape[1]
    has_projection = "ws" in params

    cin_p = _round_up(Cin, LANE)
    cm_p = _round_up(planes, LANE)
    co_p = _round_up(out_planes, LANE)
    TH = _pick_row_tile(H, row_tile)
    cdt = compute_dtype

    def pad2(a, r, c):
        return jnp.pad(a, ((0, r - a.shape[0]), (0, c - a.shape[1])))

    # lane-dense (zero-padded) weights / folded-BN params; matmul operands in cdt
    w1 = pad2(params["w1"], cin_p, cm_p).astype(cdt)
    w2 = jnp.pad(params["w2"],
                 ((0, 0), (0, cm_p - planes), (0, cm_p - planes))).astype(cdt)
    w3 = pad2(params["w3"], cm_p, co_p).astype(cdt)
    s1, b1 = pad2(params["s1"], 1, cm_p), pad2(params["b1"], 1, cm_p)
    s2, b2 = pad2(params["s2"], 1, cm_p), pad2(params["b2"], 1, cm_p)
    s3, b3 = pad2(params["s3"], 1, co_p), pad2(params["b3"], 1, co_p)

    # NCHW -> NHWC, channel padding (glue)
    x = jnp.transpose(x_nchw, (0, 2, 3, 1))
    x = jnp.pad(x, ((0, 0), (0, 0), (0, 0), (0, cin_p - Cin))).astype(cdt)

    # column-index-within-row lookup (used to zero the wrapped column after roll)
    col_id = (jnp.arange((TH + 2) * W, dtype=jnp.int32) % W).reshape(-1, 1)

    operands = [x, x, x, col_id, w1, s1, b1, w2, s2, b2, w3, s3, b3]
    in_specs = [
        # x: center rows of the tile
        pl.BlockSpec((1, TH, W, cin_p), lambda n, t: (n, t, 0, 0)),
        # x: one halo row above (clamped; zeroed in-kernel at t == 0)
        pl.BlockSpec((1, 1, W, cin_p),
                     lambda n, t: (n, jnp.maximum(t * TH - 1, 0), 0, 0)),
        # x: one halo row below (clamped; zeroed in-kernel at last tile)
        pl.BlockSpec((1, 1, W, cin_p),
                     lambda n, t: (n, jnp.minimum((t + 1) * TH, H - 1), 0, 0)),
        pl.BlockSpec(((TH + 2) * W, 1), lambda n, t: (0, 0)),
        pl.BlockSpec((cin_p, cm_p), lambda n, t: (0, 0)),
        pl.BlockSpec((1, cm_p), lambda n, t: (0, 0)),
        pl.BlockSpec((1, cm_p), lambda n, t: (0, 0)),
        pl.BlockSpec((9, cm_p, cm_p), lambda n, t: (0, 0, 0)),
        pl.BlockSpec((1, cm_p), lambda n, t: (0, 0)),
        pl.BlockSpec((1, cm_p), lambda n, t: (0, 0)),
        pl.BlockSpec((cm_p, co_p), lambda n, t: (0, 0)),
        pl.BlockSpec((1, co_p), lambda n, t: (0, 0)),
        pl.BlockSpec((1, co_p), lambda n, t: (0, 0)),
    ]
    if has_projection:
        ws = pad2(params["ws"], cin_p, co_p).astype(cdt)
        ss, bs = pad2(params["ss"], 1, co_p), pad2(params["bs"], 1, co_p)
        operands += [ws, ss, bs]
        in_specs += [
            pl.BlockSpec((cin_p, co_p), lambda n, t: (0, 0)),
            pl.BlockSpec((1, co_p), lambda n, t: (0, 0)),
            pl.BlockSpec((1, co_p), lambda n, t: (0, 0)),
        ]

    kernel = _make_bottleneck_kernel(TH, W, cm_p, co_p, has_projection, cdt)
    out = pl.pallas_call(
        kernel,
        out_shape=jax.ShapeDtypeStruct((N, H, W, co_p), jnp.float32),
        grid=(N, H // TH),
        in_specs=in_specs,
        out_specs=pl.BlockSpec((1, TH, W, co_p), lambda n, t: (n, t, 0, 0)),
        scratch_shapes=[
            pltpu.VMEM(((TH + 2) * W, cm_p), jnp.float32),  # h1 (+row halo), f32
        ],
        compiler_params=pltpu.CompilerParams(
            dimension_semantics=("parallel", "parallel")),
    )(*operands)

    out = out[:, :, :, :out_planes]            # drop channel padding (glue)
    return jnp.transpose(out, (0, 3, 1, 2))    # NHWC -> NCHW


# ----------------------------------------------------------------------------
# Parameter construction (deterministic, synthetic) with folded BN
# ----------------------------------------------------------------------------
def fold_bn(gamma, beta, mean, var, eps=BN_EPS):
    scale = gamma / jnp.sqrt(var + eps)
    bias = beta - mean * scale
    return scale.reshape(1, -1), bias.reshape(1, -1)


def make_params(key, in_planes, planes):
    out_planes = EXPANSION * planes
    ks = jax.random.split(key, 8)

    def bn_params(k, c):
        k1, k2, k3, k4 = jax.random.split(k, 4)
        gamma = 0.5 + jax.random.uniform(k1, (c,), jnp.float32)
        beta = 0.1 * jax.random.normal(k2, (c,), jnp.float32)
        mean = 0.1 * jax.random.normal(k3, (c,), jnp.float32)
        var = 0.5 + jax.random.uniform(k4, (c,), jnp.float32)
        return fold_bn(gamma, beta, mean, var)

    p = {}
    p["w1"] = 0.2 * jax.random.normal(ks[0], (in_planes, planes), jnp.float32)
    p["s1"], p["b1"] = bn_params(ks[1], planes)
    p["w2"] = 0.2 * jax.random.normal(ks[2], (9, planes, planes), jnp.float32)
    p["s2"], p["b2"] = bn_params(ks[3], planes)
    p["w3"] = 0.2 * jax.random.normal(ks[4], (planes, out_planes), jnp.float32)
    p["s3"], p["b3"] = bn_params(ks[5], out_planes)
    if in_planes != out_planes:  # projection shortcut (stride=1)
        p["ws"] = 0.2 * jax.random.normal(ks[6], (in_planes, out_planes), jnp.float32)
        p["ss"], p["bs"] = bn_params(ks[7], out_planes)
    return p


# ----------------------------------------------------------------------------
# Pure-JAX reference (for sanity checking)
# ----------------------------------------------------------------------------
def bottleneck_reference(x_nchw, params):
    x = jnp.transpose(x_nchw, (0, 2, 3, 1))
    dn = ("NHWC", "HWIO", "NHWC")

    def conv(inp, w_hwio):
        return lax.conv_general_dilated(inp, w_hwio, (1, 1), "SAME",
                                        dimension_numbers=dn)

    planes = params["w1"].shape[1]
    w1 = params["w1"].reshape(1, 1, *params["w1"].shape)
    w2 = params["w2"].reshape(3, 3, planes, planes)
    w3 = params["w3"].reshape(1, 1, *params["w3"].shape)

    h = jnp.maximum(conv(x, w1) * params["s1"] + params["b1"], 0.0)
    h = jnp.maximum(conv(h, w2) * params["s2"] + params["b2"], 0.0)
    h = conv(h, w3) * params["s3"] + params["b3"]
    if "ws" in params:
        ws = params["ws"].reshape(1, 1, *params["ws"].shape)
        sc = conv(x, ws) * params["ss"] + params["bs"]
    else:
        sc = x
    out = jnp.maximum(h + sc, 0.0)
    return jnp.transpose(out, (0, 3, 1, 2))


if __name__ == "__main__":
    key = jax.random.PRNGKey(0)
    k_x, k_p, k_x2, k_p2 = jax.random.split(key, 4)

    # config 1: projection shortcut (in_planes != expansion*planes)
    N, in_planes, H, W = 2, 4, 16, 16
    planes = 4
    x = jax.random.normal(k_x, (N, in_planes, H, W), jnp.float32)
    params = make_params(k_p, in_planes, planes)

    out = jax.block_until_ready(bottleneck_forward(x, params))          # f32 path
    ref = bottleneck_reference(x, params)
    assert out.shape == (N, EXPANSION * planes, H, W), out.shape
    assert jnp.allclose(out, ref, atol=1e-3, rtol=1e-3), "f32 mismatch vs reference"

    # bf16 MXU operands, f32 epilogue (perf path for v6e/v7x)
    out_bf16 = jax.block_until_ready(
        bottleneck_forward(x, params, compute_dtype=jnp.bfloat16))
    assert jnp.allclose(out_bf16, ref, atol=1e-1, rtol=1e-1), "bf16 mismatch vs reference"

    # config 2: identity shortcut (in_planes == expansion*planes) -> no projection matmul
    in_planes2, planes2 = 16, 4
    x2 = jax.random.normal(k_x2, (N, in_planes2, H, W), jnp.float32)
    params2 = make_params(k_p2, in_planes2, planes2)
    out2 = jax.block_until_ready(bottleneck_forward(x2, params2))
    ref2 = bottleneck_reference(x2, params2)
    assert jnp.allclose(out2, ref2, atol=1e-3, rtol=1e-3), "identity mismatch vs reference"

    print("KERNEL_OK")
</pallas_src>

<mosaic_0001>
module attributes {stable_mosaic.version = 11 : i64} {
  func.func @kernel(%arg0: i32, %arg1: i32, %arg2: memref<1x8x16x128xf32, #tpu.memory_space<vmem>>, %arg3: memref<1x1x16x128xf32, #tpu.memory_space<vmem>>, %arg4: memref<1x1x16x128xf32, #tpu.memory_space<vmem>>, %arg5: memref<160x1xi32, #tpu.memory_space<vmem>>, %arg6: memref<128x128xf32, #tpu.memory_space<vmem>>, %arg7: memref<1x128xf32, #tpu.memory_space<vmem>>, %arg8: memref<1x128xf32, #tpu.memory_space<vmem>>, %arg9: memref<9x128x128xf32, #tpu.memory_space<vmem>>, %arg10: memref<1x128xf32, #tpu.memory_space<vmem>>, %arg11: memref<1x128xf32, #tpu.memory_space<vmem>>, %arg12: memref<128x128xf32, #tpu.memory_space<vmem>>, %arg13: memref<1x128xf32, #tpu.memory_space<vmem>>, %arg14: memref<1x128xf32, #tpu.memory_space<vmem>>, %arg15: memref<128x128xf32, #tpu.memory_space<vmem>>, %arg16: memref<1x128xf32, #tpu.memory_space<vmem>>, %arg17: memref<1x128xf32, #tpu.memory_space<vmem>>, %arg18: memref<1x8x16x128xf32, #tpu.memory_space<vmem>>, %arg19: memref<160x128xf32, #tpu.memory_space<vmem>>) attributes {dimension_semantics = [#tpu.dimension_semantics<parallel>, #tpu.dimension_semantics<parallel>], iteration_bounds = array<i64: 2, 2>, scalar_prefetch = 0 : i64, scratch_operands = 1 : i64, tpu.core_type = #tpu.core_type<tc>, window_params = [{transform_indices = @transform_0, window_bounds = array<i64: 1, 8, 16, 128>}, {transform_indices = @transform_1, window_bounds = array<i64: 1, 1, 16, 128>}, {transform_indices = @transform_2, window_bounds = array<i64: 1, 1, 16, 128>}, {pipeline_mode = #tpu.pipeline_mode<synchronous>, transform_indices = @transform_3, window_bounds = array<i64: 160, 1>}, {pipeline_mode = #tpu.pipeline_mode<synchronous>, transform_indices = @transform_4, window_bounds = array<i64: 128, 128>}, {pipeline_mode = #tpu.pipeline_mode<synchronous>, transform_indices = @transform_5, window_bounds = array<i64: 1, 128>}, {pipeline_mode = #tpu.pipeline_mode<synchronous>, transform_indices = @transform_6, window_bounds = array<i64: 1, 128>}, {pipeline_mode = #tpu.pipeline_mode<synchronous>, transform_indices = @transform_7, window_bounds = array<i64: 9, 128, 128>}, {pipeline_mode = #tpu.pipeline_mode<synchronous>, transform_indices = @transform_8, window_bounds = array<i64: 1, 128>}, {pipeline_mode = #tpu.pipeline_mode<synchronous>, transform_indices = @transform_9, window_bounds = array<i64: 1, 128>}, {pipeline_mode = #tpu.pipeline_mode<synchronous>, transform_indices = @transform_10, window_bounds = array<i64: 128, 128>}, {pipeline_mode = #tpu.pipeline_mode<synchronous>, transform_indices = @transform_11, window_bounds = array<i64: 1, 128>}, {pipeline_mode = #tpu.pipeline_mode<synchronous>, transform_indices = @transform_12, window_bounds = array<i64: 1, 128>}, {pipeline_mode = #tpu.pipeline_mode<synchronous>, transform_indices = @transform_13, window_bounds = array<i64: 128, 128>}, {pipeline_mode = #tpu.pipeline_mode<synchronous>, transform_indices = @transform_14, window_bounds = array<i64: 1, 128>}, {pipeline_mode = #tpu.pipeline_mode<synchronous>, transform_indices = @transform_15, window_bounds = array<i64: 1, 128>}, {transform_indices = @transform_16, window_bounds = array<i64: 1, 8, 16, 128>}]} {
    %c0 = arith.constant 0 : index
    %c0_0 = arith.constant 0 : index
    %0 = vector.load %arg6[%c0, %c0_0] : memref<128x128xf32, #tpu.memory_space<vmem>>, vector<128x128xf32>
    %c0_1 = arith.constant 0 : index
    %c0_2 = arith.constant 0 : index
    %1 = vector.load %arg7[%c0_1, %c0_2] : memref<1x128xf32, #tpu.memory_space<vmem>>, vector<1x128xf32>
    %c0_3 = arith.constant 0 : index
    %c0_4 = arith.constant 0 : index
    %2 = vector.load %arg8[%c0_3, %c0_4] : memref<1x128xf32, #tpu.memory_space<vmem>>, vector<1x128xf32>
    %c0_5 = arith.constant 0 : index
    %c0_6 = arith.constant 0 : index
    %c0_7 = arith.constant 0 : index
    %c0_8 = arith.constant 0 : index
    %3 = vector.load %arg2[%c0_5, %c0_6, %c0_7, %c0_8] : memref<1x8x16x128xf32, #tpu.memory_space<vmem>>, vector<1x8x16x128xf32>
    %4 = vector.shape_cast %3 : vector<1x8x16x128xf32> to vector<8x16x128xf32>
    %5 = vector.shape_cast %4 : vector<8x16x128xf32> to vector<128x128xf32>
    %cst = arith.constant dense<0.000000e+00> : vector<128x128xf32>
    %6 = tpu.matmul %5, %0, %cst {dimension_numbers = #tpu.dot_dimension_numbers<[1], [0], [0], [1], [0, 0, 1, 1], [], []>} : vector<128x128xf32>, vector<128x128xf32>, vector<128x128xf32> -> vector<128x128xf32>
    %7 = vector.broadcast %1 : vector<1x128xf32> to vector<128x128xf32>
    %8 = arith.mulf %6, %7 : vector<128x128xf32>
    %9 = vector.broadcast %2 : vector<1x128xf32> to vector<128x128xf32>
    %10 = arith.addf %8, %9 : vector<128x128xf32>
    %cst_9 = arith.constant 0.000000e+00 : f32
    %11 = vector.broadcast %cst_9 : f32 to vector<128x128xf32>
    %12 = arith.maximumf %10, %11 : vector<128x128xf32>
    %c16 = arith.constant 16 : index
    %c0_10 = arith.constant 0 : index
    %13 = vector.load %arg19[%c16, %c0_10] : memref<160x128xf32, #tpu.memory_space<vmem>>, vector<128x128xf32>
    tpu.vector_store %arg19[%c16, %c0_10], %12 {strides = array<i32>} : memref<160x128xf32, #tpu.memory_space<vmem>>, vector<128x128xf32>,
    %c0_i32 = arith.constant 0 : i32
    %14 = arith.cmpi eq, %arg1, %c0_i32 : i32
    %15 = arith.extui %14 : i1 to i32
    %c0_i32_11 = arith.constant 0 : i32
    %16 = arith.cmpi ne, %15, %c0_i32_11 : i32
    scf.if %16 {
      %cst_78 = arith.constant 0.000000e+00 : f32
      %119 = vector.broadcast %cst_78 : f32 to vector<16x128xf32>
      %c0_79 = arith.constant 0 : index
      %c0_80 = arith.constant 0 : index
      %120 = vector.load %arg19[%c0_79, %c0_80] : memref<160x128xf32, #tpu.memory_space<vmem>>, vector<16x128xf32>
      tpu.vector_store %arg19[%c0_79, %c0_80], %119 {strides = array<i32>} : memref<160x128xf32, #tpu.memory_space<vmem>>, vector<16x128xf32>,
    } else {
    }
    %c0_i32_12 = arith.constant 0 : i32
    %17 = arith.cmpi sgt, %arg1, %c0_i32_12 : i32
    %18 = arith.extui %17 : i1 to i32
    %c0_i32_13 = arith.constant 0 : i32
    %19 = arith.cmpi ne, %18, %c0_i32_13 : i32
    scf.if %19 {
      %c0_78 = arith.constant 0 : index
      %c0_79 = arith.constant 0 : index
      %c0_80 = arith.constant 0 : index
      %c0_81 = arith.constant 0 : index
      %119 = vector.load %arg3[%c0_78, %c0_79, %c0_80, %c0_81] : memref<1x1x16x128xf32, #tpu.memory_space<vmem>>, vector<1x1x16x128xf32>
      %120 = vector.shape_cast %119 : vector<1x1x16x128xf32> to vector<16x128xf32>
      %cst_82 = arith.constant dense<0.000000e+00> : vector<16x128xf32>
      %121 = tpu.matmul %120, %0, %cst_82 {dimension_numbers = #tpu.dot_dimension_numbers<[1], [0], [0], [1], [0, 0, 1, 1], [], []>} : vector<16x128xf32>, vector<128x128xf32>, vector<16x128xf32> -> vector<16x128xf32>
      %122 = vector.broadcast %1 : vector<1x128xf32> to vector<16x128xf32>
      %123 = arith.mulf %121, %122 : vector<16x128xf32>
      %124 = vector.broadcast %2 : vector<1x128xf32> to vector<16x128xf32>
      %125 = arith.addf %123, %124 : vector<16x128xf32>
      %cst_83 = arith.constant 0.000000e+00 : f32
      %126 = vector.broadcast %cst_83 : f32 to vector<16x128xf32>
      %127 = arith.maximumf %125, %126 : vector<16x128xf32>
      %c0_84 = arith.constant 0 : index
      %c0_85 = arith.constant 0 : index
      %128 = vector.load %arg19[%c0_84, %c0_85] : memref<160x128xf32, #tpu.memory_space<vmem>>, vector<16x128xf32>
      tpu.vector_store %arg19[%c0_84, %c0_85], %127 {strides = array<i32>} : memref<160x128xf32, #tpu.memory_space<vmem>>, vector<16x128xf32>,
    } else {
    }
    %c1_i32 = arith.constant 1 : i32
    %20 = arith.cmpi eq, %arg1, %c1_i32 : i32
    %21 = arith.extui %20 : i1 to i32
    %c0_i32_14 = arith.constant 0 : i32
    %22 = arith.cmpi ne, %21, %c0_i32_14 : i32
    scf.if %22 {
      %cst_78 = arith.constant 0.000000e+00 : f32
      %119 = vector.broadcast %cst_78 : f32 to vector<16x128xf32>
      %c144 = arith.constant 144 : index
      %c0_79 = arith.constant 0 : index
      %120 = vector.load %arg19[%c144, %c0_79] : memref<160x128xf32, #tpu.memory_space<vmem>>, vector<16x128xf32>
      tpu.vector_store %arg19[%c144, %c0_79], %119 {strides = array<i32>} : memref<160x128xf32, #tpu.memory_space<vmem>>, vector<16x128xf32>,
    } else {
    }
    %c1_i32_15 = arith.constant 1 : i32
    %23 = arith.cmpi slt, %arg1, %c1_i32_15 : i32
    %24 = arith.extui %23 : i1 to i32
    %c0_i32_16 = arith.constant 0 : i32
    %25 = arith.cmpi ne, %24, %c0_i32_16 : i32
    scf.if %25 {
      %c0_78 = arith.constant 0 : index
      %c0_79 = arith.constant 0 : index
      %c0_80 = arith.constant 0 : index
      %c0_81 = arith.constant 0 : index
      %119 = vector.load %arg4[%c0_78, %c0_79, %c0_80, %c0_81] : memref<1x1x16x128xf32, #tpu.memory_space<vmem>>, vector<1x1x16x128xf32>
      %120 = vector.shape_cast %119 : vector<1x1x16x128xf32> to vector<16x128xf32>
      %cst_82 = arith.constant dense<0.000000e+00> : vector<16x128xf32>
      %121 = tpu.matmul %120, %0, %cst_82 {dimension_numbers = #tpu.dot_dimension_numbers<[1], [0], [0], [1], [0, 0, 1, 1], [], []>} : vector<16x128xf32>, vector<128x128xf32>, vector<16x128xf32> -> vector<16x128xf32>
      %122 = vector.broadcast %1 : vector<1x128xf32> to vector<16x128xf32>
      %123 = arith.mulf %121, %122 : vector<16x128xf32>
      %124 = vector.broadcast %2 : vector<1x128xf32> to vector<16x128xf32>
      %125 = arith.addf %123, %124 : vector<16x128xf32>
      %cst_83 = arith.constant 0.000000e+00 : f32
      %126 = vector.broadcast %cst_83 : f32 to vector<16x128xf32>
      %127 = arith.maximumf %125, %126 : vector<16x128xf32>
      %c144 = arith.constant 144 : index
      %c0_84 = arith.constant 0 : index
      %128 = vector.load %arg19[%c144, %c0_84] : memref<160x128xf32, #tpu.memory_space<vmem>>, vector<16x128xf32>
      tpu.vector_store %arg19[%c144, %c0_84], %127 {strides = array<i32>} : memref<160x128xf32, #tpu.memory_space<vmem>>, vector<16x128xf32>,
    } else {
    }
    %c0_17 = arith.constant 0 : index
    %c0_18 = arith.constant 0 : index
    %26 = vector.load %arg5[%c0_17, %c0_18] : memref<160x1xi32, #tpu.memory_space<vmem>>, vector<160x1xi32>
    %c0_19 = arith.constant 0 : index
    %c0_20 = arith.constant 0 : index
    %27 = vector.load %arg19[%c0_19, %c0_20] : memref<160x128xf32, #tpu.memory_space<vmem>>, vector<160x128xf32>
    %cst_21 = arith.constant 0.000000e+00 : f32
    %28 = vector.broadcast %cst_21 : f32 to vector<128x128xf32>
    %c1_i32_22 = arith.constant 1 : i32
    %29 = tpu.dynamic_rotate %27 by %c1_i32_22 dim 0 : vector<160x128xf32>, i32 -> vector<160x128xf32>
    %c0_i32_23 = arith.constant 0 : i32
    %30 = vector.broadcast %c0_i32_23 : i32 to vector<160x1xi32>
    %31 = arith.cmpi eq, %26, %30 : vector<160x1xi32>
    %cst_24 = arith.constant 0.000000e+00 : f32
    %32 = vector.shape_cast %31 : vector<160x1xi1> to vector<160x1xi1>
    %33 = vector.broadcast %32 : vector<160x1xi1> to vector<160x128xi1>
    %34 = vector.broadcast %cst_24 : f32 to vector<160x128xf32>
    %35 = arith.select %33, %34, %29 : vector<160x128xi1>, vector<160x128xf32>
    %36 = vector.extract_strided_slice %35 {offsets = [0, 0], sizes = [128, 128], strides = [1, 1]} : vector<160x128xf32> to vector<128x128xf32>
    %c0_25 = arith.constant 0 : index
    %c0_26 = arith.constant 0 : index
    %c0_27 = arith.constant 0 : index
    %37 = vector.load %arg9[%c0_25, %c0_26, %c0_27] : memref<9x128x128xf32, #tpu.memory_space<vmem>>, vector<1x128x128xf32>
    %38 = vector.shape_cast %37 : vector<1x128x128xf32> to vector<128x128xf32>
    %cst_28 = arith.constant dense<0.000000e+00> : vector<128x128xf32>
    %39 = tpu.matmul %36, %38, %cst_28 {dimension_numbers = #tpu.dot_dimension_numbers<[1], [0], [0], [1], [0, 0, 1, 1], [], []>} : vector<128x128xf32>, vector<128x128xf32>, vector<128x128xf32> -> vector<128x128xf32>
    %40 = arith.addf %28, %39 : vector<128x128xf32>
    %41 = vector.extract_strided_slice %35 {offsets = [16, 0], sizes = [128, 128], strides = [1, 1]} : vector<160x128xf32> to vector<128x128xf32>
    %c3 = arith.constant 3 : index
    %c0_29 = arith.constant 0 : index
    %c0_30 = arith.constant 0 : index
    %42 = vector.load %arg9[%c3, %c0_29, %c0_30] : memref<9x128x128xf32, #tpu.memory_space<vmem>>, vector<1x128x128xf32>
    %43 = vector.shape_cast %42 : vector<1x128x128xf32> to vector<128x128xf32>
    %cst_31 = arith.constant dense<0.000000e+00> : vector<128x128xf32>
    %44 = tpu.matmul %41, %43, %cst_31 {dimension_numbers = #tpu.dot_dimension_numbers<[1], [0], [0], [1], [0, 0, 1, 1], [], []>} : vector<128x128xf32>, vector<128x128xf32>, vector<128x128xf32> -> vector<128x128xf32>
    %45 = arith.addf %40, %44 : vector<128x128xf32>
    %46 = vector.extract_strided_slice %35 {offsets = [32, 0], sizes = [128, 128], strides = [1, 1]} : vector<160x128xf32> to vector<128x128xf32>
    %c6 = arith.constant 6 : index
    %c0_32 = arith.constant 0 : index
    %c0_33 = arith.constant 0 : index
    %47 = vector.load %arg9[%c6, %c0_32, %c0_33] : memref<9x128x128xf32, #tpu.memory_space<vmem>>, vector<1x128x128xf32>
    %48 = vector.shape_cast %47 : vector<1x128x128xf32> to vector<128x128xf32>
    %cst_34 = arith.constant dense<0.000000e+00> : vector<128x128xf32>
    %49 = tpu.matmul %46, %48, %cst_34 {dimension_numbers = #tpu.dot_dimension_numbers<[1], [0], [0], [1], [0, 0, 1, 1], [], []>} : vector<128x128xf32>, vector<128x128xf32>, vector<128x128xf32> -> vector<128x128xf32>
    %50 = arith.addf %45, %49 : vector<128x128xf32>
    %51 = vector.extract_strided_slice %27 {offsets = [0, 0], sizes = [128, 128], strides = [1, 1]} : vector<160x128xf32> to vector<128x128xf32>
    %c1 = arith.constant 1 : index
    %c0_35 = arith.constant 0 : index
    %c0_36 = arith.constant 0 : index
    %52 = vector.load %arg9[%c1, %c0_35, %c0_36] : memref<9x128x128xf32, #tpu.memory_space<vmem>>, vector<1x128x128xf32>
    %53 = vector.shape_cast %52 : vector<1x128x128xf32> to vector<128x128xf32>
    %cst_37 = arith.constant dense<0.000000e+00> : vector<128x128xf32>
    %54 = tpu.matmul %51, %53, %cst_37 {dimension_numbers = #tpu.dot_dimension_numbers<[1], [0], [0], [1], [0, 0, 1, 1], [], []>} : vector<128x128xf32>, vector<128x128xf32>, vector<128x128xf32> -> vector<128x128xf32>
    %55 = arith.addf %50, %54 : vector<128x128xf32>
    %56 = vector.extract_strided_slice %27 {offsets = [16, 0], sizes = [128, 128], strides = [1, 1]} : vector<160x128xf32> to vector<128x128xf32>
    %c4 = arith.constant 4 : index
    %c0_38 = arith.constant 0 : index
    %c0_39 = arith.constant 0 : index
    %57 = vector.load %arg9[%c4, %c0_38, %c0_39] : memref<9x128x128xf32, #tpu.memory_space<vmem>>, vector<1x128x128xf32>
    %58 = vector.shape_cast %57 : vector<1x128x128xf32> to vector<128x128xf32>
    %cst_40 = arith.constant dense<0.000000e+00> : vector<128x128xf32>
    %59 = tpu.matmul %56, %58, %cst_40 {dimension_numbers = #tpu.dot_dimension_numbers<[1], [0], [0], [1], [0, 0, 1, 1], [], []>} : vector<128x128xf32>, vector<128x128xf32>, vector<128x128xf32> -> vector<128x128xf32>
    %60 = arith.addf %55, %59 : vector<128x128xf32>
    %61 = vector.extract_strided_slice %27 {offsets = [32, 0], sizes = [128, 128], strides = [1, 1]} : vector<160x128xf32> to vector<128x128xf32>
    %c7 = arith.constant 7 : index
    %c0_41 = arith.constant 0 : index
    %c0_42 = arith.constant 0 : index
    %62 = vector.load %arg9[%c7, %c0_41, %c0_42] : memref<9x128x128xf32, #tpu.memory_space<vmem>>, vector<1x128x128xf32>
    %63 = vector.shape_cast %62 : vector<1x128x128xf32> to vector<128x128xf32>
    %cst_43 = arith.constant dense<0.000000e+00> : vector<128x128xf32>
    %64 = tpu.matmul %61, %63, %cst_43 {dimension_numbers = #tpu.dot_dimension_numbers<[1], [0], [0], [1], [0, 0, 1, 1], [], []>} : vector<128x128xf32>, vector<128x128xf32>, vector<128x128xf32> -> vector<128x128xf32>
    %65 = arith.addf %60, %64 : vector<128x128xf32>
    %c159_i32 = arith.constant 159 : i32
    %66 = tpu.dynamic_rotate %27 by %c159_i32 dim 0 : vector<160x128xf32>, i32 -> vector<160x128xf32>
    %c15_i32 = arith.constant 15 : i32
    %67 = vector.broadcast %c15_i32 : i32 to vector<160x1xi32>
    %68 = arith.cmpi eq, %26, %67 : vector<160x1xi32>
    %cst_44 = arith.constant 0.000000e+00 : f32
    %69 = vector.shape_cast %68 : vector<160x1xi1> to vector<160x1xi1>
    %70 = vector.broadcast %69 : vector<160x1xi1> to vector<160x128xi1>
    %71 = vector.broadcast %cst_44 : f32 to vector<160x128xf32>
    %72 = arith.select %70, %71, %66 : vector<160x128xi1>, vector<160x128xf32>
    %73 = vector.extract_strided_slice %72 {offsets = [0, 0], sizes = [128, 128], strides = [1, 1]} : vector<160x128xf32> to vector<128x128xf32>
    %c2 = arith.constant 2 : index
    %c0_45 = arith.constant 0 : index
    %c0_46 = arith.constant 0 : index
    %74 = vector.load %arg9[%c2, %c0_45, %c0_46] : memref<9x128x128xf32, #tpu.memory_space<vmem>>, vector<1x128x128xf32>
    %75 = vector.shape_cast %74 : vector<1x128x128xf32> to vector<128x128xf32>
    %cst_47 = arith.constant dense<0.000000e+00> : vector<128x128xf32>
    %76 = tpu.matmul %73, %75, %cst_47 {dimension_numbers = #tpu.dot_dimension_numbers<[1], [0], [0], [1], [0, 0, 1, 1], [], []>} : vector<128x128xf32>, vector<128x128xf32>, vector<128x128xf32> -> vector<128x128xf32>
    %77 = arith.addf %65, %76 : vector<128x128xf32>
    %78 = vector.extract_strided_slice %72 {offsets = [16, 0], sizes = [128, 128], strides = [1, 1]} : vector<160x128xf32> to vector<128x128xf32>
    %c5 = arith.constant 5 : index
    %c0_48 = arith.constant 0 : index
    %c0_49 = arith.constant 0 : index
    %79 = vector.load %arg9[%c5, %c0_48, %c0_49] : memref<9x128x128xf32, #tpu.memory_space<vmem>>, vector<1x128x128xf32>
    %80 = vector.shape_cast %79 : vector<1x128x128xf32> to vector<128x128xf32>
    %cst_50 = arith.constant dense<0.000000e+00> : vector<128x128xf32>
    %81 = tpu.matmul %78, %80, %cst_50 {dimension_numbers = #tpu.dot_dimension_numbers<[1], [0], [0], [1], [0, 0, 1, 1], [], []>} : vector<128x128xf32>, vector<128x128xf32>, vector<128x128xf32> -> vector<128x128xf32>
    %82 = arith.addf %77, %81 : vector<128x128xf32>
    %83 = vector.extract_strided_slice %72 {offsets = [32, 0], sizes = [128, 128], strides = [1, 1]} : vector<160x128xf32> to vector<128x128xf32>
    %c8 = arith.constant 8 : index
    %c0_51 = arith.constant 0 : index
    %c0_52 = arith.constant 0 : index
    %84 = vector.load %arg9[%c8, %c0_51, %c0_52] : memref<9x128x128xf32, #tpu.memory_space<vmem>>, vector<1x128x128xf32>
    %85 = vector.shape_cast %84 : vector<1x128x128xf32> to vector<128x128xf32>
    %cst_53 = arith.constant dense<0.000000e+00> : vector<128x128xf32>
    %86 = tpu.matmul %83, %85, %cst_53 {dimension_numbers = #tpu.dot_dimension_numbers<[1], [0], [0], [1], [0, 0, 1, 1], [], []>} : vector<128x128xf32>, vector<128x128xf32>, vector<128x128xf32> -> vector<128x128xf32>
    %87 = arith.addf %82, %86 : vector<128x128xf32>
    %c0_54 = arith.constant 0 : index
    %c0_55 = arith.constant 0 : index
    %88 = vector.load %arg10[%c0_54, %c0_55] : memref<1x128xf32, #tpu.memory_space<vmem>>, vector<1x128xf32>
    %89 = vector.broadcast %88 : vector<1x128xf32> to vector<128x128xf32>
    %90 = arith.mulf %87, %89 : vector<128x128xf32>
    %c0_56 = arith.constant 0 : index
    %c0_57 = arith.constant 0 : index
    %91 = vector.load %arg11[%c0_56, %c0_57] : memref<1x128xf32, #tpu.memory_space<vmem>>, vector<1x128xf32>
    %92 = vector.broadcast %91 : vector<1x128xf32> to vector<128x128xf32>
    %93 = arith.addf %90, %92 : vector<128x128xf32>
    %cst_58 = arith.constant 0.000000e+00 : f32
    %94 = vector.broadcast %cst_58 : f32 to vector<128x128xf32>
    %95 = arith.maximumf %93, %94 : vector<128x128xf32>
    %c0_59 = arith.constant 0 : index
    %c0_60 = arith.constant 0 : index
    %96 = vector.load %arg12[%c0_59, %c0_60] : memref<128x128xf32, #tpu.memory_space<vmem>>, vector<128x128xf32>
    %cst_61 = arith.constant dense<0.000000e+00> : vector<128x128xf32>
    %97 = tpu.matmul %95, %96, %cst_61 {dimension_numbers = #tpu.dot_dimension_numbers<[1], [0], [0], [1], [0, 0, 1, 1], [], []>} : vector<128x128xf32>, vector<128x128xf32>, vector<128x128xf32> -> vector<128x128xf32>
    %c0_62 = arith.constant 0 : index
    %c0_63 = arith.constant 0 : index
    %98 = vector.load %arg13[%c0_62, %c0_63] : memref<1x128xf32, #tpu.memory_space<vmem>>, vector<1x128xf32>
    %99 = vector.broadcast %98 : vector<1x128xf32> to vector<128x128xf32>
    %100 = arith.mulf %97, %99 : vector<128x128xf32>
    %c0_64 = arith.constant 0 : index
    %c0_65 = arith.constant 0 : index
    %101 = vector.load %arg14[%c0_64, %c0_65] : memref<1x128xf32, #tpu.memory_space<vmem>>, vector<1x128xf32>
    %102 = vector.broadcast %101 : vector<1x128xf32> to vector<128x128xf32>
    %103 = arith.addf %100, %102 : vector<128x128xf32>
    %c0_66 = arith.constant 0 : index
    %c0_67 = arith.constant 0 : index
    %104 = vector.load %arg15[%c0_66, %c0_67] : memref<128x128xf32, #tpu.memory_space<vmem>>, vector<128x128xf32>
    %cst_68 = arith.constant dense<0.000000e+00> : vector<128x128xf32>
    %105 = tpu.matmul %5, %104, %cst_68 {dimension_numbers = #tpu.dot_dimension_numbers<[1], [0], [0], [1], [0, 0, 1, 1], [], []>} : vector<128x128xf32>, vector<128x128xf32>, vector<128x128xf32> -> vector<128x128xf32>
    %c0_69 = arith.constant 0 : index
    %c0_70 = arith.constant 0 : index
    %106 = vector.load %arg16[%c0_69, %c0_70] : memref<1x128xf32, #tpu.memory_space<vmem>>, vector<1x128xf32>
    %107 = vector.broadcast %106 : vector<1x128xf32> to vector<128x128xf32>
    %108 = arith.mulf %105, %107 : vector<128x128xf32>
    %c0_71 = arith.constant 0 : index
    %c0_72 = arith.constant 0 : index
    %109 = vector.load %arg17[%c0_71, %c0_72] : memref<1x128xf32, #tpu.memory_space<vmem>>, vector<1x128xf32>
    %110 = vector.broadcast %109 : vector<1x128xf32> to vector<128x128xf32>
    %111 = arith.addf %108, %110 : vector<128x128xf32>
    %112 = arith.addf %103, %111 : vector<128x128xf32>
    %cst_73 = arith.constant 0.000000e+00 : f32
    %113 = vector.broadcast %cst_73 : f32 to vector<128x128xf32>
    %114 = arith.maximumf %112, %113 : vector<128x128xf32>
    %115 = vector.shape_cast %114 : vector<128x128xf32> to vector<8x16x128xf32>
    %c0_74 = arith.constant 0 : index
    %c0_75 = arith.constant 0 : index
    %c0_76 = arith.constant 0 : index
    %c0_77 = arith.constant 0 : index
    %116 = vector.load %arg18[%c0_74, %c0_75, %c0_76, %c0_77] : memref<1x8x16x128xf32, #tpu.memory_space<vmem>>, vector<1x8x16x128xf32>
    %117 = vector.shape_cast %116 : vector<1x8x16x128xf32> to vector<8x16x128xf32>
    %118 = vector.shape_cast %115 : vector<8x16x128xf32> to vector<1x8x16x128xf32>
    tpu.vector_store %arg18[%c0_74, %c0_75, %c0_76, %c0_77], %118 {strides = array<i32>} : memref<1x8x16x128xf32, #tpu.memory_space<vmem>>, vector<1x8x16x128xf32>,
    return
  }
  func.func @transform_0(%arg0: i32, %arg1: i32) -> (i32, i32, i32, i32) {
    %c0_i32 = arith.constant 0 : i32
    %c0_i32_0 = arith.constant 0 : i32
    %c0_i32_1 = arith.constant 0 : i32
    return %arg0, %arg1, %c0_i32, %c0_i32_0 : i32, i32, i32, i32
  }
  func.func @transform_1(%arg0: i32, %arg1: i32) -> (i32, i32, i32, i32) {
    %c8_i32 = arith.constant 8 : i32
    %0 = arith.muli %arg1, %c8_i32 : i32
    %c1_i32 = arith.constant 1 : i32
    %1 = arith.subi %0, %c1_i32 : i32
    %c0_i32 = arith.constant 0 : i32
    %2 = arith.maxsi %1, %c0_i32 : i32
    %c0_i32_0 = arith.constant 0 : i32
    %c0_i32_1 = arith.constant 0 : i32
    %c0_i32_2 = arith.constant 0 : i32
    return %arg0, %2, %c0_i32_0, %c0_i32_1 : i32, i32, i32, i32
  }
  func.func @transform_2(%arg0: i32, %arg1: i32) -> (i32, i32, i32, i32) {
    %c1_i32 = arith.constant 1 : i32
    %0 = arith.addi %arg1, %c1_i32 : i32
    %c8_i32 = arith.constant 8 : i32
    %1 = arith.muli %0, %c8_i32 : i32
    %c15_i32 = arith.constant 15 : i32
    %2 = arith.minsi %1, %c15_i32 : i32
    %c0_i32 = arith.constant 0 : i32
    %c0_i32_0 = arith.constant 0 : i32
    %c0_i32_1 = arith.constant 0 : i32
    return %arg0, %2, %c0_i32, %c0_i32_0 : i32, i32, i32, i32
  }
  func.func @transform_3(%arg0: i32, %arg1: i32) -> (i32, i32) {
    %c0_i32 = arith.constant 0 : i32
    %c0_i32_0 = arith.constant 0 : i32
    %c0_i32_1 = arith.constant 0 : i32
    return %c0_i32, %c0_i32_0 : i32, i32
  }
  func.func @transform_4(%arg0: i32, %arg1: i32) -> (i32, i32) {
    %c0_i32 = arith.constant 0 : i32
    %c0_i32_0 = arith.constant 0 : i32
    %c0_i32_1 = arith.constant 0 : i32
    return %c0_i32, %c0_i32_0 : i32, i32
  }
  func.func @transform_5(%arg0: i32, %arg1: i32) -> (i32, i32) {
    %c0_i32 = arith.constant 0 : i32
    %c0_i32_0 = arith.constant 0 : i32
    %c0_i32_1 = arith.constant 0 : i32
    return %c0_i32, %c0_i32_0 : i32, i32
  }
  func.func @transform_6(%arg0: i32, %arg1: i32) -> (i32, i32) {
    %c0_i32 = arith.constant 0 : i32
    %c0_i32_0 = arith.constant 0 : i32
    %c0_i32_1 = arith.constant 0 : i32
    return %c0_i32, %c0_i32_0 : i32, i32
  }
  func.func @transform_7(%arg0: i32, %arg1: i32) -> (i32, i32, i32) {
    %c0_i32 = arith.constant 0 : i32
    %c0_i32_0 = arith.constant 0 : i32
    %c0_i32_1 = arith.constant 0 : i32
    %c0_i32_2 = arith.constant 0 : i32
    return %c0_i32, %c0_i32_0, %c0_i32_1 : i32, i32, i32
  }
  func.func @transform_8(%arg0: i32, %arg1: i32) -> (i32, i32) {
    %c0_i32 = arith.constant 0 : i32
    %c0_i32_0 = arith.constant 0 : i32
    %c0_i32_1 = arith.constant 0 : i32
    return %c0_i32, %c0_i32_0 : i32, i32
  }
  func.func @transform_9(%arg0: i32, %arg1: i32) -> (i32, i32) {
    %c0_i32 = arith.constant 0 : i32
    %c0_i32_0 = arith.constant 0 : i32
    %c0_i32_1 = arith.constant 0 : i32
    return %c0_i32, %c0_i32_0 : i32, i32
  }
  func.func @transform_10(%arg0: i32, %arg1: i32) -> (i32, i32) {
    %c0_i32 = arith.constant 0 : i32
    %c0_i32_0 = arith.constant 0 : i32
    %c0_i32_1 = arith.constant 0 : i32
    return %c0_i32, %c0_i32_0 : i32, i32
  }
  func.func @transform_11(%arg0: i32, %arg1: i32) -> (i32, i32) {
    %c0_i32 = arith.constant 0 : i32
    %c0_i32_0 = arith.constant 0 : i32
    %c0_i32_1 = arith.constant 0 : i32
    return %c0_i32, %c0_i32_0 : i32, i32
  }
  func.func @transform_12(%arg0: i32, %arg1: i32) -> (i32, i32) {
    %c0_i32 = arith.constant 0 : i32
    %c0_i32_0 = arith.constant 0 : i32
    %c0_i32_1 = arith.constant 0 : i32
    return %c0_i32, %c0_i32_0 : i32, i32
  }
  func.func @transform_13(%arg0: i32, %arg1: i32) -> (i32, i32) {
    %c0_i32 = arith.constant 0 : i32
    %c0_i32_0 = arith.constant 0 : i32
    %c0_i32_1 = arith.constant 0 : i32
    return %c0_i32, %c0_i32_0 : i32, i32
  }
  func.func @transform_14(%arg0: i32, %arg1: i32) -> (i32, i32) {
    %c0_i32 = arith.constant 0 : i32
    %c0_i32_0 = arith.constant 0 : i32
    %c0_i32_1 = arith.constant 0 : i32
    return %c0_i32, %c0_i32_0 : i32, i32
  }
  func.func @transform_15(%arg0: i32, %arg1: i32) -> (i32, i32) {
    %c0_i32 = arith.constant 0 : i32
    %c0_i32_0 = arith.constant 0 : i32
    %c0_i32_1 = arith.constant 0 : i32
    return %c0_i32, %c0_i32_0 : i32, i32
  }
  func.func @transform_16(%arg0: i32, %arg1: i32) -> (i32, i32, i32, i32) {
    %c0_i32 = arith.constant 0 : i32
    %c0_i32_0 = arith.constant 0 : i32
    %c0_i32_1 = arith.constant 0 : i32
    return %arg0, %arg1, %c0_i32, %c0_i32_0 : i32, i32, i32, i32
  }
}

</mosaic_0001>

<llo_original>
// kernel: tpu_custom_call.1
$region0: #{tpu_custom_call.1}
  #allocation0 [shape = 'u32[]', space=smem, size = 0x4, offset = 0x4, fixed_abs, tag = 'smem constant byte address 0x4 - core index']
  #allocation1 [shape = 'u32[72,128]{1,0:T(1,128)}', space=vmem, size = 0x9000, scoped, tag = 'internal scratch']
  #allocation2 [shape = 'f32[160,128]{1,0:T(8,128)}', space=vmem, size = 0x14000, scoped, tag = 'scratch operand']
  %s0 = inlined_call_operand.hbm [shape: f32[2,16,16,128], index: 0, kind: input, shape index: {}]
  %s1 = inlined_call_operand.hbm [shape: f32[2,16,16,128], index: 1, kind: input, shape index: {}]
  %s2 = inlined_call_operand.hbm [shape: f32[2,16,16,128], index: 2, kind: input, shape index: {}]
  %s3 = inlined_call_operand.vmem [shape: s32[160,1], index: 3, kind: input, shape index: {}]
  %s4 = inlined_call_operand.vmem [shape: f32[128,128], index: 4, kind: input, shape index: {}]
  %s5 = inlined_call_operand.vmem [shape: f32[1,128], index: 5, kind: input, shape index: {}]
  %s6 = inlined_call_operand.vmem [shape: f32[1,128], index: 6, kind: input, shape index: {}]
  %s7 = inlined_call_operand.hbm [shape: f32[9,128,128], index: 7, kind: input, shape index: {}]
  %s8 = inlined_call_operand.vmem [shape: f32[1,128], index: 8, kind: input, shape index: {}]
  %s9 = inlined_call_operand.vmem [shape: f32[1,128], index: 9, kind: input, shape index: {}]
  %s10 = inlined_call_operand.hbm [shape: f32[128,128], index: 10, kind: input, shape index: {}]
  %s11 = inlined_call_operand.vmem [shape: f32[1,128], index: 11, kind: input, shape index: {}]
  %s12 = inlined_call_operand.vmem [shape: f32[1,128], index: 12, kind: input, shape index: {}]
  %s13 = inlined_call_operand.hbm [shape: f32[128,128], index: 13, kind: input, shape index: {}]
  %s14 = inlined_call_operand.vmem [shape: f32[1,128], index: 14, kind: input, shape index: {}]
  %s15 = inlined_call_operand.vmem [shape: f32[1,128], index: 15, kind: input, shape index: {}]
  %s16 = inlined_call_operand.hbm [shape: f32[2,16,16,128], index: 16, kind: output, shape index: {}]
  %s17 = sld [smem:[#allocation0]]
  $region137: #{tpu_custom_call.1} parent=0
    _
  %s19 = ssub.s32 1, %s17
  %s20 = scalar_select 0, %s19, %s17
  $region1: #{tpu_custom_call.1} parent=0
    #allocation3 [shape = 'u8[131072]{0}', space=vmem, size = 0x20000, scoped, tag = 'input window, operand 0']
    #allocation4 [shape = 's32[2]{0}', space=sflag, size = 0x8, scoped, tag = 'scoped memory for tpu_custom_call.1']
    #allocation5 [shape = 's32[2]{0}', space=sflag, size = 0x8, scoped, tag = 'scoped memory for tpu_custom_call.1']
    #allocation6 [shape = 'u8[16384]{0}', space=vmem, size = 0x4000, scoped, tag = 'input window, operand 1']
    #allocation7 [shape = 's32[2]{0}', space=sflag, size = 0x8, scoped, tag = 'scoped memory for tpu_custom_call.1']
    #allocation8 [shape = 'u8[16384]{0}', space=vmem, size = 0x4000, scoped, tag = 'input window, operand 2']
    #allocation9 [shape = 'u8[589824]{0}', space=vmem, size = 0x90000, scoped, tag = 'input window, operand 7, single buffered']
    #allocation10 [shape = 's32[1]{0}', space=sflag, size = 0x4, scoped, tag = 'scoped memory for tpu_custom_call.1']
    #allocation11 [shape = 'u8[65536]{0}', space=vmem, size = 0x10000, scoped, tag = 'input window, operand 10, single buffered']
    #allocation12 [shape = 'u8[65536]{0}', space=vmem, size = 0x10000, scoped, tag = 'input window, operand 13, single buffered']
    #allocation13 [shape = 's32[1]{0}', space=sflag, size = 0x4, scoped, tag = 'scoped memory for tpu_custom_call.1']
    #allocation14 [shape = 'u8[131072]{0}', space=vmem, size = 0x20000, scoped, tag = 'output window, operand 0']
    %21 = vsyncpa [#allocation4], 0
    %s22 = scalar_lea.sflag [#allocation4], 1
    %23 = vsyncpa %s22, 0
    %24 = vsyncpa [#allocation7], 0
    %s25 = scalar_lea.sflag [#allocation7], 1
    %26 = vsyncpa %s25, 0
    %27 = vsyncpa [#allocation10], 0
    %28 = vsyncpa [#allocation13], 0
    %29 = vsyncpa [#allocation5], 0
    %s30 = scalar_lea.sflag [#allocation5], 1
    %31 = vsyncpa %s30, 0
    loop: start=0, step=1, limit=6
    $region2: #{tpu_custom_call.1} parent=1 // loop_pre_header
      _
    $region3: #{tpu_custom_call.1} parent=1 // loop_header
      %s33 = sphi 0, %s37
      %p34 = scmp.ge.s32.totalorder %s33, 6
      %s40 = sphi 0, %s52
      %s41 = sphi 0, %s48
      %s42 = sphi 0, %s40
      %s43 = sphi 0, %s41
      %s44 = sphi 0, %s42
      %s45 = sphi 0, %s43
      %s57 = sphi 0, %s59
      %s60 = sphi 0, %s57
      %s61 = sphi 0, %s60
      %s77 = sphi 0, %s61
      %s93 = sphi 0, %s95
      %s96 = sphi 0, %s93
      %s97 = sphi 0, %s96
      %s113 = sphi 0, %s97
      %s129 = sphi 0, %s131
      %s132 = sphi 0, %s129
      %s133 = sphi 0, %s132
      %s149 = sphi 0, %s133
      %s153 = sphi 0, %s153
      %s155 = sphi 0, %s153
      %s156 = sphi 0, %s155
      %s170 = sphi 0, %s156
      %s174 = sphi 0, %s174
      %s176 = sphi 0, %s174
      %s177 = sphi 0, %s176
      %s191 = sphi 0, %s177
      %s195 = sphi 0, %s195
      %s197 = sphi 0, %s195
      %s198 = sphi 0, %s197
      %s212 = sphi 0, %s198
      %s216 = sphi 0, %s216
      %s218 = sphi 0, %s216
      %s219 = sphi 0, %s218
      %s233 = sphi 0, %s219
      %s237 = sphi 0, %s237
      %s239 = sphi 0, %s237
      %s240 = sphi 0, %s239
      %s254 = sphi 0, %s240
      %s258 = sphi 0, %s258
      %s260 = sphi 0, %s258
      %s261 = sphi 0, %s260
      %s275 = sphi 0, %s261
      %s279 = sphi 0, %s279
      %s281 = sphi 0, %s279
      %s282 = sphi 0, %s281
      %s296 = sphi 0, %s282
      %s300 = sphi 0, %s300
      %s302 = sphi 0, %s300
      %s303 = sphi 0, %s302
      %s317 = sphi 0, %s303
      %s321 = sphi 0, %s321
      %s323 = sphi 0, %s321
      %s324 = sphi 0, %s323
      %s338 = sphi 0, %s324
      %s342 = sphi 0, %s342
      %s344 = sphi 0, %s342
      %s345 = sphi 0, %s344
      %s359 = sphi 0, %s345
      %s363 = sphi 0, %s363
      %s365 = sphi 0, %s363
      %s366 = sphi 0, %s365
      %s380 = sphi 0, %s366
      %s384 = sphi 0, %s384
      %s386 = sphi 0, %s384
      %s387 = sphi 0, %s386
      %s401 = sphi 0, %s387
      %s405 = sphi 0, %s405
      %s407 = sphi 0, %s405
      %s408 = sphi 0, %s407
      %s422 = sphi 0, %s408
      %s430 = sphi 0, %s432
      %s433 = sphi 0, %s430
      %s434 = sphi 0, %s433
      %s450 = sphi 0, %s434
    $region4: #{tpu_custom_call.1} parent=1 // loop_header_branch
      %36 = sbr.rel (%p34) target = $region8
    $region5: #{tpu_custom_call.1} parent=1 // loop_body
      %s38 = ssub.s32 %s33, 1
      %s39 = ssub.s32 %s33, 2
      %s46 = sadd.s32 1, %s41
      %p47 = scmp.ge.s32.totalorder %s46, 2
      %s48 = scalar_select %p47, 0, %s46
      %s49 = sadd.s32 1, %s40
      %s50 = scalar_select %p47, %s49, %s40
      %p51 = scmp.ge.s32.totalorder %s50, 2
      %s52 = scalar_select %p51, 0, %s50
      %s53 = ssub.s32 %s40, %s52
      %s54 = ssub.s32 %s41, %s48
      %s55 = sor.u32 %s53, %s54
      %p56 = scmp.eq.s32.totalorder %s55, 0
      %s58 = sadd.s32 %s57, 1
      %s59 = scalar_select %p56, %s57, %s58
      %p62 = pneg %p56
      %p63 = scmp.eq.s32.totalorder %s33, 3
      %p64 = por %p62, %p63
      %p65 = scmp.ne.s32.totalorder %s57, %s60
      %p66 = scmp.eq.s32.totalorder %s33, 0
      %p67 = por %p65, %p66
      %p68 = scmp.ne.s32.totalorder %s57, %s60
      %p69 = scmp.eq.s32.totalorder %s38, 3
      %p70 = por %p68, %p69
      %p71 = scmp.ne.s32.totalorder %s60, %s61
      %p72 = scmp.eq.s32.totalorder %s38, 0
      %p73 = por %p71, %p72
      %p74 = scmp.ne.s32.totalorder %s60, %s61
      %p75 = scmp.eq.s32.totalorder %s39, 3
      %p76 = por %p74, %p75
      %p78 = scmp.ne.s32.totalorder %s61, %s77
      %p79 = scmp.eq.s32.totalorder %s39, 0
      %p80 = por %p78, %p79
      %s81 = smul.u32 %s41, 8
      %s82 = ssub.s32 %s81, 1
      %p83 = scmp.gt.s32.totalorder %s82, 0
      %s84 = scalar_select %p83, %s82, 0
      %s85 = smul.u32 %s48, 8
      %s86 = ssub.s32 %s85, 1
      %p87 = scmp.gt.s32.totalorder %s86, 0
      %s88 = scalar_select %p87, %s86, 0
      %s89 = ssub.s32 %s40, %s52
      %s90 = ssub.s32 %s84, %s88
      %s91 = sor.u32 %s89, %s90
      %p92 = scmp.eq.s32.totalorder %s91, 0
      %s94 = sadd.s32 %s93, 1
      %s95 = scalar_select %p92, %s93, %s94
      %p98 = pneg %p92
      %p99 = scmp.eq.s32.totalorder %s33, 3
      %p100 = por %p98, %p99
      %p101 = scmp.ne.s32.totalorder %s93, %s96
      %p102 = scmp.eq.s32.totalorder %s33, 0
      %p103 = por %p101, %p102
      %p104 = scmp.ne.s32.totalorder %s93, %s96
      %p105 = scmp.eq.s32.totalorder %s38, 3
      %p106 = por %p104, %p105
      %p107 = scmp.ne.s32.totalorder %s96, %s97
      %p108 = scmp.eq.s32.totalorder %s38, 0
      %p109 = por %p107, %p108
      %p110 = scmp.ne.s32.totalorder %s96, %s97
      %p111 = scmp.eq.s32.totalorder %s39, 3
      %p112 = por %p110, %p111
      %p114 = scmp.ne.s32.totalorder %s97, %s113
      %p115 = scmp.eq.s32.totalorder %s39, 0
      %p116 = por %p114, %p115
      %s117 = sadd.s32 %s41, 1
      %s118 = smul.u32 %s117, 8
      %p119 = scmp.lt.s32.totalorder %s118, 15
      %s120 = scalar_select %p119, %s118, 15
      %s121 = sadd.s32 %s48, 1
      %s122 = smul.u32 %s121, 8
      %p123 = scmp.lt.s32.totalorder %s122, 15
      %s124 = scalar_select %p123, %s122, 15
      %s125 = ssub.s32 %s40, %s52
      %s126 = ssub.s32 %s120, %s124
      %s127 = sor.u32 %s125, %s126
      %p128 = scmp.eq.s32.totalorder %s127, 0
      %s130 = sadd.s32 %s129, 1
      %s131 = scalar_select %p128, %s129, %s130
      %p134 = pneg %p128
      %p135 = scmp.eq.s32.totalorder %s33, 3
      %p136 = por %p134, %p135
      %p137 = scmp.ne.s32.totalorder %s129, %s132
      %p138 = scmp.eq.s32.totalorder %s33, 0
      %p139 = por %p137, %p138
      %p140 = scmp.ne.s32.totalorder %s129, %s132
      %p141 = scmp.eq.s32.totalorder %s38, 3
      %p142 = por %p140, %p141
      %p143 = scmp.ne.s32.totalorder %s132, %s133
      %p144 = scmp.eq.s32.totalorder %s38, 0
      %p145 = por %p143, %p144
      %p146 = scmp.ne.s32.totalorder %s132, %s133
      %p147 = scmp.eq.s32.totalorder %s39, 3
      %p148 = por %p146, %p147
      %p150 = scmp.ne.s32.totalorder %s133, %s149
      %p151 = scmp.eq.s32.totalorder %s39, 0
      %p152 = por %p150, %p151
      %s154 = sadd.s32 %s153, 1
      %p157 = scmp.eq.s32.totalorder %s33, 3
      %p158 = scmp.ne.s32.totalorder %s153, %s155
      %p159 = scmp.eq.s32.totalorder %s33, 0
      %p160 = por %p158, %p159
      %p161 = scmp.ne.s32.totalorder %s153, %s155
      %p162 = scmp.eq.s32.totalorder %s38, 3
      %p163 = por %p161, %p162
      %p164 = scmp.ne.s32.totalorder %s155, %s156
      %p165 = scmp.eq.s32.totalorder %s38, 0
      %p166 = por %p164, %p165
      %p167 = scmp.ne.s32.totalorder %s155, %s156
      %p168 = scmp.eq.s32.totalorder %s39, 3
      %p169 = por %p167, %p168
      %p171 = scmp.ne.s32.totalorder %s156, %s170
      %p172 = scmp.eq.s32.totalorder %s39, 0
      %p173 = por %p171, %p172
      %s175 = sadd.s32 %s174, 1
      %p178 = scmp.eq.s32.totalorder %s33, 3
      %p179 = scmp.ne.s32.totalorder %s174, %s176
      %p180 = scmp.eq.s32.totalorder %s33, 0
      %p181 = por %p179, %p180
      %p182 = scmp.ne.s32.totalorder %s174, %s176
      %p183 = scmp.eq.s32.totalorder %s38, 3
      %p184 = por %p182, %p183
      %p185 = scmp.ne.s32.totalorder %s176, %s177
      %p186 = scmp.eq.s32.totalorder %s38, 0
      %p187 = por %p185, %p186
      %p188 = scmp.ne.s32.totalorder %s176, %s177
      %p189 = scmp.eq.s32.totalorder %s39, 3
      %p190 = por %p188, %p189
      %p192 = scmp.ne.s32.totalorder %s177, %s191
      %p193 = scmp.eq.s32.totalorder %s39, 0
      %p194 = por %p192, %p193
      %s196 = sadd.s32 %s195, 1
      %p199 = scmp.eq.s32.totalorder %s33, 3
      %p200 = scmp.ne.s32.totalorder %s195, %s197
      %p201 = scmp.eq.s32.totalorder %s33, 0
      %p202 = por %p200, %p201
      %p203 = scmp.ne.s32.totalorder %s195, %s197
      %p204 = scmp.eq.s32.totalorder %s38, 3
      %p205 = por %p203, %p204
      %p206 = scmp.ne.s32.totalorder %s197, %s198
      %p207 = scmp.eq.s32.totalorder %s38, 0
      %p208 = por %p206, %p207
      %p209 = scmp.ne.s32.totalorder %s197, %s198
      %p210 = scmp.eq.s32.totalorder %s39, 3
      %p211 = por %p209, %p210
      %p213 = scmp.ne.s32.totalorder %s198, %s212
      %p214 = scmp.eq.s32.totalorder %s39, 0
      %p215 = por %p213, %p214
      %s217 = sadd.s32 %s216, 1
      %p220 = scmp.eq.s32.totalorder %s33, 3
      %p221 = scmp.ne.s32.totalorder %s216, %s218
      %p222 = scmp.eq.s32.totalorder %s33, 0
      %p223 = por %p221, %p222
      %p224 = scmp.ne.s32.totalorder %s216, %s218
      %p225 = scmp.eq.s32.totalorder %s38, 3
      %p226 = por %p224, %p225
      %p227 = scmp.ne.s32.totalorder %s218, %s219
      %p228 = scmp.eq.s32.totalorder %s38, 0
      %p229 = por %p227, %p228
      %p230 = scmp.ne.s32.totalorder %s218, %s219
      %p231 = scmp.eq.s32.totalorder %s39, 3
      %p232 = por %p230, %p231
      %p234 = scmp.ne.s32.totalorder %s219, %s233
      %p235 = scmp.eq.s32.totalorder %s39, 0
      %p236 = por %p234, %p235
      %s238 = sadd.s32 %s237, 1
      %p241 = scmp.eq.s32.totalorder %s33, 3
      %p242 = scmp.ne.s32.totalorder %s237, %s239
      %p243 = scmp.eq.s32.totalorder %s33, 0
      %p244 = por %p242, %p243
      %p245 = scmp.ne.s32.totalorder %s237, %s239
      %p246 = scmp.eq.s32.totalorder %s38, 3
      %p247 = por %p245, %p246
      %p248 = scmp.ne.s32.totalorder %s239, %s240
      %p249 = scmp.eq.s32.totalorder %s38, 0
      %p250 = por %p248, %p249
      %p251 = scmp.ne.s32.totalorder %s239, %s240
      %p252 = scmp.eq.s32.totalorder %s39, 3
      %p253 = por %p251, %p252
      %p255 = scmp.ne.s32.totalorder %s240, %s254
      %p256 = scmp.eq.s32.totalorder %s39, 0
      %p257 = por %p255, %p256
      %s259 = sadd.s32 %s258, 1
      %p262 = scmp.eq.s32.totalorder %s33, 3
      %p263 = scmp.ne.s32.totalorder %s258, %s260
      %p264 = scmp.eq.s32.totalorder %s33, 0
      %p265 = por %p263, %p264
      %p266 = scmp.ne.s32.totalorder %s258, %s260
      %p267 = scmp.eq.s32.totalorder %s38, 3
      %p268 = por %p266, %p267
      %p269 = scmp.ne.s32.totalorder %s260, %s261
      %p270 = scmp.eq.s32.totalorder %s38, 0
      %p271 = por %p269, %p270
      %p272 = scmp.ne.s32.totalorder %s260, %s261
      %p273 = scmp.eq.s32.totalorder %s39, 3
      %p274 = por %p272, %p273
      %p276 = scmp.ne.s32.totalorder %s261, %s275
      %p277 = scmp.eq.s32.totalorder %s39, 0
      %p278 = por %p276, %p277
      %s280 = sadd.s32 %s279, 1
      %p283 = scmp.eq.s32.totalorder %s33, 3
      %p284 = scmp.ne.s32.totalorder %s279, %s281
      %p285 = scmp.eq.s32.totalorder %s33, 0
      %p286 = por %p284, %p285
      %p287 = scmp.ne.s32.totalorder %s279, %s281
      %p288 = scmp.eq.s32.totalorder %s38, 3
      %p289 = por %p287, %p288
      %p290 = scmp.ne.s32.totalorder %s281, %s282
      %p291 = scmp.eq.s32.totalorder %s38, 0
      %p292 = por %p290, %p291
      %p293 = scmp.ne.s32.totalorder %s281, %s282
      %p294 = scmp.eq.s32.totalorder %s39, 3
      %p295 = por %p293, %p294
      %p297 = scmp.ne.s32.totalorder %s282, %s296
      %p298 = scmp.eq.s32.totalorder %s39, 0
      %p299 = por %p297, %p298
      %s301 = sadd.s32 %s300, 1
      %p304 = scmp.eq.s32.totalorder %s33, 3
      %p305 = scmp.ne.s32.totalorder %s300, %s302
      %p306 = scmp.eq.s32.totalorder %s33, 0
      %p307 = por %p305, %p306
      %p308 = scmp.ne.s32.totalorder %s300, %s302
      %p309 = scmp.eq.s32.totalorder %s38, 3
      %p310 = por %p308, %p309
      %p311 = scmp.ne.s32.totalorder %s302, %s303
      %p312 = scmp.eq.s32.totalorder %s38, 0
      %p313 = por %p311, %p312
      %p314 = scmp.ne.s32.totalorder %s302, %s303
      %p315 = scmp.eq.s32.totalorder %s39, 3
      %p316 = por %p314, %p315
      %p318 = scmp.ne.s32.totalorder %s303, %s317
      %p319 = scmp.eq.s32.totalorder %s39, 0
      %p320 = por %p318, %p319
      %s322 = sadd.s32 %s321, 1
      %p325 = scmp.eq.s32.totalorder %s33, 3
      %p326 = scmp.ne.s32.totalorder %s321, %s323
      %p327 = scmp.eq.s32.totalorder %s33, 0
      %p328 = por %p326, %p327
      %p329 = scmp.ne.s32.totalorder %s321, %s323
      %p330 = scmp.eq.s32.totalorder %s38, 3
      %p331 = por %p329, %p330
      %p332 = scmp.ne.s32.totalorder %s323, %s324
      %p333 = scmp.eq.s32.totalorder %s38, 0
      %p334 = por %p332, %p333
      %p335 = scmp.ne.s32.totalorder %s323, %s324
      %p336 = scmp.eq.s32.totalorder %s39, 3
      %p337 = por %p335, %p336
      %p339 = scmp.ne.s32.totalorder %s324, %s338
      %p340 = scmp.eq.s32.totalorder %s39, 0
      %p341 = por %p339, %p340
      %s343 = sadd.s32 %s342, 1
      %p346 = scmp.eq.s32.totalorder %s33, 3
      %p347 = scmp.ne.s32.totalorder %s342, %s344
      %p348 = scmp.eq.s32.totalorder %s33, 0
      %p349 = por %p347, %p348
      %p350 = scmp.ne.s32.totalorder %s342, %s344
      %p351 = scmp.eq.s32.totalorder %s38, 3
      %p352 = por %p350, %p351
      %p353 = scmp.ne.s32.totalorder %s344, %s345
      %p354 = scmp.eq.s32.totalorder %s38, 0
      %p355 = por %p353, %p354
      %p356 = scmp.ne.s32.totalorder %s344, %s345
      %p357 = scmp.eq.s32.totalorder %s39, 3
      %p358 = por %p356, %p357
      %p360 = scmp.ne.s32.totalorder %s345, %s359
      %p361 = scmp.eq.s32.totalorder %s39, 0
      %p362 = por %p360, %p361
      %s364 = sadd.s32 %s363, 1
      %p367 = scmp.eq.s32.totalorder %s33, 3
      %p368 = scmp.ne.s32.totalorder %s363, %s365
      %p369 = scmp.eq.s32.totalorder %s33, 0
      %p370 = por %p368, %p369
      %p371 = scmp.ne.s32.totalorder %s363, %s365
      %p372 = scmp.eq.s32.totalorder %s38, 3
      %p373 = por %p371, %p372
      %p374 = scmp.ne.s32.totalorder %s365, %s366
      %p375 = scmp.eq.s32.totalorder %s38, 0
      %p376 = por %p374, %p375
      %p377 = scmp.ne.s32.totalorder %s365, %s366
      %p378 = scmp.eq.s32.totalorder %s39, 3
      %p379 = por %p377, %p378
      %p381 = scmp.ne.s32.totalorder %s366, %s380
      %p382 = scmp.eq.s32.totalorder %s39, 0
      %p383 = por %p381, %p382
      %s385 = sadd.s32 %s384, 1
      %p388 = scmp.eq.s32.totalorder %s33, 3
      %p389 = scmp.ne.s32.totalorder %s384, %s386
      %p390 = scmp.eq.s32.totalorder %s33, 0
      %p391 = por %p389, %p390
      %p392 = scmp.ne.s32.totalorder %s384, %s386
      %p393 = scmp.eq.s32.totalorder %s38, 3
      %p394 = por %p392, %p393
      %p395 = scmp.ne.s32.totalorder %s386, %s387
      %p396 = scmp.eq.s32.totalorder %s38, 0
      %p397 = por %p395, %p396
      %p398 = scmp.ne.s32.totalorder %s386, %s387
      %p399 = scmp.eq.s32.totalorder %s39, 3
      %p400 = por %p398, %p399
      %p402 = scmp.ne.s32.totalorder %s387, %s401
      %p403 = scmp.eq.s32.totalorder %s39, 0
      %p404 = por %p402, %p403
      %s406 = sadd.s32 %s405, 1
      %p409 = scmp.eq.s32.totalorder %s33, 3
      %p410 = scmp.ne.s32.totalorder %s405, %s407
      %p411 = scmp.eq.s32.totalorder %s33, 0
      %p412 = por %p410, %p411
      %p413 = scmp.ne.s32.totalorder %s405, %s407
      %p414 = scmp.eq.s32.totalorder %s38, 3
      %p415 = por %p413, %p414
      %p416 = scmp.ne.s32.totalorder %s407, %s408
      %p417 = scmp.eq.s32.totalorder %s38, 0
      %p418 = por %p416, %p417
      %p419 = scmp.ne.s32.totalorder %s407, %s408
      %p420 = scmp.eq.s32.totalorder %s39, 3
      %p421 = por %p419, %p420
      %p423 = scmp.ne.s32.totalorder %s408, %s422
      %p424 = scmp.eq.s32.totalorder %s39, 0
      %p425 = por %p423, %p424
      %s426 = ssub.s32 %s40, %s52
      %s427 = ssub.s32 %s41, %s48
      %s428 = sor.u32 %s426, %s427
      %p429 = scmp.eq.s32.totalorder %s428, 0
      %s431 = sadd.s32 %s430, 1
      %s432 = scalar_select %p429, %s430, %s431
      %p435 = pneg %p429
      %p436 = scmp.eq.s32.totalorder %s33, 3
      %p437 = por %p435, %p436
      %p438 = scmp.ne.s32.totalorder %s430, %s433
      %p439 = scmp.eq.s32.totalorder %s33, 0
      %p440 = por %p438, %p439
      %p441 = scmp.ne.s32.totalorder %s430, %s433
      %p442 = scmp.eq.s32.totalorder %s38, 3
      %p443 = por %p441, %p442
      %p444 = scmp.ne.s32.totalorder %s433, %s434
      %p445 = scmp.eq.s32.totalorder %s38, 0
      %p446 = por %p444, %p445
      %p447 = scmp.ne.s32.totalorder %s433, %s434
      %p448 = scmp.eq.s32.totalorder %s39, 3
      %p449 = por %p447, %p448
      %p451 = scmp.ne.s32.totalorder %s434, %s450
      %p452 = scmp.eq.s32.totalorder %s39, 0
      %p453 = por %p451, %p452
      %p454 = scmp.le.s32.totalorder 1, %s33
      %p455 = scmp.lt.s32.totalorder %s33, 5
      %p456 = pnand %p454, %p455
      %p457 = pneg %p456
      // Predicated region
      $region9: #{tpu_custom_call.1} parent=5 // pred_check
        _
      $region10: #{tpu_custom_call.1} parent=5 // pred_check_branch
        %459 = sbr.rel (%p456) target = $region12
      $region11: #{tpu_custom_call.1} parent=5 // pred_region
        %s460 = ssub.s32 %s33, 1
        // Predicated region
        $region13: #{tpu_custom_call.1} parent=11 // pred_check
          %p461 = pneg %p166
        $region14: #{tpu_custom_call.1} parent=11 // pred_check_branch
          %463 = sbr.rel (%p461) target = $region16
        $region15: #{tpu_custom_call.1} parent=11 // pred_region
          _
        $region16: #{tpu_custom_call.1} parent=11 // pred_fallthru
          _
        // Predicated region
        $region17: #{tpu_custom_call.1} parent=11 // pred_check
          %p464 = pneg %p187
        $region18: #{tpu_custom_call.1} parent=11 // pred_check_branch
          %466 = sbr.rel (%p464) target = $region20
        $region19: #{tpu_custom_call.1} parent=11 // pred_region
          _
        $region20: #{tpu_custom_call.1} parent=11 // pred_fallthru
          _
        // Predicated region
        $region21: #{tpu_custom_call.1} parent=11 // pred_check
          %p467 = pneg %p208
        $region22: #{tpu_custom_call.1} parent=11 // pred_check_branch
          %469 = sbr.rel (%p467) target = $region24
        $region23: #{tpu_custom_call.1} parent=11 // pred_region
          _
        $region24: #{tpu_custom_call.1} parent=11 // pred_fallthru
          _
        // Predicated region
        $region25: #{tpu_custom_call.1} parent=11 // pred_check
          %p470 = pneg %p229
        $region26: #{tpu_custom_call.1} parent=11 // pred_check_branch
          %472 = sbr.rel (%p470) target = $region28
        $region27: #{tpu_custom_call.1} parent=11 // pred_region
          _
        $region28: #{tpu_custom_call.1} parent=11 // pred_fallthru
          _
        // Predicated region
        $region29: #{tpu_custom_call.1} parent=11 // pred_check
          %p473 = pneg %p250
        $region30: #{tpu_custom_call.1} parent=11 // pred_check_branch
          %475 = sbr.rel (%p473) target = $region32
        $region31: #{tpu_custom_call.1} parent=11 // pred_region
          %477 = vsyncadd [#allocation10], 0
          %s478 = sshll.u32 %s7, 4
          %s479 = int_to_ptr.hbm [resolvable:$true] %s478
          %s480 = sshll.u32 [#allocation9], 4
          %s481 = int_to_ptr.vmem [resolvable:$true] %s480
          %486 = dma.hbm_to_vmem [thread:$0]  %s479, 18432, %s481, [#allocation10], 128, 128, 8
        $region32: #{tpu_custom_call.1} parent=11 // pred_fallthru
          _
        // Predicated region
        $region33: #{tpu_custom_call.1} parent=11 // pred_check
          %p487 = pneg %p271
        $region34: #{tpu_custom_call.1} parent=11 // pred_check_branch
          %489 = sbr.rel (%p487) target = $region36
        $region35: #{tpu_custom_call.1} parent=11 // pred_region
          _
        $region36: #{tpu_custom_call.1} parent=11 // pred_fallthru
          _
        // Predicated region
        $region37: #{tpu_custom_call.1} parent=11 // pred_check
          %p490 = pneg %p292
        $region38: #{tpu_custom_call.1} parent=11 // pred_check_branch
          %492 = sbr.rel (%p490) target = $region40
        $region39: #{tpu_custom_call.1} parent=11 // pred_region
          _
        $region40: #{tpu_custom_call.1} parent=11 // pred_fallthru
          _
        // Predicated region
        $region41: #{tpu_custom_call.1} parent=11 // pred_check
          %p493 = pneg %p313
        $region42: #{tpu_custom_call.1} parent=11 // pred_check_branch
          %495 = sbr.rel (%p493) target = $region44
        $region43: #{tpu_custom_call.1} parent=11 // pred_region
          %497 = vsyncadd [#allocation10], 0
          %s498 = sshll.u32 %s10, 4
          %s499 = int_to_ptr.hbm [resolvable:$true] %s498
          %s500 = sshll.u32 [#allocation11], 4
          %s501 = int_to_ptr.vmem [resolvable:$true] %s500
          %506 = dma.hbm_to_vmem [thread:$0]  %s499, 2048, %s501, [#allocation10], 128, 128, 8
        $region44: #{tpu_custom_call.1} parent=11 // pred_fallthru
          _
        // Predicated region
        $region45: #{tpu_custom_call.1} parent=11 // pred_check
          %p507 = pneg %p334
        $region46: #{tpu_custom_call.1} parent=11 // pred_check_branch
          %509 = sbr.rel (%p507) target = $region48
        $region47: #{tpu_custom_call.1} parent=11 // pred_region
          _
        $region48: #{tpu_custom_call.1} parent=11 // pred_fallthru
          _
        // Predicated region
        $region49: #{tpu_custom_call.1} parent=11 // pred_check
          %p510 = pneg %p355
        $region50: #{tpu_custom_call.1} parent=11 // pred_check_branch
          %512 = sbr.rel (%p510) target = $region52
        $region51: #{tpu_custom_call.1} parent=11 // pred_region
          _
        $region52: #{tpu_custom_call.1} parent=11 // pred_fallthru
          _
        // Predicated region
        $region53: #{tpu_custom_call.1} parent=11 // pred_check
          %p513 = pneg %p376
        $region54: #{tpu_custom_call.1} parent=11 // pred_check_branch
          %515 = sbr.rel (%p513) target = $region56
        $region55: #{tpu_custom_call.1} parent=11 // pred_region
          %517 = vsyncadd [#allocation13], 0
          %s518 = sshll.u32 %s13, 4
          %s519 = int_to_ptr.hbm [resolvable:$true] %s518
          %s520 = sshll.u32 [#allocation12], 4
          %s521 = int_to_ptr.vmem [resolvable:$true] %s520
          %526 = dma.hbm_to_vmem [thread:$0]  %s519, 2048, %s521, [#allocation13], 128, 128, 8
        $region56: #{tpu_custom_call.1} parent=11 // pred_fallthru
          _
        // Predicated region
        $region57: #{tpu_custom_call.1} parent=11 // pred_check
          %p527 = pneg %p397
        $region58: #{tpu_custom_call.1} parent=11 // pred_check_branch
          %529 = sbr.rel (%p527) target = $region60
        $region59: #{tpu_custom_call.1} parent=11 // pred_region
          _
        $region60: #{tpu_custom_call.1} parent=11 // pred_fallthru
          _
        // Predicated region
        $region61: #{tpu_custom_call.1} parent=11 // pred_check
          %p530 = pneg %p418
        $region62: #{tpu_custom_call.1} parent=11 // pred_check_branch
          %532 = sbr.rel (%p530) target = $region64
        $region63: #{tpu_custom_call.1} parent=11 // pred_region
          _
        $region64: #{tpu_custom_call.1} parent=11 // pred_fallthru
          _
      $region12: #{tpu_custom_call.1} parent=5 // pred_fallthru
        _
      %p533 = scmp.lt.s32.totalorder %s33, 4
      // Predicated region
      $region65: #{tpu_custom_call.1} parent=5 // pred_check
        %p534 = pneg %p533
      $region66: #{tpu_custom_call.1} parent=5 // pred_check_branch
        %536 = sbr.rel (%p534) target = $region68
      $region67: #{tpu_custom_call.1} parent=5 // pred_region
        // Predicated region
        $region69: #{tpu_custom_call.1} parent=67 // pred_check
          %p537 = pneg %p67
        $region70: #{tpu_custom_call.1} parent=67 // pred_check_branch
          %539 = sbr.rel (%p537) target = $region72
        $region71: #{tpu_custom_call.1} parent=67 // pred_region
          %s540 = sand.u32 %s57, 1
          %s541 = scalar_lea.sflag [#allocation4], %s540
          %s542 = sand.u32 %s57, 1
          %s543 = smul.addr %s542, 128
          %s544 = scalar_lea.vmem [#allocation3], %s543
          %s545 = smul.u32 8, %s41
          %547 = vsyncadd %s541, 0
          %s548 = smul.addr %s545, 2
          %s549 = smul.addr %s40, 32
          %s550 = sadd.s32 %s548, %s549
          %s551 = smul.addr %s550, 8
          %s552 = scalar_lea.hbm %s0, %s551
          %s553 = sshll.u32 %s552, 4
          %s554 = int_to_ptr.hbm [resolvable:$true] %s553
          %s555 = sshll.u32 %s544, 4
          %s556 = int_to_ptr.vmem [resolvable:$true] %s555
          %561 = dma.hbm_to_vmem [thread:$0]  %s554, 2048, %s556, %s541, 128, 128, 8
        $region72: #{tpu_custom_call.1} parent=67 // pred_fallthru
          _
        // Predicated region
        $region73: #{tpu_custom_call.1} parent=67 // pred_check
          %p562 = pneg %p103
        $region74: #{tpu_custom_call.1} parent=67 // pred_check_branch
          %564 = sbr.rel (%p562) target = $region76
        $region75: #{tpu_custom_call.1} parent=67 // pred_region
          %s565 = sand.u32 %s33, 1
          %s566 = scalar_lea.sflag [#allocation7], %s565
          %s567 = sand.u32 %s93, 1
          %s568 = smul.addr %s567, 16
          %s569 = scalar_lea.vmem [#allocation6], %s568
          %s570 = smul.u32 %s41, 8
          %s571 = ssub.s32 %s570, 1
          %p572 = scmp.gt.s32.totalorder %s571, 0
          %s573 = scalar_select %p572, %s571, 0
          %575 = vsyncadd %s566, 0
          %s576 = smul.addr %s573, 2
          %s577 = smul.addr %s40, 32
          %s578 = sadd.s32 %s576, %s577
          %s579 = smul.addr %s578, 8
          %s580 = scalar_lea.hbm %s1, %s579
          %s581 = sshll.u32 %s580, 4
          %s582 = int_to_ptr.hbm [resolvable:$true] %s581
          %s583 = sshll.u32 %s569, 4
          %s584 = int_to_ptr.vmem [resolvable:$true] %s583
          %589 = dma.hbm_to_vmem [thread:$0]  %s582, 256, %s584, %s566, 128, 128, 8
        $region76: #{tpu_custom_call.1} parent=67 // pred_fallthru
          _
        // Predicated region
        $region77: #{tpu_custom_call.1} parent=67 // pred_check
          %p590 = pneg %p139
        $region78: #{tpu_custom_call.1} parent=67 // pred_check_branch
          %592 = sbr.rel (%p590) target = $region80
        $region79: #{tpu_custom_call.1} parent=67 // pred_region
          %s593 = sand.u32 %s33, 1
          %s594 = scalar_lea.sflag [#allocation7], %s593
          %s595 = sand.u32 %s129, 1
          %s596 = smul.addr %s595, 16
          %s597 = scalar_lea.vmem [#allocation8], %s596
          %s598 = sadd.s32 %s41, 1
          %s599 = smul.u32 %s598, 8
          %p600 = scmp.lt.s32.totalorder %s599, 15
          %s601 = scalar_select %p600, %s599, 15
          %603 = vsyncadd %s594, 0
          %s604 = smul.addr %s601, 2
          %s605 = smul.addr %s40, 32
          %s606 = sadd.s32 %s604, %s605
          %s607 = smul.addr %s606, 8
          %s608 = scalar_lea.hbm %s2, %s607
          %s609 = sshll.u32 %s608, 4
          %s610 = int_to_ptr.hbm [resolvable:$true] %s609
          %s611 = sshll.u32 %s597, 4
          %s612 = int_to_ptr.vmem [resolvable:$true] %s611
          %617 = dma.hbm_to_vmem [thread:$0]  %s610, 256, %s612, %s594, 128, 128, 8
        $region80: #{tpu_custom_call.1} parent=67 // pred_fallthru
          _
      $region68: #{tpu_custom_call.1} parent=5 // pred_fallthru
        _
      %p618 = scmp.le.s32.totalorder 1, %s33
      %p619 = scmp.lt.s32.totalorder %s33, 5
      %p620 = pnand %p618, %p619
      %p621 = pneg %p620
      // Predicated region
      $region81: #{tpu_custom_call.1} parent=5 // pred_check
        _
      $region82: #{tpu_custom_call.1} parent=5 // pred_check_branch
        %623 = sbr.rel (%p620) target = $region84
      $region83: #{tpu_custom_call.1} parent=5 // pred_region
        %s624 = ssub.s32 %s33, 1
        %s625 = sand.u32 %s60, 1
        %s626 = scalar_lea.sflag [#allocation4], %s625
        %s627 = sand.u32 %s60, 1
        %s628 = smul.addr %s627, 128
        %s629 = scalar_lea.vmem [#allocation3], %s628
        // Predicated region
        $region85: #{tpu_custom_call.1} parent=83 // pred_check
          %p630 = pneg %p73
        $region86: #{tpu_custom_call.1} parent=83 // pred_check_branch
          %632 = sbr.rel (%p630) target = $region88
        $region87: #{tpu_custom_call.1} parent=83 // pred_region
          %634 = dma.done %s626, 2048
        $region88: #{tpu_custom_call.1} parent=83 // pred_fallthru
          _
        %s635 = sand.u32 %s38, 1
        %s636 = scalar_lea.sflag [#allocation7], %s635
        %s637 = sand.u32 %s96, 1
        %s638 = smul.addr %s637, 16
        %s639 = scalar_lea.vmem [#allocation6], %s638
        // Predicated region
        $region89: #{tpu_custom_call.1} parent=83 // pred_check
          %p640 = pneg %p109
        $region90: #{tpu_custom_call.1} parent=83 // pred_check_branch
          %642 = sbr.rel (%p640) target = $region92
        $region91: #{tpu_custom_call.1} parent=83 // pred_region
          %644 = dma.done %s636, 256
        $region92: #{tpu_custom_call.1} parent=83 // pred_fallthru
          _
        %s645 = sand.u32 %s38, 1
        %s646 = scalar_lea.sflag [#allocation7], %s645
        %s647 = sand.u32 %s132, 1
        %s648 = smul.addr %s647, 16
        %s649 = scalar_lea.vmem [#allocation8], %s648
        // Predicated region
        $region93: #{tpu_custom_call.1} parent=83 // pred_check
          %p650 = pneg %p145
        $region94: #{tpu_custom_call.1} parent=83 // pred_check_branch
          %652 = sbr.rel (%p650) target = $region96
        $region95: #{tpu_custom_call.1} parent=83 // pred_region
          %654 = dma.done %s646, 256
        $region96: #{tpu_custom_call.1} parent=83 // pred_fallthru
          _
        // Predicated region
        $region97: #{tpu_custom_call.1} parent=83 // pred_check
          %p655 = pneg %p250
        $region98: #{tpu_custom_call.1} parent=83 // pred_check_branch
          %657 = sbr.rel (%p655) target = $region100
        $region99: #{tpu_custom_call.1} parent=83 // pred_region
          %659 = dma.done [#allocation10], 18432
        $region100: #{tpu_custom_call.1} parent=83 // pred_fallthru
          _
        // Predicated region
        $region101: #{tpu_custom_call.1} parent=83 // pred_check
          %p660 = pneg %p313
        $region102: #{tpu_custom_call.1} parent=83 // pred_check_branch
          %662 = sbr.rel (%p660) target = $region104
        $region103: #{tpu_custom_call.1} parent=83 // pred_region
          %664 = dma.done [#allocation10], 2048
        $region104: #{tpu_custom_call.1} parent=83 // pred_fallthru
          _
        // Predicated region
        $region105: #{tpu_custom_call.1} parent=83 // pred_check
          %p665 = pneg %p376
        $region106: #{tpu_custom_call.1} parent=83 // pred_check_branch
          %667 = sbr.rel (%p665) target = $region108
        $region107: #{tpu_custom_call.1} parent=83 // pred_region
          %669 = dma.done [#allocation13], 2048
        $region108: #{tpu_custom_call.1} parent=83 // pred_fallthru
          _
        %s670 = sand.u32 %s60, 1
        %s671 = scalar_lea.sflag [#allocation4], %s670
        %s672 = sand.u32 %s60, 1
        %s673 = smul.addr %s672, 128
        %s674 = scalar_lea.vmem [#allocation3], %s673
        %p675 = pneg %p73
        %p676 = pneg %p70
        %s677 = sand.u32 %s38, 1
        %s678 = scalar_lea.sflag [#allocation7], %s677
        %s679 = sand.u32 %s96, 1
        %s680 = smul.addr %s679, 16
        %s681 = scalar_lea.vmem [#allocation6], %s680
        %p682 = pneg %p109
        %p683 = pneg %p106
        %s684 = sand.u32 %s38, 1
        %s685 = scalar_lea.sflag [#allocation7], %s684
        %s686 = sand.u32 %s132, 1
        %s687 = smul.addr %s686, 16
        %s688 = scalar_lea.vmem [#allocation8], %s687
        %p689 = pneg %p145
        %p690 = pneg %p142
        %p691 = pneg %p166
        %p692 = pneg %p163
        %p693 = pneg %p187
        %p694 = pneg %p184
        %p695 = pneg %p208
        %p696 = pneg %p205
        %p697 = pneg %p229
        %p698 = pneg %p226
        %p699 = pneg %p250
        %p700 = pneg %p247
        %p701 = pneg %p271
        %p702 = pneg %p268
        %p703 = pneg %p292
        %p704 = pneg %p289
        %p705 = pneg %p313
        %p706 = pneg %p310
        %p707 = pneg %p334
        %p708 = pneg %p331
        %p709 = pneg %p355
        %p710 = pneg %p352
        %p711 = pneg %p376
        %p712 = pneg %p373
        %p713 = pneg %p397
        %p714 = pneg %p394
        %p715 = pneg %p418
        %p716 = pneg %p415
        %p717 = pneg %p446
        %p718 = pneg %p443
        %s719 = sand.u32 %s433, 1
        %s720 = scalar_lea.sflag [#allocation5], %s719
        %s721 = sand.u32 %s433, 1
        %s722 = smul.addr %s721, 128
        %s723 = scalar_lea.vmem [#allocation14], %s722
        %s724 = smul.u32 8, %s43
        %s725 = smul.u32 %s43, 8
        %s726 = ssub.s32 %s725, 1
        %p727 = scmp.gt.s32.totalorder %s726, 0
        %s728 = scalar_select %p727, %s726, 0
        %s729 = sadd.s32 %s43, 1
        %s730 = smul.u32 %s729, 8
        %p731 = scmp.lt.s32.totalorder %s730, 15
        %s732 = scalar_select %p731, %s730, 15
        %s733 = smul.u32 8, %s43
        %v734 = vld [vmem:[%s4] sm:$0xff]
        %v735 = vld [vmem:[%s4 + $0x8] sm:$0xff]
        %v736 = vld [vmem:[%s4 + $0x10] sm:$0xff]
        %v737 = vld [vmem:[%s4 + $0x18] sm:$0xff]
        %v738 = vld [vmem:[%s4 + $0x20] sm:$0xff]
        %v739 = vld [vmem:[%s4 + $0x28] sm:$0xff]
        %v740 = vld [vmem:[%s4 + $0x30] sm:$0xff]
        %v741 = vld [vmem:[%s4 + $0x38] sm:$0xff]
        %v742 = vld [vmem:[%s4 + $0x40] sm:$0xff]
        %v743 = vld [vmem:[%s4 + $0x48] sm:$0xff]
        %v744 = vld [vmem:[%s4 + $0x50] sm:$0xff]
        %v745 = vld [vmem:[%s4 + $0x58] sm:$0xff]
        %v746 = vld [vmem:[%s4 + $0x60] sm:$0xff]
        %v747 = vld [vmem:[%s4 + $0x68] sm:$0xff]
        %v748 = vld [vmem:[%s4 + $0x70] sm:$0xff]
        %v749 = vld [vmem:[%s4 + $0x78] sm:$0xff]
        %v750 = vld [vmem:[%s5] sm:$0x1]
        %v751 = vld [vmem:[%s6] sm:$0x1]
        %v752 = vld [vmem:[%s629] sm:$0xff]
        %v753 = vld [vmem:[%s629 + $0x8] sm:$0xff]
        %v754 = vld [vmem:[%s629 + $0x10] sm:$0xff]
        %v755 = vld [vmem:[%s629 + $0x18] sm:$0xff]
        %v756 = vld [vmem:[%s629 + $0x20] sm:$0xff]
        %v757 = vld [vmem:[%s629 + $0x28] sm:$0xff]
        %v758 = vld [vmem:[%s629 + $0x30] sm:$0xff]
        %v759 = vld [vmem:[%s629 + $0x38] sm:$0xff]
        %v760 = vld [vmem:[%s629 + $0x40] sm:$0xff]
        %v761 = vld [vmem:[%s629 + $0x48] sm:$0xff]
        %v762 = vld [vmem:[%s629 + $0x50] sm:$0xff]
        %v763 = vld [vmem:[%s629 + $0x58] sm:$0xff]
        %v764 = vld [vmem:[%s629 + $0x60] sm:$0xff]
        %v765 = vld [vmem:[%s629 + $0x68] sm:$0xff]
        %v766 = vld [vmem:[%s629 + $0x70] sm:$0xff]
        %v767 = vld [vmem:[%s629 + $0x78] sm:$0xff]
        %768 = vmatpush.msra.mxu0 %v749
        %769 = vmatpush.msra.mxu0 %v748
        %770 = vmatpush.msra.mxu0 %v747
        %771 = vmatpush.msra.mxu0 %v746
        %772 = vmatpush.msra.mxu0 %v745
        %773 = vmatpush.msra.mxu0 %v744
        %774 = vmatpush.msra.mxu0 %v743
        %775 = vmatpush.msra.mxu0 %v742
        %776 = vmatpush.msra.mxu0 %v741
        %777 = vmatpush.msra.mxu0 %v740
        %778 = vmatpush.msra.mxu0 %v739
        %779 = vmatpush.msra.mxu0 %v738
        %780 = vmatpush.msra.mxu0 %v737
        %781 = vmatpush.msra.mxu0 %v736
        %782 = vmatpush.msra.mxu0 %v735
        %783 = vmatpush.msra.mxu0 %v734
        %784 = vmatmul.f32.gmra.mxu0 %v752
        %v785 = vpop.f32.mrf.mxu0
        %v786 = vadd.f32 0.0, %v785
        %787 = vmatmul.f32.gmra.mxu0 %v753
        %v788 = vpop.f32.mrf.mxu0
        %v789 = vadd.f32 0.0, %v788
        %790 = vmatmul.f32.gmra.mxu0 %v754
        %v791 = vpop.f32.mrf.mxu0
        %v792 = vadd.f32 0.0, %v791
        %793 = vmatmul.f32.gmra.mxu0 %v755
        %v794 = vpop.f32.mrf.mxu0
        %v795 = vadd.f32 0.0, %v794
        %796 = vmatmul.f32.gmra.mxu0 %v756
        %v797 = vpop.f32.mrf.mxu0
        %v798 = vadd.f32 0.0, %v797
        %799 = vmatmul.f32.gmra.mxu0 %v757
        %v800 = vpop.f32.mrf.mxu0
        %v801 = vadd.f32 0.0, %v800
        %802 = vmatmul.f32.gmra.mxu0 %v758
        %v803 = vpop.f32.mrf.mxu0
        %v804 = vadd.f32 0.0, %v803
        %805 = vmatmul.f32.gmra.mxu0 %v759
        %v806 = vpop.f32.mrf.mxu0
        %v807 = vadd.f32 0.0, %v806
        %808 = vmatmul.f32.gmra.mxu0 %v760
        %v809 = vpop.f32.mrf.mxu0
        %v810 = vadd.f32 0.0, %v809
        %811 = vmatmul.f32.gmra.mxu0 %v761
        %v812 = vpop.f32.mrf.mxu0
        %v813 = vadd.f32 0.0, %v812
        %814 = vmatmul.f32.gmra.mxu0 %v762
        %v815 = vpop.f32.mrf.mxu0
        %v816 = vadd.f32 0.0, %v815
        %817 = vmatmul.f32.gmra.mxu0 %v763
        %v818 = vpop.f32.mrf.mxu0
        %v819 = vadd.f32 0.0, %v818
        %820 = vmatmul.f32.gmra.mxu0 %v764
        %v821 = vpop.f32.mrf.mxu0
        %v822 = vadd.f32 0.0, %v821
        %823 = vmatmul.f32.gmra.mxu0 %v765
        %v824 = vpop.f32.mrf.mxu0
        %v825 = vadd.f32 0.0, %v824
        %826 = vmatmul.f32.gmra.mxu0 %v766
        %v827 = vpop.f32.mrf.mxu0
        %v828 = vadd.f32 0.0, %v827
        %829 = vmatmul.f32.gmra.mxu0 %v767
        %v830 = vpop.f32.mrf.mxu0
        %v831 = vadd.f32 0.0, %v830
        %832 = vdwg.mxu0
        %v834 = vperm.slane %v750, 0
        %v836 = vmul.f32 %v786, %v834
        %v837 = vmul.f32 %v789, %v834
        %v838 = vmul.f32 %v792, %v834
        %v839 = vmul.f32 %v795, %v834
        %v840 = vmul.f32 %v798, %v834
        %v841 = vmul.f32 %v801, %v834
        %v842 = vmul.f32 %v804, %v834
        %v843 = vmul.f32 %v807, %v834
        %v844 = vmul.f32 %v810, %v834
        %v845 = vmul.f32 %v813, %v834
        %v846 = vmul.f32 %v816, %v834
        %v847 = vmul.f32 %v819, %v834
        %v848 = vmul.f32 %v822, %v834
        %v849 = vmul.f32 %v825, %v834
        %v850 = vmul.f32 %v828, %v834
        %v851 = vmul.f32 %v831, %v834
        %v853 = vperm.slane %v751, 0
        %v855 = vadd.f32 %v836, %v853
        %v856 = vadd.f32 %v837, %v853
        %v857 = vadd.f32 %v838, %v853
        %v858 = vadd.f32 %v839, %v853
        %v859 = vadd.f32 %v840, %v853
        %v860 = vadd.f32 %v841, %v853
        %v861 = vadd.f32 %v842, %v853
        %v862 = vadd.f32 %v843, %v853
        %v863 = vadd.f32 %v844, %v853
        %v864 = vadd.f32 %v845, %v853
        %v865 = vadd.f32 %v846, %v853
        %v866 = vadd.f32 %v847, %v853
        %v867 = vadd.f32 %v848, %v853
        %v868 = vadd.f32 %v849, %v853
        %v869 = vadd.f32 %v850, %v853
        %v870 = vadd.f32 %v851, %v853
        %v871 = vmax.f32 %v855, 0.0
        %v872 = vmax.f32 %v856, 0.0
        %v873 = vmax.f32 %v857, 0.0
        %v874 = vmax.f32 %v858, 0.0
        %v875 = vmax.f32 %v859, 0.0
        %v876 = vmax.f32 %v860, 0.0
        %v877 = vmax.f32 %v861, 0.0
        %v878 = vmax.f32 %v862, 0.0
        %v879 = vmax.f32 %v863, 0.0
        %v880 = vmax.f32 %v864, 0.0
        %v881 = vmax.f32 %v865, 0.0
        %v882 = vmax.f32 %v866, 0.0
        %v883 = vmax.f32 %v867, 0.0
        %v884 = vmax.f32 %v868, 0.0
        %v885 = vmax.f32 %v869, 0.0
        %v886 = vmax.f32 %v870, 0.0
        %887 = vst [vmem:[#allocation2 + $0x10] sm:$0xff] %v871
        %888 = vst [vmem:[#allocation2 + $0x18] sm:$0xff] %v872
        %889 = vst [vmem:[#allocation2 + $0x20] sm:$0xff] %v873
        %890 = vst [vmem:[#allocation2 + $0x28] sm:$0xff] %v874
        %891 = vst [vmem:[#allocation2 + $0x30] sm:$0xff] %v875
        %892 = vst [vmem:[#allocation2 + $0x38] sm:$0xff] %v876
        %893 = vst [vmem:[#allocation2 + $0x40] sm:$0xff] %v877
        %894 = vst [vmem:[#allocation2 + $0x48] sm:$0xff] %v878
        %895 = vst [vmem:[#allocation2 + $0x50] sm:$0xff] %v879
        %896 = vst [vmem:[#allocation2 + $0x58] sm:$0xff] %v880
        %897 = vst [vmem:[#allocation2 + $0x60] sm:$0xff] %v881
        %898 = vst [vmem:[#allocation2 + $0x68] sm:$0xff] %v882
        %899 = vst [vmem:[#allocation2 + $0x70] sm:$0xff] %v883
        %900 = vst [vmem:[#allocation2 + $0x78] sm:$0xff] %v884
        %901 = vst [vmem:[#allocation2 + $0x80] sm:$0xff] %v885
        %902 = vst [vmem:[#allocation2 + $0x88] sm:$0xff] %v886
        %p903 = scmp.eq.s32.totalorder %s43, 0
        // Predicated region
        $region109: #{tpu_custom_call.1} parent=83 // pred_check
          %p904 = pneg %p903
        $region110: #{tpu_custom_call.1} parent=83 // pred_check_branch
          %906 = sbr.rel (%p904) target = $region112
        $region111: #{tpu_custom_call.1} parent=83 // pred_region
          %907 = vst [vmem:[#allocation2] sm:$0xff] 0.0
          %908 = vst [vmem:[#allocation2 + $0x8] sm:$0xff] 0.0
        $region112: #{tpu_custom_call.1} parent=83 // pred_fallthru
          _
        %p909 = scmp.gt.s32.totalorder %s43, 0
        // Predicated region
        $region113: #{tpu_custom_call.1} parent=83 // pred_check
          %p910 = pneg %p909
        $region114: #{tpu_custom_call.1} parent=83 // pred_check_branch
          %912 = sbr.rel (%p910) target = $region116
        $region115: #{tpu_custom_call.1} parent=83 // pred_region
          %v913 = vld [vmem:[%s639] sm:$0xff]
          %v914 = vld [vmem:[%s639 + $0x8] sm:$0xff]
          %915 = vmatpush.msra.mxu0 %v749
          %916 = vmatpush.msra.mxu0 %v748
          %917 = vmatpush.msra.mxu0 %v747
          %918 = vmatpush.msra.mxu0 %v746
          %919 = vmatpush.msra.mxu0 %v745
          %920 = vmatpush.msra.mxu0 %v744
          %921 = vmatpush.msra.mxu0 %v743
          %922 = vmatpush.msra.mxu0 %v742
          %923 = vmatpush.msra.mxu0 %v741
          %924 = vmatpush.msra.mxu0 %v740
          %925 = vmatpush.msra.mxu0 %v739
          %926 = vmatpush.msra.mxu0 %v738
          %927 = vmatpush.msra.mxu0 %v737
          %928 = vmatpush.msra.mxu0 %v736
          %929 = vmatpush.msra.mxu0 %v735
          %930 = vmatpush.msra.mxu0 %v734
          %931 = vmatmul.f32.gmra.mxu0 %v913
          %v932 = vpop.f32.mrf.mxu0
          %v933 = vadd.f32 0.0, %v932
          %934 = vmatmul.f32.gmra.mxu0 %v914
          %v935 = vpop.f32.mrf.mxu0
          %v936 = vadd.f32 0.0, %v935
          %937 = vdwg.mxu0
          %v938 = vmul.f32 %v933, %v834
          %v939 = vmul.f32 %v936, %v834
          %v940 = vadd.f32 %v938, %v853
          %v941 = vadd.f32 %v939, %v853
          %v942 = vmax.f32 %v940, 0.0
          %v943 = vmax.f32 %v941, 0.0
          %944 = vst [vmem:[#allocation2] sm:$0xff] %v942
          %945 = vst [vmem:[#allocation2 + $0x8] sm:$0xff] %v943
        $region116: #{tpu_custom_call.1} parent=83 // pred_fallthru
          _
        %p946 = scmp.eq.s32.totalorder %s43, 1
        // Predicated region
        $region117: #{tpu_custom_call.1} parent=83 // pred_check
          %p947 = pneg %p946
        $region118: #{tpu_custom_call.1} parent=83 // pred_check_branch
          %949 = sbr.rel (%p947) target = $region120
        $region119: #{tpu_custom_call.1} parent=83 // pred_region
          %950 = vst [vmem:[#allocation2 + $0x90] sm:$0xff] 0.0
          %951 = vst [vmem:[#allocation2 + $0x98] sm:$0xff] 0.0
        $region120: #{tpu_custom_call.1} parent=83 // pred_fallthru
          _
        %p952 = scmp.lt.s32.totalorder %s43, 1
        // Predicated region
        $region121: #{tpu_custom_call.1} parent=83 // pred_check
          %p953 = pneg %p952
        $region122: #{tpu_custom_call.1} parent=83 // pred_check_branch
          %955 = sbr.rel (%p953) target = $region124
        $region123: #{tpu_custom_call.1} parent=83 // pred_region
          %v956 = vld [vmem:[%s649] sm:$0xff]
          %v957 = vld [vmem:[%s649 + $0x8] sm:$0xff]
          %958 = vmatpush.msra.mxu0 %v749
          %959 = vmatpush.msra.mxu0 %v748
          %960 = vmatpush.msra.mxu0 %v747
          %961 = vmatpush.msra.mxu0 %v746
          %962 = vmatpush.msra.mxu0 %v745
          %963 = vmatpush.msra.mxu0 %v744
          %964 = vmatpush.msra.mxu0 %v743
          %965 = vmatpush.msra.mxu0 %v742
          %966 = vmatpush.msra.mxu0 %v741
          %967 = vmatpush.msra.mxu0 %v740
          %968 = vmatpush.msra.mxu0 %v739
          %969 = vmatpush.msra.mxu0 %v738
          %970 = vmatpush.msra.mxu0 %v737
          %971 = vmatpush.msra.mxu0 %v736
          %972 = vmatpush.msra.mxu0 %v735
          %973 = vmatpush.msra.mxu0 %v734
          %974 = vmatmul.f32.gmra.mxu0 %v956
          %v975 = vpop.f32.mrf.mxu0
          %v976 = vadd.f32 0.0, %v975
          %977 = vmatmul.f32.gmra.mxu0 %v957
          %v978 = vpop.f32.mrf.mxu0
          %v979 = vadd.f32 0.0, %v978
          %980 = vdwg.mxu0
          %v981 = vmul.f32 %v976, %v834
          %v982 = vmul.f32 %v979, %v834
          %v983 = vadd.f32 %v981, %v853
          %v984 = vadd.f32 %v982, %v853
          %v985 = vmax.f32 %v983, 0.0
          %v986 = vmax.f32 %v984, 0.0
          %987 = vst [vmem:[#allocation2 + $0x90] sm:$0xff] %v985
          %988 = vst [vmem:[#allocation2 + $0x98] sm:$0xff] %v986
        $region124: #{tpu_custom_call.1} parent=83 // pred_fallthru
          _
        %v989 = vld [vmem:[%s3] sm:$0xff]
        %v990 = vld [vmem:[%s3 + $0x8] sm:$0xff]
        %v991 = vld [vmem:[%s3 + $0x10] sm:$0xff]
        %v992 = vld [vmem:[%s3 + $0x18] sm:$0xff]
        %v993 = vld [vmem:[%s3 + $0x20] sm:$0xff]
        %v994 = vld [vmem:[%s3 + $0x28] sm:$0xff]
        %v995 = vld [vmem:[%s3 + $0x30] sm:$0xff]
        %v996 = vld [vmem:[%s3 + $0x38] sm:$0xff]
        %v997 = vld [vmem:[%s3 + $0x40] sm:$0xff]
        %v998 = vld [vmem:[%s3 + $0x48] sm:$0xff]
        %v999 = vld [vmem:[%s3 + $0x50] sm:$0xff]
        %v1000 = vld [vmem:[%s3 + $0x58] sm:$0xff]
        %v1001 = vld [vmem:[%s3 + $0x60] sm:$0xff]
        %v1002 = vld [vmem:[%s3 + $0x68] sm:$0xff]
        %v1003 = vld [vmem:[%s3 + $0x70] sm:$0xff]
        %v1004 = vld [vmem:[%s3 + $0x78] sm:$0xff]
        %v1005 = vld [vmem:[%s3 + $0x80] sm:$0xff]
        %v1006 = vld [vmem:[%s3 + $0x88] sm:$0xff]
        %v1007 = vld [vmem:[%s3 + $0x90] sm:$0xff]
        %v1008 = vld [vmem:[%s3 + $0x98] sm:$0xff]
        %v1009 = vld [vmem:[#allocation2] sm:$0xff]
        %v1010 = vld [vmem:[#allocation2 + $0x8] sm:$0xff]
        %v1011 = vld [vmem:[#allocation2 + $0x10] sm:$0xff]
        %v1012 = vld [vmem:[#allocation2 + $0x18] sm:$0xff]
        %v1013 = vld [vmem:[#allocation2 + $0x20] sm:$0xff]
        %v1014 = vld [vmem:[#allocation2 + $0x28] sm:$0xff]
        %v1015 = vld [vmem:[#allocation2 + $0x30] sm:$0xff]
        %v1016 = vld [vmem:[#allocation2 + $0x38] sm:$0xff]
        %v1017 = vld [vmem:[#allocation2 + $0x40] sm:$0xff]
        %v1018 = vld [vmem:[#allocation2 + $0x48] sm:$0xff]
        %v1019 = vld [vmem:[#allocation2 + $0x50] sm:$0xff]
        %v1020 = vld [vmem:[#allocation2 + $0x58] sm:$0xff]
        %v1021 = vld [vmem:[#allocation2 + $0x60] sm:$0xff]
        %v1022 = vld [vmem:[#allocation2 + $0x68] sm:$0xff]
        %v1023 = vld [vmem:[#allocation2 + $0x70] sm:$0xff]
        %v1024 = vld [vmem:[#allocation2 + $0x78] sm:$0xff]
        %v1025 = vld [vmem:[#allocation2 + $0x80] sm:$0xff]
        %v1026 = vld [vmem:[#allocation2 + $0x88] sm:$0xff]
        %v1027 = vld [vmem:[#allocation2 + $0x90] sm:$0xff]
        %v1028 = vld [vmem:[#allocation2 + $0x98] sm:$0xff]
        %v1029 = vrot.slane %v1009, 7
        %v1030 = vrot.slane %v1010, 7
        %v1031 = vrot.slane %v1011, 7
        %v1032 = vrot.slane %v1012, 7
        %v1033 = vrot.slane %v1013, 7
        %v1034 = vrot.slane %v1014, 7
        %v1035 = vrot.slane %v1015, 7
        %v1036 = vrot.slane %v1016, 7
        %v1037 = vrot.slane %v1017, 7
        %v1038 = vrot.slane %v1018, 7
        %v1039 = vrot.slane %v1019, 7
        %v1040 = vrot.slane %v1020, 7
        %v1041 = vrot.slane %v1021, 7
        %v1042 = vrot.slane %v1022, 7
        %v1043 = vrot.slane %v1023, 7
        %v1044 = vrot.slane %v1024, 7
        %v1045 = vrot.slane %v1025, 7
        %v1046 = vrot.slane %v1026, 7
        %v1047 = vrot.slane %v1027, 7
        %v1048 = vrot.slane %v1028, 7
        %v1049 = vlaneseq
        %v1050 = vshrl.u32 %v1049, 7
        %vm1051 = vcmp.lt.s32.totalorder %v1050, 1
        %v1052 = vsel %vm1051, %v1047, %v1048
        %v1053 = vsel %vm1051, %v1046, %v1047
        %v1054 = vsel %vm1051, %v1045, %v1046
        %v1055 = vsel %vm1051, %v1044, %v1045
        %v1056 = vsel %vm1051, %v1043, %v1044
        %v1057 = vsel %vm1051, %v1042, %v1043
        %v1058 = vsel %vm1051, %v1041, %v1042
        %v1059 = vsel %vm1051, %v1040, %v1041
        %v1060 = vsel %vm1051, %v1039, %v1040
        %v1061 = vsel %vm1051, %v1038, %v1039
        %v1062 = vsel %vm1051, %v1037, %v1038
        %v1063 = vsel %vm1051, %v1036, %v1037
        %v1064 = vsel %vm1051, %v1035, %v1036
        %v1065 = vsel %vm1051, %v1034, %v1035
        %v1066 = vsel %vm1051, %v1033, %v1034
        %v1067 = vsel %vm1051, %v1032, %v1033
        %v1068 = vsel %vm1051, %v1031, %v1032
        %v1069 = vsel %vm1051, %v1030, %v1031
        %v1070 = vsel %vm1051, %v1029, %v1030
        %v1071 = vsel %vm1051, %v1048, %v1029
        %vm1072 = vcmp.eq.s32.totalorder %v989, 0
        %vm1073 = vcmp.eq.s32.totalorder %v990, 0
        %vm1074 = vcmp.eq.s32.totalorder %v991, 0
        %vm1075 = vcmp.eq.s32.totalorder %v992, 0
        %vm1076 = vcmp.eq.s32.totalorder %v993, 0
        %vm1077 = vcmp.eq.s32.totalorder %v994, 0
        %vm1078 = vcmp.eq.s32.totalorder %v995, 0
        %vm1079 = vcmp.eq.s32.totalorder %v996, 0
        %vm1080 = vcmp.eq.s32.totalorder %v997, 0
        %vm1081 = vcmp.eq.s32.totalorder %v998, 0
        %vm1082 = vcmp.eq.s32.totalorder %v999, 0
        %vm1083 = vcmp.eq.s32.totalorder %v1000, 0
        %vm1084 = vcmp.eq.s32.totalorder %v1001, 0
        %vm1085 = vcmp.eq.s32.totalorder %v1002, 0
        %vm1086 = vcmp.eq.s32.totalorder %v1003, 0
        %vm1087 = vcmp.eq.s32.totalorder %v1004, 0
        %vm1088 = vcmp.eq.s32.totalorder %v1005, 0
        %vm1089 = vcmp.eq.s32.totalorder %v1006, 0
        %vm1090 = vcmp.eq.s32.totalorder %v1007, 0
        %vm1091 = vcmp.eq.s32.totalorder %v1008, 0
        %v1092 = vsel %vm1072, 1, 0
        %v1093 = vsel %vm1073, 1, 0
        %v1094 = vsel %vm1074, 1, 0
        %v1095 = vsel %vm1075, 1, 0
        %v1096 = vsel %vm1076, 1, 0
        %v1097 = vsel %vm1077, 1, 0
        %v1098 = vsel %vm1078, 1, 0
        %v1099 = vsel %vm1079, 1, 0
        %v1100 = vsel %vm1080, 1, 0
        %v1101 = vsel %vm1081, 1, 0
        %v1102 = vsel %vm1082, 1, 0
        %v1103 = vsel %vm1083, 1, 0
        %v1104 = vsel %vm1084, 1, 0
        %v1105 = vsel %vm1085, 1, 0
        %v1106 = vsel %vm1086, 1, 0
        %v1107 = vsel %vm1087, 1, 0
        %v1108 = vsel %vm1088, 1, 0
        %v1109 = vsel %vm1089, 1, 0
        %v1110 = vsel %vm1090, 1, 0
        %v1111 = vsel %vm1091, 1, 0
        %1112 = vset.pattern.permute.xlu0 0
        %1113 = vperm.xlu0 %1112, %v1092
        %v1114 = vpop.permute.xlu0 %1113
        %1115 = vset.pattern.permute.xlu0 0
        %1116 = vperm.xlu0 %1115, %v1093
        %v1117 = vpop.permute.xlu0 %1116
        %1118 = vset.pattern.permute.xlu0 0
        %1119 = vperm.xlu0 %1118, %v1094
        %v1120 = vpop.permute.xlu0 %1119
        %1121 = vset.pattern.permute.xlu0 0
        %1122 = vperm.xlu0 %1121, %v1095
        %v1123 = vpop.permute.xlu0 %1122
        %1124 = vset.pattern.permute.xlu0 0
        %1125 = vperm.xlu0 %1124, %v1096
        %v1126 = vpop.permute.xlu0 %1125
        %1127 = vset.pattern.permute.xlu0 0
        %1128 = vperm.xlu0 %1127, %v1097
        %v1129 = vpop.permute.xlu0 %1128
        %1130 = vset.pattern.permute.xlu0 0
        %1131 = vperm.xlu0 %1130, %v1098
        %v1132 = vpop.permute.xlu0 %1131
        %1133 = vset.pattern.permute.xlu0 0
        %1134 = vperm.xlu0 %1133, %v1099
        %v1135 = vpop.permute.xlu0 %1134
        %1136 = vset.pattern.permute.xlu0 0
        %1137 = vperm.xlu0 %1136, %v1100
        %v1138 = vpop.permute.xlu0 %1137
        %1139 = vset.pattern.permute.xlu0 0
        %1140 = vperm.xlu0 %1139, %v1101
        %v1141 = vpop.permute.xlu0 %1140
        %1142 = vset.pattern.permute.xlu0 0
        %1143 = vperm.xlu0 %1142, %v1102
        %v1144 = vpop.permute.xlu0 %1143
        %1145 = vset.pattern.permute.xlu0 0
        %1146 = vperm.xlu0 %1145, %v1103
        %v1147 = vpop.permute.xlu0 %1146
        %1148 = vset.pattern.permute.xlu0 0
        %1149 = vperm.xlu0 %1148, %v1104
        %v1150 = vpop.permute.xlu0 %1149
        %1151 = vset.pattern.permute.xlu0 0
        %1152 = vperm.xlu0 %1151, %v1105
        %v1153 = vpop.permute.xlu0 %1152
        %1154 = vset.pattern.permute.xlu0 0
        %1155 = vperm.xlu0 %1154, %v1106
        %v1156 = vpop.permute.xlu0 %1155
        %1157 = vset.pattern.permute.xlu0 0
        %1158 = vperm.xlu0 %1157, %v1107
        %v1159 = vpop.permute.xlu0 %1158
        %1160 = vset.pattern.permute.xlu0 0
        %1161 = vperm.xlu0 %1160, %v1108
        %v1162 = vpop.permute.xlu0 %1161
        %1163 = vset.pattern.permute.xlu0 0
        %1164 = vperm.xlu0 %1163, %v1109
        %v1165 = vpop.permute.xlu0 %1164
        %1166 = vset.pattern.permute.xlu0 0
        %1167 = vperm.xlu0 %1166, %v1110
        %v1168 = vpop.permute.xlu0 %1167
        %1169 = vset.pattern.permute.xlu0 0
        %1170 = vperm.xlu0 %1169, %v1111
        %v1171 = vpop.permute.xlu0 %1170
        %vm1172 = vcmp.eq.s32.totalorder %v1114, 1
        %vm1173 = vcmp.eq.s32.totalorder %v1117, 1
        %vm1174 = vcmp.eq.s32.totalorder %v1120, 1
        %vm1175 = vcmp.eq.s32.totalorder %v1123, 1
        %vm1176 = vcmp.eq.s32.totalorder %v1126, 1
        %vm1177 = vcmp.eq.s32.totalorder %v1129, 1
        %vm1178 = vcmp.eq.s32.totalorder %v1132, 1
        %vm1179 = vcmp.eq.s32.totalorder %v1135, 1
        %vm1180 = vcmp.eq.s32.totalorder %v1138, 1
        %vm1181 = vcmp.eq.s32.totalorder %v1141, 1
        %vm1182 = vcmp.eq.s32.totalorder %v1144, 1
        %vm1183 = vcmp.eq.s32.totalorder %v1147, 1
        %vm1184 = vcmp.eq.s32.totalorder %v1150, 1
        %vm1185 = vcmp.eq.s32.totalorder %v1153, 1
        %vm1186 = vcmp.eq.s32.totalorder %v1156, 1
        %vm1187 = vcmp.eq.s32.totalorder %v1159, 1
        %vm1188 = vcmp.eq.s32.totalorder %v1162, 1
        %vm1189 = vcmp.eq.s32.totalorder %v1165, 1
        %vm1190 = vcmp.eq.s32.totalorder %v1168, 1
        %vm1191 = vcmp.eq.s32.totalorder %v1171, 1
        %v1192 = vsel %vm1172, 0.0, %v1071
        %v1193 = vsel %vm1173, 0.0, %v1070
        %v1194 = vsel %vm1174, 0.0, %v1069
        %v1195 = vsel %vm1175, 0.0, %v1068
        %v1196 = vsel %vm1176, 0.0, %v1067
        %v1197 = vsel %vm1177, 0.0, %v1066
        %v1198 = vsel %vm1178, 0.0, %v1065
        %v1199 = vsel %vm1179, 0.0, %v1064
        %v1200 = vsel %vm1180, 0.0, %v1063
        %v1201 = vsel %vm1181, 0.0, %v1062
        %v1202 = vsel %vm1182, 0.0, %v1061
        %v1203 = vsel %vm1183, 0.0, %v1060
        %v1204 = vsel %vm1184, 0.0, %v1059
        %v1205 = vsel %vm1185, 0.0, %v1058
        %v1206 = vsel %vm1186, 0.0, %v1057
        %v1207 = vsel %vm1187, 0.0, %v1056
        %v1208 = vsel %vm1188, 0.0, %v1055
        %v1209 = vsel %vm1189, 0.0, %v1054
        %v1210 = vsel %vm1190, 0.0, %v1053
        %v1211 = vsel %vm1191, 0.0, %v1052
        %v1212 = vld [vmem:[#allocation9] sm:$0xff]
        %v1213 = vld [vmem:[#allocation9 + $0x8] sm:$0xff]
        %v1214 = vld [vmem:[#allocation9 + $0x10] sm:$0xff]
        %v1215 = vld [vmem:[#allocation9 + $0x18] sm:$0xff]
        %v1216 = vld [vmem:[#allocation9 + $0x20] sm:$0xff]
        %v1217 = vld [vmem:[#allocation9 + $0x28] sm:$0xff]
        %v1218 = vld [vmem:[#allocation9 + $0x30] sm:$0xff]
        %v1219 = vld [vmem:[#allocation9 + $0x38] sm:$0xff]
        %v1220 = vld [vmem:[#allocation9 + $0x40] sm:$0xff]
        %v1221 = vld [vmem:[#allocation9 + $0x48] sm:$0xff]
        %v1222 = vld [vmem:[#allocation9 + $0x50] sm:$0xff]
        %v1223 = vld [vmem:[#allocation9 + $0x58] sm:$0xff]
        %v1224 = vld [vmem:[#allocation9 + $0x60] sm:$0xff]
        %v1225 = vld [vmem:[#allocation9 + $0x68] sm:$0xff]
        %v1226 = vld [vmem:[#allocation9 + $0x70] sm:$0xff]
        %v1227 = vld [vmem:[#allocation9 + $0x78] sm:$0xff]
        %s1228 = scalar_lea.vmem [#allocation9], 384
        %v1229 = vld [vmem:[%s1228] sm:$0xff]
        %v1230 = vld [vmem:[%s1228 + $0x8] sm:$0xff]
        %v1231 = vld [vmem:[%s1228 + $0x10] sm:$0xff]
        %v1232 = vld [vmem:[%s1228 + $0x18] sm:$0xff]
        %v1233 = vld [vmem:[%s1228 + $0x20] sm:$0xff]
        %v1234 = vld [vmem:[%s1228 + $0x28] sm:$0xff]
        %v1235 = vld [vmem:[%s1228 + $0x30] sm:$0xff]
        %v1236 = vld [vmem:[%s1228 + $0x38] sm:$0xff]
        %v1237 = vld [vmem:[%s1228 + $0x40] sm:$0xff]
        %v1238 = vld [vmem:[%s1228 + $0x48] sm:$0xff]
        %v1239 = vld [vmem:[%s1228 + $0x50] sm:$0xff]
        %v1240 = vld [vmem:[%s1228 + $0x58] sm:$0xff]
        %v1241 = vld [vmem:[%s1228 + $0x60] sm:$0xff]
        %v1242 = vld [vmem:[%s1228 + $0x68] sm:$0xff]
        %v1243 = vld [vmem:[%s1228 + $0x70] sm:$0xff]
        %v1244 = vld [vmem:[%s1228 + $0x78] sm:$0xff]
        %1245 = vmatpush.msra.mxu0 %v1244
        %1246 = vmatpush.msra.mxu0 %v1243
        %1247 = vmatpush.msra.mxu0 %v1242
        %1248 = vmatpush.msra.mxu0 %v1241
        %1249 = vmatpush.msra.mxu0 %v1240
        %1250 = vmatpush.msra.mxu0 %v1239
        %1251 = vmatpush.msra.mxu0 %v1238
        %1252 = vmatpush.msra.mxu0 %v1237
        %1253 = vmatpush.msra.mxu0 %v1236
        %1254 = vmatpush.msra.mxu0 %v1235
        %1255 = vmatpush.msra.mxu0 %v1234
        %1256 = vmatpush.msra.mxu0 %v1233
        %1257 = vmatpush.msra.mxu0 %v1232
        %1258 = vmatpush.msra.mxu0 %v1231
        %1259 = vmatpush.msra.mxu0 %v1230
        %1260 = vmatpush.msra.mxu0 %v1229
        %1261 = vmatmul.f32.gmra.mxu0 %v1194
        %v1262 = vpop.f32.mrf.mxu0
        %v1263 = vadd.f32 0.0, %v1262
        %1264 = vmatmul.f32.gmra.mxu0 %v1195
        %v1265 = vpop.f32.mrf.mxu0
        %v1266 = vadd.f32 0.0, %v1265
        %1267 = vmatmul.f32.gmra.mxu0 %v1196
        %v1268 = vpop.f32.mrf.mxu0
        %v1269 = vadd.f32 0.0, %v1268
        %1270 = vmatmul.f32.gmra.mxu0 %v1197
        %v1271 = vpop.f32.mrf.mxu0
        %v1272 = vadd.f32 0.0, %v1271
        %1273 = vmatmul.f32.gmra.mxu0 %v1198
        %v1274 = vpop.f32.mrf.mxu0
        %v1275 = vadd.f32 0.0, %v1274
        %1276 = vmatmul.f32.gmra.mxu0 %v1199
        %v1277 = vpop.f32.mrf.mxu0
        %v1278 = vadd.f32 0.0, %v1277
        %1279 = vmatmul.f32.gmra.mxu0 %v1200
        %v1280 = vpop.f32.mrf.mxu0
        %v1281 = vadd.f32 0.0, %v1280
        %1282 = vmatmul.f32.gmra.mxu0 %v1201
        %v1283 = vpop.f32.mrf.mxu0
        %v1284 = vadd.f32 0.0, %v1283
        %1285 = vmatmul.f32.gmra.mxu0 %v1202
        %v1286 = vpop.f32.mrf.mxu0
        %v1287 = vadd.f32 0.0, %v1286
        %1288 = vmatmul.f32.gmra.mxu0 %v1203
        %v1289 = vpop.f32.mrf.mxu0
        %v1290 = vadd.f32 0.0, %v1289
        %1291 = vmatmul.f32.gmra.mxu0 %v1204
        %v1292 = vpop.f32.mrf.mxu0
        %v1293 = vadd.f32 0.0, %v1292
        %1294 = vmatmul.f32.gmra.mxu0 %v1205
        %v1295 = vpop.f32.mrf.mxu0
        %v1296 = vadd.f32 0.0, %v1295
        %1297 = vmatmul.f32.gmra.mxu0 %v1206
        %v1298 = vpop.f32.mrf.mxu0
        %v1299 = vadd.f32 0.0, %v1298
        %1300 = vmatmul.f32.gmra.mxu0 %v1207
        %v1301 = vpop.f32.mrf.mxu0
        %v1302 = vadd.f32 0.0, %v1301
        %1303 = vmatmul.f32.gmra.mxu0 %v1208
        %v1304 = vpop.f32.mrf.mxu0
        %v1305 = vadd.f32 0.0, %v1304
        %1306 = vmatmul.f32.gmra.mxu0 %v1209
        %v1307 = vpop.f32.mrf.mxu0
        %v1308 = vadd.f32 0.0, %v1307
        %1309 = vdwg.mxu0
        %1310 = vmatpush.msra.mxu0 %v1227
        %1311 = vmatpush.msra.mxu0 %v1226
        %1312 = vmatpush.msra.mxu0 %v1225
        %1313 = vmatpush.msra.mxu0 %v1224
        %1314 = vmatpush.msra.mxu0 %v1223
        %1315 = vmatpush.msra.mxu0 %v1222
        %1316 = vmatpush.msra.mxu0 %v1221
        %1317 = vmatpush.msra.mxu0 %v1220
        %1318 = vmatpush.msra.mxu0 %v1219
        %1319 = vmatpush.msra.mxu0 %v1218
        %1320 = vmatpush.msra.mxu0 %v1217
        %1321 = vmatpush.msra.mxu0 %v1216
        %1322 = vmatpush.msra.mxu0 %v1215
        %1323 = vmatpush.msra.mxu0 %v1214
        %1324 = vmatpush.msra.mxu0 %v1213
        %1325 = vmatpush.msra.mxu0 %v1212
        %1326 = vmatmul.f32.gmra.mxu0 %v1192
        %v1327 = vpop.f32.mrf.mxu0
        %v1328 = vadd.f32 %v1263, %v1327
        %1329 = vmatmul.f32.gmra.mxu0 %v1193
        %v1330 = vpop.f32.mrf.mxu0
        %v1331 = vadd.f32 %v1266, %v1330
        %1332 = vmatmul.f32.gmra.mxu0 %v1194
        %v1333 = vpop.f32.mrf.mxu0
        %v1334 = vadd.f32 %v1269, %v1333
        %1335 = vmatmul.f32.gmra.mxu0 %v1195
        %v1336 = vpop.f32.mrf.mxu0
        %v1337 = vadd.f32 %v1272, %v1336
        %1338 = vmatmul.f32.gmra.mxu0 %v1196
        %v1339 = vpop.f32.mrf.mxu0
        %v1340 = vadd.f32 %v1275, %v1339
        %1341 = vmatmul.f32.gmra.mxu0 %v1197
        %v1342 = vpop.f32.mrf.mxu0
        %v1343 = vadd.f32 %v1278, %v1342
        %1344 = vmatmul.f32.gmra.mxu0 %v1198
        %v1345 = vpop.f32.mrf.mxu0
        %v1346 = vadd.f32 %v1281, %v1345
        %1347 = vmatmul.f32.gmra.mxu0 %v1199
        %v1348 = vpop.f32.mrf.mxu0
        %v1349 = vadd.f32 %v1284, %v1348
        %1350 = vmatmul.f32.gmra.mxu0 %v1200
        %v1351 = vpop.f32.mrf.mxu0
        %v1352 = vadd.f32 %v1287, %v1351
        %1353 = vmatmul.f32.gmra.mxu0 %v1201
        %v1354 = vpop.f32.mrf.mxu0
        %v1355 = vadd.f32 %v1290, %v1354
        %1356 = vmatmul.f32.gmra.mxu0 %v1202
        %v1357 = vpop.f32.mrf.mxu0
        %v1358 = vadd.f32 %v1293, %v1357
        %1359 = vmatmul.f32.gmra.mxu0 %v1203
        %v1360 = vpop.f32.mrf.mxu0
        %v1361 = vadd.f32 %v1296, %v1360
        %1362 = vmatmul.f32.gmra.mxu0 %v1204
        %v1363 = vpop.f32.mrf.mxu0
        %v1364 = vadd.f32 %v1299, %v1363
        %1365 = vmatmul.f32.gmra.mxu0 %v1205
        %v1366 = vpop.f32.mrf.mxu0
        %v1367 = vadd.f32 %v1302, %v1366
        %1368 = vmatmul.f32.gmra.mxu0 %v1206
        %v1369 = vpop.f32.mrf.mxu0
        %v1370 = vadd.f32 %v1305, %v1369
        %1371 = vmatmul.f32.gmra.mxu0 %v1207
        %v1372 = vpop.f32.mrf.mxu0
        %v1373 = vadd.f32 %v1308, %v1372
        %1374 = vdwg.mxu0
        %s1375 = scalar_lea.vmem [#allocation9], 768
        %v1376 = vld [vmem:[%s1375] sm:$0xff]
        %v1377 = vld [vmem:[%s1375 + $0x8] sm:$0xff]
        %v1378 = vld [vmem:[%s1375 + $0x10] sm:$0xff]
        %v1379 = vld [vmem:[%s1375 + $0x18] sm:$0xff]
        %v1380 = vld [vmem:[%s1375 + $0x20] sm:$0xff]
        %v1381 = vld [vmem:[%s1375 + $0x28] sm:$0xff]
        %v1382 = vld [vmem:[%s1375 + $0x30] sm:$0xff]
        %v1383 = vld [vmem:[%s1375 + $0x38] sm:$0xff]
        %v1384 = vld [vmem:[%s1375 + $0x40] sm:$0xff]
        %v1385 = vld [vmem:[%s1375 + $0x48] sm:$0xff]
        %v1386 = vld [vmem:[%s1375 + $0x50] sm:$0xff]
        %v1387 = vld [vmem:[%s1375 + $0x58] sm:$0xff]
        %v1388 = vld [vmem:[%s1375 + $0x60] sm:$0xff]
        %v1389 = vld [vmem:[%s1375 + $0x68] sm:$0xff]
        %v1390 = vld [vmem:[%s1375 + $0x70] sm:$0xff]
        %v1391 = vld [vmem:[%s1375 + $0x78] sm:$0xff]
        %1392 = vmatpush.msra.mxu0 %v1391
        %1393 = vmatpush.msra.mxu0 %v1390
        %1394 = vmatpush.msra.mxu0 %v1389
        %1395 = vmatpush.msra.mxu0 %v1388
        %1396 = vmatpush.msra.mxu0 %v1387
        %1397 = vmatpush.msra.mxu0 %v1386
        %1398 = vmatpush.msra.mxu0 %v1385
        %1399 = vmatpush.msra.mxu0 %v1384
        %1400 = vmatpush.msra.mxu0 %v1383
        %1401 = vmatpush.msra.mxu0 %v1382
        %1402 = vmatpush.msra.mxu0 %v1381
        %1403 = vmatpush.msra.mxu0 %v1380
        %1404 = vmatpush.msra.mxu0 %v1379
        %1405 = vmatpush.msra.mxu0 %v1378
        %1406 = vmatpush.msra.mxu0 %v1377
        %1407 = vmatpush.msra.mxu0 %v1376
        %1408 = vmatmul.f32.gmra.mxu0 %v1196
        %v1409 = vpop.f32.mrf.mxu0
        %v1410 = vadd.f32 0.0, %v1409
        %1411 = vmatmul.f32.gmra.mxu0 %v1197
        %v1412 = vpop.f32.mrf.mxu0
        %v1413 = vadd.f32 0.0, %v1412
        %1414 = vmatmul.f32.gmra.mxu0 %v1198
        %v1415 = vpop.f32.mrf.mxu0
        %v1416 = vadd.f32 0.0, %v1415
        %1417 = vmatmul.f32.gmra.mxu0 %v1199
        %v1418 = vpop.f32.mrf.mxu0
        %v1419 = vadd.f32 0.0, %v1418
        %1420 = vmatmul.f32.gmra.mxu0 %v1200
        %v1421 = vpop.f32.mrf.mxu0
        %v1422 = vadd.f32 0.0, %v1421
        %1423 = vmatmul.f32.gmra.mxu0 %v1201
        %v1424 = vpop.f32.mrf.mxu0
        %v1425 = vadd.f32 0.0, %v1424
        %1426 = vmatmul.f32.gmra.mxu0 %v1202
        %v1427 = vpop.f32.mrf.mxu0
        %v1428 = vadd.f32 0.0, %v1427
        %1429 = vmatmul.f32.gmra.mxu0 %v1203
        %v1430 = vpop.f32.mrf.mxu0
        %v1431 = vadd.f32 0.0, %v1430
        %1432 = vmatmul.f32.gmra.mxu0 %v1204
        %v1433 = vpop.f32.mrf.mxu0
        %v1434 = vadd.f32 0.0, %v1433
        %1435 = vmatmul.f32.gmra.mxu0 %v1205
        %v1436 = vpop.f32.mrf.mxu0
        %v1437 = vadd.f32 0.0, %v1436
        %1438 = vmatmul.f32.gmra.mxu0 %v1206
        %v1439 = vpop.f32.mrf.mxu0
        %v1440 = vadd.f32 0.0, %v1439
        %1441 = vmatmul.f32.gmra.mxu0 %v1207
        %v1442 = vpop.f32.mrf.mxu0
        %v1443 = vadd.f32 0.0, %v1442
        %1444 = vmatmul.f32.gmra.mxu0 %v1208
        %v1445 = vpop.f32.mrf.mxu0
        %v1446 = vadd.f32 0.0, %v1445
        %1447 = vmatmul.f32.gmra.mxu0 %v1209
        %v1448 = vpop.f32.mrf.mxu0
        %v1449 = vadd.f32 0.0, %v1448
        %1450 = vmatmul.f32.gmra.mxu0 %v1210
        %v1451 = vpop.f32.mrf.mxu0
        %v1452 = vadd.f32 0.0, %v1451
        %1453 = vmatmul.f32.gmra.mxu0 %v1211
        %v1454 = vpop.f32.mrf.mxu0
        %v1455 = vadd.f32 0.0, %v1454
        %1456 = vdwg.mxu0
        %v1457 = vadd.f32 %v1328, %v1410
        %v1458 = vadd.f32 %v1331, %v1413
        %v1459 = vadd.f32 %v1334, %v1416
        %v1460 = vadd.f32 %v1337, %v1419
        %v1461 = vadd.f32 %v1340, %v1422
        %v1462 = vadd.f32 %v1343, %v1425
        %v1463 = vadd.f32 %v1346, %v1428
        %v1464 = vadd.f32 %v1349, %v1431
        %v1465 = vadd.f32 %v1352, %v1434
        %v1466 = vadd.f32 %v1355, %v1437
        %v1467 = vadd.f32 %v1358, %v1440
        %v1468 = vadd.f32 %v1361, %v1443
        %v1469 = vadd.f32 %v1364, %v1446
        %v1470 = vadd.f32 %v1367, %v1449
        %v1471 = vadd.f32 %v1370, %v1452
        %v1472 = vadd.f32 %v1373, %v1455
        %s1473 = scalar_lea.vmem [#allocation9], 128
        %v1474 = vld [vmem:[%s1473] sm:$0xff]
        %v1475 = vld [vmem:[%s1473 + $0x8] sm:$0xff]
        %v1476 = vld [vmem:[%s1473 + $0x10] sm:$0xff]
        %v1477 = vld [vmem:[%s1473 + $0x18] sm:$0xff]
        %v1478 = vld [vmem:[%s1473 + $0x20] sm:$0xff]
        %v1479 = vld [vmem:[%s1473 + $0x28] sm:$0xff]
        %v1480 = vld [vmem:[%s1473 + $0x30] sm:$0xff]
        %v1481 = vld [vmem:[%s1473 + $0x38] sm:$0xff]
        %v1482 = vld [vmem:[%s1473 + $0x40] sm:$0xff]
        %v1483 = vld [vmem:[%s1473 + $0x48] sm:$0xff]
        %v1484 = vld [vmem:[%s1473 + $0x50] sm:$0xff]
        %v1485 = vld [vmem:[%s1473 + $0x58] sm:$0xff]
        %v1486 = vld [vmem:[%s1473 + $0x60] sm:$0xff]
        %v1487 = vld [vmem:[%s1473 + $0x68] sm:$0xff]
        %v1488 = vld [vmem:[%s1473 + $0x70] sm:$0xff]
        %v1489 = vld [vmem:[%s1473 + $0x78] sm:$0xff]
        %1490 = vmatpush.msra.mxu0 %v1489
        %1491 = vmatpush.msra.mxu0 %v1488
        %1492 = vmatpush.msra.mxu0 %v1487
        %1493 = vmatpush.msra.mxu0 %v1486
        %1494 = vmatpush.msra.mxu0 %v1485
        %1495 = vmatpush.msra.mxu0 %v1484
        %1496 = vmatpush.msra.mxu0 %v1483
        %1497 = vmatpush.msra.mxu0 %v1482
        %1498 = vmatpush.msra.mxu0 %v1481
        %1499 = vmatpush.msra.mxu0 %v1480
        %1500 = vmatpush.msra.mxu0 %v1479
        %1501 = vmatpush.msra.mxu0 %v1478
        %1502 = vmatpush.msra.mxu0 %v1477
        %1503 = vmatpush.msra.mxu0 %v1476
        %1504 = vmatpush.msra.mxu0 %v1475
        %1505 = vmatpush.msra.mxu0 %v1474
        %1506 = vmatmul.f32.gmra.mxu0 %v1009
        %v1507 = vpop.f32.mrf.mxu0
        %v1508 = vadd.f32 0.0, %v1507
        %1509 = vmatmul.f32.gmra.mxu0 %v1010
        %v1510 = vpop.f32.mrf.mxu0
        %v1511 = vadd.f32 0.0, %v1510
        %1512 = vmatmul.f32.gmra.mxu0 %v1011
        %v1513 = vpop.f32.mrf.mxu0
        %v1514 = vadd.f32 0.0, %v1513
        %1515 = vmatmul.f32.gmra.mxu0 %v1012
        %v1516 = vpop.f32.mrf.mxu0
        %v1517 = vadd.f32 0.0, %v1516
        %1518 = vmatmul.f32.gmra.mxu0 %v1013
        %v1519 = vpop.f32.mrf.mxu0
        %v1520 = vadd.f32 0.0, %v1519
        %1521 = vmatmul.f32.gmra.mxu0 %v1014
        %v1522 = vpop.f32.mrf.mxu0
        %v1523 = vadd.f32 0.0, %v1522
        %1524 = vmatmul.f32.gmra.mxu0 %v1015
        %v1525 = vpop.f32.mrf.mxu0
        %v1526 = vadd.f32 0.0, %v1525
        %1527 = vmatmul.f32.gmra.mxu0 %v1016
        %v1528 = vpop.f32.mrf.mxu0
        %v1529 = vadd.f32 0.0, %v1528
        %1530 = vmatmul.f32.gmra.mxu0 %v1017
        %v1531 = vpop.f32.mrf.mxu0
        %v1532 = vadd.f32 0.0, %v1531
        %1533 = vmatmul.f32.gmra.mxu0 %v1018
        %v1534 = vpop.f32.mrf.mxu0
        %v1535 = vadd.f32 0.0, %v1534
        %1536 = vmatmul.f32.gmra.mxu0 %v1019
        %v1537 = vpop.f32.mrf.mxu0
        %v1538 = vadd.f32 0.0, %v1537
        %1539 = vmatmul.f32.gmra.mxu0 %v1020
        %v1540 = vpop.f32.mrf.mxu0
        %v1541 = vadd.f32 0.0, %v1540
        %1542 = vmatmul.f32.gmra.mxu0 %v1021
        %v1543 = vpop.f32.mrf.mxu0
        %v1544 = vadd.f32 0.0, %v1543
        %1545 = vmatmul.f32.gmra.mxu0 %v1022
        %v1546 = vpop.f32.mrf.mxu0
        %v1547 = vadd.f32 0.0, %v1546
        %1548 = vmatmul.f32.gmra.mxu0 %v1023
        %v1549 = vpop.f32.mrf.mxu0
        %v1550 = vadd.f32 0.0, %v1549
        %1551 = vmatmul.f32.gmra.mxu0 %v1024
        %v1552 = vpop.f32.mrf.mxu0
        %v1553 = vadd.f32 0.0, %v1552
        %1554 = vdwg.mxu0
        %v1555 = vadd.f32 %v1457, %v1508
        %v1556 = vadd.f32 %v1458, %v1511
        %v1557 = vadd.f32 %v1459, %v1514
        %v1558 = vadd.f32 %v1460, %v1517
        %v1559 = vadd.f32 %v1461, %v1520
        %v1560 = vadd.f32 %v1462, %v1523
        %v1561 = vadd.f32 %v1463, %v1526
        %v1562 = vadd.f32 %v1464, %v1529
        %v1563 = vadd.f32 %v1465, %v1532
        %v1564 = vadd.f32 %v1466, %v1535
        %v1565 = vadd.f32 %v1467, %v1538
        %v1566 = vadd.f32 %v1468, %v1541
        %v1567 = vadd.f32 %v1469, %v1544
        %v1568 = vadd.f32 %v1470, %v1547
        %v1569 = vadd.f32 %v1471, %v1550
        %v1570 = vadd.f32 %v1472, %v1553
        %s1571 = scalar_lea.vmem [#allocation9], 512
        %v1572 = vld [vmem:[%s1571] sm:$0xff]
        %v1573 = vld [vmem:[%s1571 + $0x8] sm:$0xff]
        %v1574 = vld [vmem:[%s1571 + $0x10] sm:$0xff]
        %v1575 = vld [vmem:[%s1571 + $0x18] sm:$0xff]
        %v1576 = vld [vmem:[%s1571 + $0x20] sm:$0xff]
        %v1577 = vld [vmem:[%s1571 + $0x28] sm:$0xff]
        %v1578 = vld [vmem:[%s1571 + $0x30] sm:$0xff]
        %v1579 = vld [vmem:[%s1571 + $0x38] sm:$0xff]
        %v1580 = vld [vmem:[%s1571 + $0x40] sm:$0xff]
        %v1581 = vld [vmem:[%s1571 + $0x48] sm:$0xff]
        %v1582 = vld [vmem:[%s1571 + $0x50] sm:$0xff]
        %v1583 = vld [vmem:[%s1571 + $0x58] sm:$0xff]
        %v1584 = vld [vmem:[%s1571 + $0x60] sm:$0xff]
        %v1585 = vld [vmem:[%s1571 + $0x68] sm:$0xff]
        %v1586 = vld [vmem:[%s1571 + $0x70] sm:$0xff]
        %v1587 = vld [vmem:[%s1571 + $0x78] sm:$0xff]
        %1588 = vmatpush.msra.mxu0 %v1587
        %1589 = vmatpush.msra.mxu0 %v1586
        %1590 = vmatpush.msra.mxu0 %v1585
        %1591 = vmatpush.msra.mxu0 %v1584
        %1592 = vmatpush.msra.mxu0 %v1583
        %1593 = vmatpush.msra.mxu0 %v1582
        %1594 = vmatpush.msra.mxu0 %v1581
        %1595 = vmatpush.msra.mxu0 %v1580
        %1596 = vmatpush.msra.mxu0 %v1579
        %1597 = vmatpush.msra.mxu0 %v1578
        %1598 = vmatpush.msra.mxu0 %v1577
        %1599 = vmatpush.msra.mxu0 %v1576
        %1600 = vmatpush.msra.mxu0 %v1575
        %1601 = vmatpush.msra.mxu0 %v1574
        %1602 = vmatpush.msra.mxu0 %v1573
        %1603 = vmatpush.msra.mxu0 %v1572
        %1604 = vmatmul.f32.gmra.mxu0 %v1011
        %v1605 = vpop.f32.mrf.mxu0
        %v1606 = vadd.f32 0.0, %v1605
        %1607 = vmatmul.f32.gmra.mxu0 %v1012
        %v1608 = vpop.f32.mrf.mxu0
        %v1609 = vadd.f32 0.0, %v1608
        %1610 = vmatmul.f32.gmra.mxu0 %v1013
        %v1611 = vpop.f32.mrf.mxu0
        %v1612 = vadd.f32 0.0, %v1611
        %1613 = vmatmul.f32.gmra.mxu0 %v1014
        %v1614 = vpop.f32.mrf.mxu0
        %v1615 = vadd.f32 0.0, %v1614
        %1616 = vmatmul.f32.gmra.mxu0 %v1015
        %v1617 = vpop.f32.mrf.mxu0
        %v1618 = vadd.f32 0.0, %v1617
        %1619 = vmatmul.f32.gmra.mxu0 %v1016
        %v1620 = vpop.f32.mrf.mxu0
        %v1621 = vadd.f32 0.0, %v1620
        %1622 = vmatmul.f32.gmra.mxu0 %v1017
        %v1623 = vpop.f32.mrf.mxu0
        %v1624 = vadd.f32 0.0, %v1623
        %1625 = vmatmul.f32.gmra.mxu0 %v1018
        %v1626 = vpop.f32.mrf.mxu0
        %v1627 = vadd.f32 0.0, %v1626
        %1628 = vmatmul.f32.gmra.mxu0 %v1019
        %v1629 = vpop.f32.mrf.mxu0
        %v1630 = vadd.f32 0.0, %v1629
        %1631 = vmatmul.f32.gmra.mxu0 %v1020
        %v1632 = vpop.f32.mrf.mxu0
        %v1633 = vadd.f32 0.0, %v1632
        %1634 = vmatmul.f32.gmra.mxu0 %v1021
        %v1635 = vpop.f32.mrf.mxu0
        %v1636 = vadd.f32 0.0, %v1635
        %1637 = vmatmul.f32.gmra.mxu0 %v1022
        %v1638 = vpop.f32.mrf.mxu0
        %v1639 = vadd.f32 0.0, %v1638
        %1640 = vmatmul.f32.gmra.mxu0 %v1023
        %v1641 = vpop.f32.mrf.mxu0
        %v1642 = vadd.f32 0.0, %v1641
        %1643 = vmatmul.f32.gmra.mxu0 %v1024
        %v1644 = vpop.f32.mrf.mxu0
        %v1645 = vadd.f32 0.0, %v1644
        %1646 = vmatmul.f32.gmra.mxu0 %v1025
        %v1647 = vpop.f32.mrf.mxu0
        %v1648 = vadd.f32 0.0, %v1647
        %1649 = vmatmul.f32.gmra.mxu0 %v1026
        %v1650 = vpop.f32.mrf.mxu0
        %v1651 = vadd.f32 0.0, %v1650
        %1652 = vdwg.mxu0
        %v1653 = vadd.f32 %v1555, %v1606
        %v1654 = vadd.f32 %v1556, %v1609
        %v1655 = vadd.f32 %v1557, %v1612
        %v1656 = vadd.f32 %v1558, %v1615
        %v1657 = vadd.f32 %v1559, %v1618
        %v1658 = vadd.f32 %v1560, %v1621
        %v1659 = vadd.f32 %v1561, %v1624
        %v1660 = vadd.f32 %v1562, %v1627
        %v1661 = vadd.f32 %v1563, %v1630
        %v1662 = vadd.f32 %v1564, %v1633
        %v1663 = vadd.f32 %v1565, %v1636
        %v1664 = vadd.f32 %v1566, %v1639
        %v1665 = vadd.f32 %v1567, %v1642
        %v1666 = vadd.f32 %v1568, %v1645
        %v1667 = vadd.f32 %v1569, %v1648
        %v1668 = vadd.f32 %v1570, %v1651
        %s1669 = scalar_lea.vmem [#allocation9], 896
        %v1670 = vld [vmem:[%s1669] sm:$0xff]
        %v1671 = vld [vmem:[%s1669 + $0x8] sm:$0xff]
        %v1672 = vld [vmem:[%s1669 + $0x10] sm:$0xff]
        %v1673 = vld [vmem:[%s1669 + $0x18] sm:$0xff]
        %v1674 = vld [vmem:[%s1669 + $0x20] sm:$0xff]
        %v1675 = vld [vmem:[%s1669 + $0x28] sm:$0xff]
        %v1676 = vld [vmem:[%s1669 + $0x30] sm:$0xff]
        %v1677 = vld [vmem:[%s1669 + $0x38] sm:$0xff]
        %v1678 = vld [vmem:[%s1669 + $0x40] sm:$0xff]
        %v1679 = vld [vmem:[%s1669 + $0x48] sm:$0xff]
        %v1680 = vld [vmem:[%s1669 + $0x50] sm:$0xff]
        %v1681 = vld [vmem:[%s1669 + $0x58] sm:$0xff]
        %v1682 = vld [vmem:[%s1669 + $0x60] sm:$0xff]
        %v1683 = vld [vmem:[%s1669 + $0x68] sm:$0xff]
        %v1684 = vld [vmem:[%s1669 + $0x70] sm:$0xff]
        %v1685 = vld [vmem:[%s1669 + $0x78] sm:$0xff]
        %1686 = vmatpush.msra.mxu0 %v1685
        %1687 = vmatpush.msra.mxu0 %v1684
        %1688 = vmatpush.msra.mxu0 %v1683
        %1689 = vmatpush.msra.mxu0 %v1682
        %1690 = vmatpush.msra.mxu0 %v1681
        %1691 = vmatpush.msra.mxu0 %v1680
        %1692 = vmatpush.msra.mxu0 %v1679
        %1693 = vmatpush.msra.mxu0 %v1678
        %1694 = vmatpush.msra.mxu0 %v1677
        %1695 = vmatpush.msra.mxu0 %v1676
        %1696 = vmatpush.msra.mxu0 %v1675
        %1697 = vmatpush.msra.mxu0 %v1674
        %1698 = vmatpush.msra.mxu0 %v1673
        %1699 = vmatpush.msra.mxu0 %v1672
        %1700 = vmatpush.msra.mxu0 %v1671
        %1701 = vmatpush.msra.mxu0 %v1670
        %1702 = vmatmul.f32.gmra.mxu0 %v1013
        %v1703 = vpop.f32.mrf.mxu0
        %v1704 = vadd.f32 0.0, %v1703
        %1705 = vmatmul.f32.gmra.mxu0 %v1014
        %v1706 = vpop.f32.mrf.mxu0
        %v1707 = vadd.f32 0.0, %v1706
        %1708 = vmatmul.f32.gmra.mxu0 %v1015
        %v1709 = vpop.f32.mrf.mxu0
        %v1710 = vadd.f32 0.0, %v1709
        %1711 = vmatmul.f32.gmra.mxu0 %v1016
        %v1712 = vpop.f32.mrf.mxu0
        %v1713 = vadd.f32 0.0, %v1712
        %1714 = vmatmul.f32.gmra.mxu0 %v1017
        %v1715 = vpop.f32.mrf.mxu0
        %v1716 = vadd.f32 0.0, %v1715
        %1717 = vmatmul.f32.gmra.mxu0 %v1018
        %v1718 = vpop.f32.mrf.mxu0
        %v1719 = vadd.f32 0.0, %v1718
        %1720 = vmatmul.f32.gmra.mxu0 %v1019
        %v1721 = vpop.f32.mrf.mxu0
        %v1722 = vadd.f32 0.0, %v1721
        %1723 = vmatmul.f32.gmra.mxu0 %v1020
        %v1724 = vpop.f32.mrf.mxu0
        %v1725 = vadd.f32 0.0, %v1724
        %1726 = vmatmul.f32.gmra.mxu0 %v1021
        %v1727 = vpop.f32.mrf.mxu0
        %v1728 = vadd.f32 0.0, %v1727
        %1729 = vmatmul.f32.gmra.mxu0 %v1022
        %v1730 = vpop.f32.mrf.mxu0
        %v1731 = vadd.f32 0.0, %v1730
        %1732 = vmatmul.f32.gmra.mxu0 %v1023
        %v1733 = vpop.f32.mrf.mxu0
        %v1734 = vadd.f32 0.0, %v1733
        %1735 = vmatmul.f32.gmra.mxu0 %v1024
        %v1736 = vpop.f32.mrf.mxu0
        %v1737 = vadd.f32 0.0, %v1736
        %1738 = vmatmul.f32.gmra.mxu0 %v1025
        %v1739 = vpop.f32.mrf.mxu0
        %v1740 = vadd.f32 0.0, %v1739
        %1741 = vmatmul.f32.gmra.mxu0 %v1026
        %v1742 = vpop.f32.mrf.mxu0
        %v1743 = vadd.f32 0.0, %v1742
        %1744 = vmatmul.f32.gmra.mxu0 %v1027
        %v1745 = vpop.f32.mrf.mxu0
        %v1746 = vadd.f32 0.0, %v1745
        %1747 = vmatmul.f32.gmra.mxu0 %v1028
        %v1748 = vpop.f32.mrf.mxu0
        %v1749 = vadd.f32 0.0, %v1748
        %1750 = vdwg.mxu0
        %v1751 = vadd.f32 %v1653, %v1704
        %v1752 = vadd.f32 %v1654, %v1707
        %v1753 = vadd.f32 %v1655, %v1710
        %v1754 = vadd.f32 %v1656, %v1713
        %v1755 = vadd.f32 %v1657, %v1716
        %v1756 = vadd.f32 %v1658, %v1719
        %v1757 = vadd.f32 %v1659, %v1722
        %v1758 = vadd.f32 %v1660, %v1725
        %v1759 = vadd.f32 %v1661, %v1728
        %v1760 = vadd.f32 %v1662, %v1731
        %v1761 = vadd.f32 %v1663, %v1734
        %v1762 = vadd.f32 %v1664, %v1737
        %v1763 = vadd.f32 %v1665, %v1740
        %v1764 = vadd.f32 %v1666, %v1743
        %v1765 = vadd.f32 %v1667, %v1746
        %v1766 = vadd.f32 %v1668, %v1749
        %v1767 = vrot.slane %v1009, 1
        %v1768 = vrot.slane %v1010, 1
        %v1769 = vrot.slane %v1011, 1
        %v1770 = vrot.slane %v1012, 1
        %v1771 = vrot.slane %v1013, 1
        %v1772 = vrot.slane %v1014, 1
        %v1773 = vrot.slane %v1015, 1
        %v1774 = vrot.slane %v1016, 1
        %v1775 = vrot.slane %v1017, 1
        %v1776 = vrot.slane %v1018, 1
        %v1777 = vrot.slane %v1019, 1
        %v1778 = vrot.slane %v1020, 1
        %v1779 = vrot.slane %v1021, 1
        %v1780 = vrot.slane %v1022, 1
        %v1781 = vrot.slane %v1023, 1
        %v1782 = vrot.slane %v1024, 1
        %v1783 = vrot.slane %v1025, 1
        %v1784 = vrot.slane %v1026, 1
        %v1785 = vrot.slane %v1027, 1
        %v1786 = vrot.slane %v1028, 1
        %vm1787 = vcmp.lt.s32.totalorder %v1050, 7
        %v1788 = vsel %vm1787, %v1785, %v1786
        %v1789 = vsel %vm1787, %v1784, %v1785
        %v1790 = vsel %vm1787, %v1783, %v1784
        %v1791 = vsel %vm1787, %v1782, %v1783
        %v1792 = vsel %vm1787, %v1781, %v1782
        %v1793 = vsel %vm1787, %v1780, %v1781
        %v1794 = vsel %vm1787, %v1779, %v1780
        %v1795 = vsel %vm1787, %v1778, %v1779
        %v1796 = vsel %vm1787, %v1777, %v1778
        %v1797 = vsel %vm1787, %v1776, %v1777
        %v1798 = vsel %vm1787, %v1775, %v1776
        %v1799 = vsel %vm1787, %v1774, %v1775
        %v1800 = vsel %vm1787, %v1773, %v1774
        %v1801 = vsel %vm1787, %v1772, %v1773
        %v1802 = vsel %vm1787, %v1771, %v1772
        %v1803 = vsel %vm1787, %v1770, %v1771
        %v1804 = vsel %vm1787, %v1769, %v1770
        %v1805 = vsel %vm1787, %v1768, %v1769
        %v1806 = vsel %vm1787, %v1767, %v1768
        %v1807 = vsel %vm1787, %v1786, %v1767
        %vm1808 = vcmp.eq.s32.totalorder %v989, 15
        %vm1809 = vcmp.eq.s32.totalorder %v990, 15
        %vm1810 = vcmp.eq.s32.totalorder %v991, 15
        %vm1811 = vcmp.eq.s32.totalorder %v992, 15
        %vm1812 = vcmp.eq.s32.totalorder %v993, 15
        %vm1813 = vcmp.eq.s32.totalorder %v994, 15
        %vm1814 = vcmp.eq.s32.totalorder %v995, 15
        %vm1815 = vcmp.eq.s32.totalorder %v996, 15
        %vm1816 = vcmp.eq.s32.totalorder %v997, 15
        %vm1817 = vcmp.eq.s32.totalorder %v998, 15
        %vm1818 = vcmp.eq.s32.totalorder %v999, 15
        %vm1819 = vcmp.eq.s32.totalorder %v1000, 15
        %vm1820 = vcmp.eq.s32.totalorder %v1001, 15
        %vm1821 = vcmp.eq.s32.totalorder %v1002, 15
        %vm1822 = vcmp.eq.s32.totalorder %v1003, 15
        %vm1823 = vcmp.eq.s32.totalorder %v1004, 15
        %vm1824 = vcmp.eq.s32.totalorder %v1005, 15
        %vm1825 = vcmp.eq.s32.totalorder %v1006, 15
        %vm1826 = vcmp.eq.s32.totalorder %v1007, 15
        %vm1827 = vcmp.eq.s32.totalorder %v1008, 15
        %v1828 = vsel %vm1808, 1, 0
        %v1829 = vsel %vm1809, 1, 0
        %v1830 = vsel %vm1810, 1, 0
        %v1831 = vsel %vm1811, 1, 0
        %v1832 = vsel %vm1812, 1, 0
        %v1833 = vsel %vm1813, 1, 0
        %v1834 = vsel %vm1814, 1, 0
        %v1835 = vsel %vm1815, 1, 0
        %v1836 = vsel %vm1816, 1, 0
        %v1837 = vsel %vm1817, 1, 0
        %v1838 = vsel %vm1818, 1, 0
        %v1839 = vsel %vm1819, 1, 0
        %v1840 = vsel %vm1820, 1, 0
        %v1841 = vsel %vm1821, 1, 0
        %v1842 = vsel %vm1822, 1, 0
        %v1843 = vsel %vm1823, 1, 0
        %v1844 = vsel %vm1824, 1, 0
        %v1845 = vsel %vm1825, 1, 0
        %v1846 = vsel %vm1826, 1, 0
        %v1847 = vsel %vm1827, 1, 0
        %1848 = vset.pattern.permute.xlu0 0
        %1849 = vperm.xlu0 %1848, %v1828
        %v1850 = vpop.permute.xlu0 %1849
        %1851 = vset.pattern.permute.xlu0 0
        %1852 = vperm.xlu0 %1851, %v1829
        %v1853 = vpop.permute.xlu0 %1852
        %1854 = vset.pattern.permute.xlu0 0
        %1855 = vperm.xlu0 %1854, %v1830
        %v1856 = vpop.permute.xlu0 %1855
        %1857 = vset.pattern.permute.xlu0 0
        %1858 = vperm.xlu0 %1857, %v1831
        %v1859 = vpop.permute.xlu0 %1858
        %1860 = vset.pattern.permute.xlu0 0
        %1861 = vperm.xlu0 %1860, %v1832
        %v1862 = vpop.permute.xlu0 %1861
        %1863 = vset.pattern.permute.xlu0 0
        %1864 = vperm.xlu0 %1863, %v1833
        %v1865 = vpop.permute.xlu0 %1864
        %1866 = vset.pattern.permute.xlu0 0
        %1867 = vperm.xlu0 %1866, %v1834
        %v1868 = vpop.permute.xlu0 %1867
        %1869 = vset.pattern.permute.xlu0 0
        %1870 = vperm.xlu0 %1869, %v1835
        %v1871 = vpop.permute.xlu0 %1870
        %1872 = vset.pattern.permute.xlu0 0
        %1873 = vperm.xlu0 %1872, %v1836
        %v1874 = vpop.permute.xlu0 %1873
        %1875 = vset.pattern.permute.xlu0 0
        %1876 = vperm.xlu0 %1875, %v1837
        %v1877 = vpop.permute.xlu0 %1876
        %1878 = vset.pattern.permute.xlu0 0
        %1879 = vperm.xlu0 %1878, %v1838
        %v1880 = vpop.permute.xlu0 %1879
        %1881 = vset.pattern.permute.xlu0 0
        %1882 = vperm.xlu0 %1881, %v1839
        %v1883 = vpop.permute.xlu0 %1882
        %1884 = vset.pattern.permute.xlu0 0
        %1885 = vperm.xlu0 %1884, %v1840
        %v1886 = vpop.permute.xlu0 %1885
        %1887 = vset.pattern.permute.xlu0 0
        %1888 = vperm.xlu0 %1887, %v1841
        %v1889 = vpop.permute.xlu0 %1888
        %1890 = vset.pattern.permute.xlu0 0
        %1891 = vperm.xlu0 %1890, %v1842
        %v1892 = vpop.permute.xlu0 %1891
        %1893 = vset.pattern.permute.xlu0 0
        %1894 = vperm.xlu0 %1893, %v1843
        %v1895 = vpop.permute.xlu0 %1894
        %1896 = vset.pattern.permute.xlu0 0
        %1897 = vperm.xlu0 %1896, %v1844
        %v1898 = vpop.permute.xlu0 %1897
        %1899 = vset.pattern.permute.xlu0 0
        %1900 = vperm.xlu0 %1899, %v1845
        %v1901 = vpop.permute.xlu0 %1900
        %1902 = vset.pattern.permute.xlu0 0
        %1903 = vperm.xlu0 %1902, %v1846
        %v1904 = vpop.permute.xlu0 %1903
        %1905 = vset.pattern.permute.xlu0 0
        %1906 = vperm.xlu0 %1905, %v1847
        %v1907 = vpop.permute.xlu0 %1906
        %vm1908 = vcmp.eq.s32.totalorder %v1850, 1
        %vm1909 = vcmp.eq.s32.totalorder %v1853, 1
        %vm1910 = vcmp.eq.s32.totalorder %v1856, 1
        %vm1911 = vcmp.eq.s32.totalorder %v1859, 1
        %vm1912 = vcmp.eq.s32.totalorder %v1862, 1
        %vm1913 = vcmp.eq.s32.totalorder %v1865, 1
        %vm1914 = vcmp.eq.s32.totalorder %v1868, 1
        %vm1915 = vcmp.eq.s32.totalorder %v1871, 1
        %vm1916 = vcmp.eq.s32.totalorder %v1874, 1
        %vm1917 = vcmp.eq.s32.totalorder %v1877, 1
        %vm1918 = vcmp.eq.s32.totalorder %v1880, 1
        %vm1919 = vcmp.eq.s32.totalorder %v1883, 1
        %vm1920 = vcmp.eq.s32.totalorder %v1886, 1
        %vm1921 = vcmp.eq.s32.totalorder %v1889, 1
        %vm1922 = vcmp.eq.s32.totalorder %v1892, 1
        %vm1923 = vcmp.eq.s32.totalorder %v1895, 1
        %vm1924 = vcmp.eq.s32.totalorder %v1898, 1
        %vm1925 = vcmp.eq.s32.totalorder %v1901, 1
        %vm1926 = vcmp.eq.s32.totalorder %v1904, 1
        %vm1927 = vcmp.eq.s32.totalorder %v1907, 1
        %v1928 = vsel %vm1908, 0.0, %v1806
        %v1929 = vsel %vm1909, 0.0, %v1805
        %v1930 = vsel %vm1910, 0.0, %v1804
        %v1931 = vsel %vm1911, 0.0, %v1803
        %v1932 = vsel %vm1912, 0.0, %v1802
        %v1933 = vsel %vm1913, 0.0, %v1801
        %v1934 = vsel %vm1914, 0.0, %v1800
        %v1935 = vsel %vm1915, 0.0, %v1799
        %v1936 = vsel %vm1916, 0.0, %v1798
        %v1937 = vsel %vm1917, 0.0, %v1797
        %v1938 = vsel %vm1918, 0.0, %v1796
        %v1939 = vsel %vm1919, 0.0, %v1795
        %v1940 = vsel %vm1920, 0.0, %v1794
        %v1941 = vsel %vm1921, 0.0, %v1793
        %v1942 = vsel %vm1922, 0.0, %v1792
        %v1943 = vsel %vm1923, 0.0, %v1791
        %v1944 = vsel %vm1924, 0.0, %v1790
        %v1945 = vsel %vm1925, 0.0, %v1789
        %v1946 = vsel %vm1926, 0.0, %v1788
        %v1947 = vsel %vm1927, 0.0, %v1807
        %s1948 = scalar_lea.vmem [#allocation9], 256
        %v1949 = vld [vmem:[%s1948] sm:$0xff]
        %v1950 = vld [vmem:[%s1948 + $0x8] sm:$0xff]
        %v1951 = vld [vmem:[%s1948 + $0x10] sm:$0xff]
        %v1952 = vld [vmem:[%s1948 + $0x18] sm:$0xff]
        %v1953 = vld [vmem:[%s1948 + $0x20] sm:$0xff]
        %v1954 = vld [vmem:[%s1948 + $0x28] sm:$0xff]
        %v1955 = vld [vmem:[%s1948 + $0x30] sm:$0xff]
        %v1956 = vld [vmem:[%s1948 + $0x38] sm:$0xff]
        %v1957 = vld [vmem:[%s1948 + $0x40] sm:$0xff]
        %v1958 = vld [vmem:[%s1948 + $0x48] sm:$0xff]
        %v1959 = vld [vmem:[%s1948 + $0x50] sm:$0xff]
        %v1960 = vld [vmem:[%s1948 + $0x58] sm:$0xff]
        %v1961 = vld [vmem:[%s1948 + $0x60] sm:$0xff]
        %v1962 = vld [vmem:[%s1948 + $0x68] sm:$0xff]
        %v1963 = vld [vmem:[%s1948 + $0x70] sm:$0xff]
        %v1964 = vld [vmem:[%s1948 + $0x78] sm:$0xff]
        %1965 = vmatpush.msra.mxu0 %v1964
        %1966 = vmatpush.msra.mxu0 %v1963
        %1967 = vmatpush.msra.mxu0 %v1962
        %1968 = vmatpush.msra.mxu0 %v1961
        %1969 = vmatpush.msra.mxu0 %v1960
        %1970 = vmatpush.msra.mxu0 %v1959
        %1971 = vmatpush.msra.mxu0 %v1958
        %1972 = vmatpush.msra.mxu0 %v1957
        %1973 = vmatpush.msra.mxu0 %v1956
        %1974 = vmatpush.msra.mxu0 %v1955
        %1975 = vmatpush.msra.mxu0 %v1954
        %1976 = vmatpush.msra.mxu0 %v1953
        %1977 = vmatpush.msra.mxu0 %v1952
        %1978 = vmatpush.msra.mxu0 %v1951
        %1979 = vmatpush.msra.mxu0 %v1950
        %1980 = vmatpush.msra.mxu0 %v1949
        %1981 = vmatmul.f32.gmra.mxu0 %v1928
        %v1982 = vpop.f32.mrf.mxu0
        %v1983 = vadd.f32 0.0, %v1982
        %1984 = vmatmul.f32.gmra.mxu0 %v1929
        %v1985 = vpop.f32.mrf.mxu0
        %v1986 = vadd.f32 0.0, %v1985
        %1987 = vmatmul.f32.gmra.mxu0 %v1930
        %v1988 = vpop.f32.mrf.mxu0
        %v1989 = vadd.f32 0.0, %v1988
        %1990 = vmatmul.f32.gmra.mxu0 %v1931
        %v1991 = vpop.f32.mrf.mxu0
        %v1992 = vadd.f32 0.0, %v1991
        %1993 = vmatmul.f32.gmra.mxu0 %v1932
        %v1994 = vpop.f32.mrf.mxu0
        %v1995 = vadd.f32 0.0, %v1994
        %1996 = vmatmul.f32.gmra.mxu0 %v1933
        %v1997 = vpop.f32.mrf.mxu0
        %v1998 = vadd.f32 0.0, %v1997
        %1999 = vmatmul.f32.gmra.mxu0 %v1934
        %v2000 = vpop.f32.mrf.mxu0
        %v2001 = vadd.f32 0.0, %v2000
        %2002 = vmatmul.f32.gmra.mxu0 %v1935
        %v2003 = vpop.f32.mrf.mxu0
        %v2004 = vadd.f32 0.0, %v2003
        %2005 = vmatmul.f32.gmra.mxu0 %v1936
        %v2006 = vpop.f32.mrf.mxu0
        %v2007 = vadd.f32 0.0, %v2006
        %2008 = vmatmul.f32.gmra.mxu0 %v1937
        %v2009 = vpop.f32.mrf.mxu0
        %v2010 = vadd.f32 0.0, %v2009
        %2011 = vmatmul.f32.gmra.mxu0 %v1938
        %v2012 = vpop.f32.mrf.mxu0
        %v2013 = vadd.f32 0.0, %v2012
        %2014 = vmatmul.f32.gmra.mxu0 %v1939
        %v2015 = vpop.f32.mrf.mxu0
        %v2016 = vadd.f32 0.0, %v2015
        %2017 = vmatmul.f32.gmra.mxu0 %v1940
        %v2018 = vpop.f32.mrf.mxu0
        %v2019 = vadd.f32 0.0, %v2018
        %2020 = vmatmul.f32.gmra.mxu0 %v1941
        %v2021 = vpop.f32.mrf.mxu0
        %v2022 = vadd.f32 0.0, %v2021
        %2023 = vmatmul.f32.gmra.mxu0 %v1942
        %v2024 = vpop.f32.mrf.mxu0
        %v2025 = vadd.f32 0.0, %v2024
        %2026 = vmatmul.f32.gmra.mxu0 %v1943
        %v2027 = vpop.f32.mrf.mxu0
        %v2028 = vadd.f32 0.0, %v2027
        %2029 = vdwg.mxu0
        %v2030 = vadd.f32 %v1751, %v1983
        %v2031 = vadd.f32 %v1752, %v1986
        %v2032 = vadd.f32 %v1753, %v1989
        %v2033 = vadd.f32 %v1754, %v1992
        %v2034 = vadd.f32 %v1755, %v1995
        %v2035 = vadd.f32 %v1756, %v1998
        %v2036 = vadd.f32 %v1757, %v2001
        %v2037 = vadd.f32 %v1758, %v2004
        %v2038 = vadd.f32 %v1759, %v2007
        %v2039 = vadd.f32 %v1760, %v2010
        %v2040 = vadd.f32 %v1761, %v2013
        %v2041 = vadd.f32 %v1762, %v2016
        %v2042 = vadd.f32 %v1763, %v2019
        %v2043 = vadd.f32 %v1764, %v2022
        %v2044 = vadd.f32 %v1765, %v2025
        %v2045 = vadd.f32 %v1766, %v2028
        %s2046 = scalar_lea.vmem [#allocation9], 640
        %v2047 = vld [vmem:[%s2046] sm:$0xff]
        %v2048 = vld [vmem:[%s2046 + $0x8] sm:$0xff]
        %v2049 = vld [vmem:[%s2046 + $0x10] sm:$0xff]
        %v2050 = vld [vmem:[%s2046 + $0x18] sm:$0xff]
        %v2051 = vld [vmem:[%s2046 + $0x20] sm:$0xff]
        %v2052 = vld [vmem:[%s2046 + $0x28] sm:$0xff]
        %v2053 = vld [vmem:[%s2046 + $0x30] sm:$0xff]
        %v2054 = vld [vmem:[%s2046 + $0x38] sm:$0xff]
        %v2055 = vld [vmem:[%s2046 + $0x40] sm:$0xff]
        %v2056 = vld [vmem:[%s2046 + $0x48] sm:$0xff]
        %v2057 = vld [vmem:[%s2046 + $0x50] sm:$0xff]
        %v2058 = vld [vmem:[%s2046 + $0x58] sm:$0xff]
        %v2059 = vld [vmem:[%s2046 + $0x60] sm:$0xff]
        %v2060 = vld [vmem:[%s2046 + $0x68] sm:$0xff]
        %v2061 = vld [vmem:[%s2046 + $0x70] sm:$0xff]
        %v2062 = vld [vmem:[%s2046 + $0x78] sm:$0xff]
        %2063 = vmatpush.msra.mxu0 %v2062
        %2064 = vmatpush.msra.mxu0 %v2061
        %2065 = vmatpush.msra.mxu0 %v2060
        %2066 = vmatpush.msra.mxu0 %v2059
        %2067 = vmatpush.msra.mxu0 %v2058
        %2068 = vmatpush.msra.mxu0 %v2057
        %2069 = vmatpush.msra.mxu0 %v2056
        %2070 = vmatpush.msra.mxu0 %v2055
        %2071 = vmatpush.msra.mxu0 %v2054
        %2072 = vmatpush.msra.mxu0 %v2053
        %2073 = vmatpush.msra.mxu0 %v2052
        %2074 = vmatpush.msra.mxu0 %v2051
        %2075 = vmatpush.msra.mxu0 %v2050
        %2076 = vmatpush.msra.mxu0 %v2049
        %2077 = vmatpush.msra.mxu0 %v2048
        %2078 = vmatpush.msra.mxu0 %v2047
        %2079 = vmatmul.f32.gmra.mxu0 %v1930
        %v2080 = vpop.f32.mrf.mxu0
        %v2081 = vadd.f32 0.0, %v2080
        %2082 = vmatmul.f32.gmra.mxu0 %v1931
        %v2083 = vpop.f32.mrf.mxu0
        %v2084 = vadd.f32 0.0, %v2083
        %2085 = vmatmul.f32.gmra.mxu0 %v1932
        %v2086 = vpop.f32.mrf.mxu0
        %v2087 = vadd.f32 0.0, %v2086
        %2088 = vmatmul.f32.gmra.mxu0 %v1933
        %v2089 = vpop.f32.mrf.mxu0
        %v2090 = vadd.f32 0.0, %v2089
        %2091 = vmatmul.f32.gmra.mxu0 %v1934
        %v2092 = vpop.f32.mrf.mxu0
        %v2093 = vadd.f32 0.0, %v2092
        %2094 = vmatmul.f32.gmra.mxu0 %v1935
        %v2095 = vpop.f32.mrf.mxu0
        %v2096 = vadd.f32 0.0, %v2095
        %2097 = vmatmul.f32.gmra.mxu0 %v1936
        %v2098 = vpop.f32.mrf.mxu0
        %v2099 = vadd.f32 0.0, %v2098
        %2100 = vmatmul.f32.gmra.mxu0 %v1937
        %v2101 = vpop.f32.mrf.mxu0
        %v2102 = vadd.f32 0.0, %v2101
        %2103 = vmatmul.f32.gmra.mxu0 %v1938
        %v2104 = vpop.f32.mrf.mxu0
        %v2105 = vadd.f32 0.0, %v2104
        %2106 = vmatmul.f32.gmra.mxu0 %v1939
        %v2107 = vpop.f32.mrf.mxu0
        %v2108 = vadd.f32 0.0, %v2107
        %2109 = vmatmul.f32.gmra.mxu0 %v1940
        %v2110 = vpop.f32.mrf.mxu0
        %v2111 = vadd.f32 0.0, %v2110
        %2112 = vmatmul.f32.gmra.mxu0 %v1941
        %v2113 = vpop.f32.mrf.mxu0
        %v2114 = vadd.f32 0.0, %v2113
        %2115 = vmatmul.f32.gmra.mxu0 %v1942
        %v2116 = vpop.f32.mrf.mxu0
        %v2117 = vadd.f32 0.0, %v2116
        %2118 = vmatmul.f32.gmra.mxu0 %v1943
        %v2119 = vpop.f32.mrf.mxu0
        %v2120 = vadd.f32 0.0, %v2119
        %2121 = vmatmul.f32.gmra.mxu0 %v1944
        %v2122 = vpop.f32.mrf.mxu0
        %v2123 = vadd.f32 0.0, %v2122
        %2124 = vmatmul.f32.gmra.mxu0 %v1945
        %v2125 = vpop.f32.mrf.mxu0
        %v2126 = vadd.f32 0.0, %v2125
        %2127 = vdwg.mxu0
        %v2128 = vadd.f32 %v2030, %v2081
        %v2129 = vadd.f32 %v2031, %v2084
        %v2130 = vadd.f32 %v2032, %v2087
        %v2131 = vadd.f32 %v2033, %v2090
        %v2132 = vadd.f32 %v2034, %v2093
        %v2133 = vadd.f32 %v2035, %v2096
        %v2134 = vadd.f32 %v2036, %v2099
        %v2135 = vadd.f32 %v2037, %v2102
        %v2136 = vadd.f32 %v2038, %v2105
        %v2137 = vadd.f32 %v2039, %v2108
        %v2138 = vadd.f32 %v2040, %v2111
        %v2139 = vadd.f32 %v2041, %v2114
        %v2140 = vadd.f32 %v2042, %v2117
        %v2141 = vadd.f32 %v2043, %v2120
        %v2142 = vadd.f32 %v2044, %v2123
        %v2143 = vadd.f32 %v2045, %v2126
        %s2144 = scalar_lea.vmem [#allocation9], 1024
        %v2145 = vld [vmem:[%s2144] sm:$0xff]
        %v2146 = vld [vmem:[%s2144 + $0x8] sm:$0xff]
        %v2147 = vld [vmem:[%s2144 + $0x10] sm:$0xff]
        %v2148 = vld [vmem:[%s2144 + $0x18] sm:$0xff]
        %v2149 = vld [vmem:[%s2144 + $0x20] sm:$0xff]
        %v2150 = vld [vmem:[%s2144 + $0x28] sm:$0xff]
        %v2151 = vld [vmem:[%s2144 + $0x30] sm:$0xff]
        %v2152 = vld [vmem:[%s2144 + $0x38] sm:$0xff]
        %v2153 = vld [vmem:[%s2144 + $0x40] sm:$0xff]
        %v2154 = vld [vmem:[%s2144 + $0x48] sm:$0xff]
        %v2155 = vld [vmem:[%s2144 + $0x50] sm:$0xff]
        %v2156 = vld [vmem:[%s2144 + $0x58] sm:$0xff]
        %v2157 = vld [vmem:[%s2144 + $0x60] sm:$0xff]
        %v2158 = vld [vmem:[%s2144 + $0x68] sm:$0xff]
        %v2159 = vld [vmem:[%s2144 + $0x70] sm:$0xff]
        %v2160 = vld [vmem:[%s2144 + $0x78] sm:$0xff]
        %2161 = vmatpush.msra.mxu0 %v2160
        %2162 = vmatpush.msra.mxu0 %v2159
        %2163 = vmatpush.msra.mxu0 %v2158
        %2164 = vmatpush.msra.mxu0 %v2157
        %2165 = vmatpush.msra.mxu0 %v2156
        %2166 = vmatpush.msra.mxu0 %v2155
        %2167 = vmatpush.msra.mxu0 %v2154
        %2168 = vmatpush.msra.mxu0 %v2153
        %2169 = vmatpush.msra.mxu0 %v2152
        %2170 = vmatpush.msra.mxu0 %v2151
        %2171 = vmatpush.msra.mxu0 %v2150
        %2172 = vmatpush.msra.mxu0 %v2149
        %2173 = vmatpush.msra.mxu0 %v2148
        %2174 = vmatpush.msra.mxu0 %v2147
        %2175 = vmatpush.msra.mxu0 %v2146
        %2176 = vmatpush.msra.mxu0 %v2145
        %2177 = vmatmul.f32.gmra.mxu0 %v1932
        %v2178 = vpop.f32.mrf.mxu0
        %v2179 = vadd.f32 0.0, %v2178
        %2180 = vmatmul.f32.gmra.mxu0 %v1933
        %v2181 = vpop.f32.mrf.mxu0
        %v2182 = vadd.f32 0.0, %v2181
        %2183 = vmatmul.f32.gmra.mxu0 %v1934
        %v2184 = vpop.f32.mrf.mxu0
        %v2185 = vadd.f32 0.0, %v2184
        %2186 = vmatmul.f32.gmra.mxu0 %v1935
        %v2187 = vpop.f32.mrf.mxu0
        %v2188 = vadd.f32 0.0, %v2187
        %2189 = vmatmul.f32.gmra.mxu0 %v1936
        %v2190 = vpop.f32.mrf.mxu0
        %v2191 = vadd.f32 0.0, %v2190
        %2192 = vmatmul.f32.gmra.mxu0 %v1937
        %v2193 = vpop.f32.mrf.mxu0
        %v2194 = vadd.f32 0.0, %v2193
        %2195 = vmatmul.f32.gmra.mxu0 %v1938
        %v2196 = vpop.f32.mrf.mxu0
        %v2197 = vadd.f32 0.0, %v2196
        %2198 = vmatmul.f32.gmra.mxu0 %v1939
        %v2199 = vpop.f32.mrf.mxu0
        %v2200 = vadd.f32 0.0, %v2199
        %2201 = vmatmul.f32.gmra.mxu0 %v1940
        %v2202 = vpop.f32.mrf.mxu0
        %v2203 = vadd.f32 0.0, %v2202
        %2204 = vmatmul.f32.gmra.mxu0 %v1941
        %v2205 = vpop.f32.mrf.mxu0
        %v2206 = vadd.f32 0.0, %v2205
        %2207 = vmatmul.f32.gmra.mxu0 %v1942
        %v2208 = vpop.f32.mrf.mxu0
        %v2209 = vadd.f32 0.0, %v2208
        %2210 = vmatmul.f32.gmra.mxu0 %v1943
        %v2211 = vpop.f32.mrf.mxu0
        %v2212 = vadd.f32 0.0, %v2211
        %2213 = vmatmul.f32.gmra.mxu0 %v1944
        %v2214 = vpop.f32.mrf.mxu0
        %v2215 = vadd.f32 0.0, %v2214
        %2216 = vmatmul.f32.gmra.mxu0 %v1945
        %v2217 = vpop.f32.mrf.mxu0
        %v2218 = vadd.f32 0.0, %v2217
        %2219 = vmatmul.f32.gmra.mxu0 %v1946
        %v2220 = vpop.f32.mrf.mxu0
        %v2221 = vadd.f32 0.0, %v2220
        %2222 = vmatmul.f32.gmra.mxu0 %v1947
        %v2223 = vpop.f32.mrf.mxu0
        %v2224 = vadd.f32 0.0, %v2223
        %2225 = vdwg.mxu0
        %v2226 = vadd.f32 %v2128, %v2179
        %v2227 = vadd.f32 %v2129, %v2182
        %v2228 = vadd.f32 %v2130, %v2185
        %v2229 = vadd.f32 %v2131, %v2188
        %v2230 = vadd.f32 %v2132, %v2191
        %v2231 = vadd.f32 %v2133, %v2194
        %v2232 = vadd.f32 %v2134, %v2197
        %v2233 = vadd.f32 %v2135, %v2200
        %v2234 = vadd.f32 %v2136, %v2203
        %v2235 = vadd.f32 %v2137, %v2206
        %v2236 = vadd.f32 %v2138, %v2209
        %v2237 = vadd.f32 %v2139, %v2212
        %v2238 = vadd.f32 %v2140, %v2215
        %v2239 = vadd.f32 %v2141, %v2218
        %v2240 = vadd.f32 %v2142, %v2221
        %v2241 = vadd.f32 %v2143, %v2224
        %v2242 = vld [vmem:[%s8] sm:$0x1]
        %v2244 = vperm.slane %v2242, 0
        %v2246 = vmul.f32 %v2226, %v2244
        %v2247 = vmul.f32 %v2227, %v2244
        %v2248 = vmul.f32 %v2228, %v2244
        %v2249 = vmul.f32 %v2229, %v2244
        %v2250 = vmul.f32 %v2230, %v2244
        %v2251 = vmul.f32 %v2231, %v2244
        %v2252 = vmul.f32 %v2232, %v2244
        %v2253 = vmul.f32 %v2233, %v2244
        %v2254 = vmul.f32 %v2234, %v2244
        %v2255 = vmul.f32 %v2235, %v2244
        %v2256 = vmul.f32 %v2236, %v2244
        %v2257 = vmul.f32 %v2237, %v2244
        %v2258 = vmul.f32 %v2238, %v2244
        %v2259 = vmul.f32 %v2239, %v2244
        %v2260 = vmul.f32 %v2240, %v2244
        %v2261 = vmul.f32 %v2241, %v2244
        %v2262 = vld [vmem:[%s9] sm:$0x1]
        %v2264 = vperm.slane %v2262, 0
        %v2266 = vadd.f32 %v2246, %v2264
        %v2267 = vadd.f32 %v2247, %v2264
        %v2268 = vadd.f32 %v2248, %v2264
        %v2269 = vadd.f32 %v2249, %v2264
        %v2270 = vadd.f32 %v2250, %v2264
        %v2271 = vadd.f32 %v2251, %v2264
        %v2272 = vadd.f32 %v2252, %v2264
        %v2273 = vadd.f32 %v2253, %v2264
        %v2274 = vadd.f32 %v2254, %v2264
        %v2275 = vadd.f32 %v2255, %v2264
        %v2276 = vadd.f32 %v2256, %v2264
        %v2277 = vadd.f32 %v2257, %v2264
        %v2278 = vadd.f32 %v2258, %v2264
        %v2279 = vadd.f32 %v2259, %v2264
        %v2280 = vadd.f32 %v2260, %v2264
        %v2281 = vadd.f32 %v2261, %v2264
        %v2282 = vmax.f32 %v2266, 0.0
        %v2283 = vmax.f32 %v2267, 0.0
        %v2284 = vmax.f32 %v2268, 0.0
        %v2285 = vmax.f32 %v2269, 0.0
        %v2286 = vmax.f32 %v2270, 0.0
        %v2287 = vmax.f32 %v2271, 0.0
        %v2288 = vmax.f32 %v2272, 0.0
        %v2289 = vmax.f32 %v2273, 0.0
        %v2290 = vmax.f32 %v2274, 0.0
        %v2291 = vmax.f32 %v2275, 0.0
        %v2292 = vmax.f32 %v2276, 0.0
        %v2293 = vmax.f32 %v2277, 0.0
        %v2294 = vmax.f32 %v2278, 0.0
        %v2295 = vmax.f32 %v2279, 0.0
        %v2296 = vmax.f32 %v2280, 0.0
        %v2297 = vmax.f32 %v2281, 0.0
        %v2298 = vld [vmem:[#allocation11] sm:$0xff]
        %v2299 = vld [vmem:[#allocation11 + $0x8] sm:$0xff]
        %v2300 = vld [vmem:[#allocation11 + $0x10] sm:$0xff]
        %v2301 = vld [vmem:[#allocation11 + $0x18] sm:$0xff]
        %v2302 = vld [vmem:[#allocation11 + $0x20] sm:$0xff]
        %v2303 = vld [vmem:[#allocation11 + $0x28] sm:$0xff]
        %v2304 = vld [vmem:[#allocation11 + $0x30] sm:$0xff]
        %v2305 = vld [vmem:[#allocation11 + $0x38] sm:$0xff]
        %v2306 = vld [vmem:[#allocation11 + $0x40] sm:$0xff]
        %v2307 = vld [vmem:[#allocation11 + $0x48] sm:$0xff]
        %v2308 = vld [vmem:[#allocation11 + $0x50] sm:$0xff]
        %v2309 = vld [vmem:[#allocation11 + $0x58] sm:$0xff]
        %v2310 = vld [vmem:[#allocation11 + $0x60] sm:$0xff]
        %v2311 = vld [vmem:[#allocation11 + $0x68] sm:$0xff]
        %v2312 = vld [vmem:[#allocation11 + $0x70] sm:$0xff]
        %v2313 = vld [vmem:[#allocation11 + $0x78] sm:$0xff]
        %2314 = vmatpush.msra.mxu0 %v2313
        %2315 = vmatpush.msra.mxu0 %v2312
        %2316 = vmatpush.msra.mxu0 %v2311
        %2317 = vmatpush.msra.mxu0 %v2310
        %2318 = vmatpush.msra.mxu0 %v2309
        %2319 = vmatpush.msra.mxu0 %v2308
        %2320 = vmatpush.msra.mxu0 %v2307
        %2321 = vmatpush.msra.mxu0 %v2306
        %2322 = vmatpush.msra.mxu0 %v2305
        %2323 = vmatpush.msra.mxu0 %v2304
        %2324 = vmatpush.msra.mxu0 %v2303
        %2325 = vmatpush.msra.mxu0 %v2302
        %2326 = vmatpush.msra.mxu0 %v2301
        %2327 = vmatpush.msra.mxu0 %v2300
        %2328 = vmatpush.msra.mxu0 %v2299
        %2329 = vmatpush.msra.mxu0 %v2298
        %2330 = vmatmul.f32.gmra.mxu0 %v2282
        %v2331 = vpop.f32.mrf.mxu0
        %v2332 = vadd.f32 0.0, %v2331
        %2333 = vmatmul.f32.gmra.mxu0 %v2283
        %v2334 = vpop.f32.mrf.mxu0
        %v2335 = vadd.f32 0.0, %v2334
        %2336 = vmatmul.f32.gmra.mxu0 %v2284
        %v2337 = vpop.f32.mrf.mxu0
        %v2338 = vadd.f32 0.0, %v2337
        %2339 = vmatmul.f32.gmra.mxu0 %v2285
        %v2340 = vpop.f32.mrf.mxu0
        %v2341 = vadd.f32 0.0, %v2340
        %2342 = vmatmul.f32.gmra.mxu0 %v2286
        %v2343 = vpop.f32.mrf.mxu0
        %v2344 = vadd.f32 0.0, %v2343
        %2345 = vmatmul.f32.gmra.mxu0 %v2287
        %v2346 = vpop.f32.mrf.mxu0
        %v2347 = vadd.f32 0.0, %v2346
        %2348 = vmatmul.f32.gmra.mxu0 %v2288
        %v2349 = vpop.f32.mrf.mxu0
        %v2350 = vadd.f32 0.0, %v2349
        %2351 = vmatmul.f32.gmra.mxu0 %v2289
        %v2352 = vpop.f32.mrf.mxu0
        %v2353 = vadd.f32 0.0, %v2352
        %2354 = vmatmul.f32.gmra.mxu0 %v2290
        %v2355 = vpop.f32.mrf.mxu0
        %v2356 = vadd.f32 0.0, %v2355
        %2357 = vmatmul.f32.gmra.mxu0 %v2291
        %v2358 = vpop.f32.mrf.mxu0
        %v2359 = vadd.f32 0.0, %v2358
        %2360 = vmatmul.f32.gmra.mxu0 %v2292
        %v2361 = vpop.f32.mrf.mxu0
        %v2362 = vadd.f32 0.0, %v2361
        %2363 = vmatmul.f32.gmra.mxu0 %v2293
        %v2364 = vpop.f32.mrf.mxu0
        %v2365 = vadd.f32 0.0, %v2364
        %2366 = vmatmul.f32.gmra.mxu0 %v2294
        %v2367 = vpop.f32.mrf.mxu0
        %v2368 = vadd.f32 0.0, %v2367
        %2369 = vmatmul.f32.gmra.mxu0 %v2295
        %v2370 = vpop.f32.mrf.mxu0
        %v2371 = vadd.f32 0.0, %v2370
        %2372 = vmatmul.f32.gmra.mxu0 %v2296
        %v2373 = vpop.f32.mrf.mxu0
        %v2374 = vadd.f32 0.0, %v2373
        %2375 = vmatmul.f32.gmra.mxu0 %v2297
        %v2376 = vpop.f32.mrf.mxu0
        %v2377 = vadd.f32 0.0, %v2376
        %2378 = vdwg.mxu0
        %v2379 = vld [vmem:[%s11] sm:$0x1]
        %v2381 = vperm.slane %v2379, 0
        %v2383 = vmul.f32 %v2332, %v2381
        %v2384 = vmul.f32 %v2335, %v2381
        %v2385 = vmul.f32 %v2338, %v2381
        %v2386 = vmul.f32 %v2341, %v2381
        %v2387 = vmul.f32 %v2344, %v2381
        %v2388 = vmul.f32 %v2347, %v2381
        %v2389 = vmul.f32 %v2350, %v2381
        %v2390 = vmul.f32 %v2353, %v2381
        %v2391 = vmul.f32 %v2356, %v2381
        %v2392 = vmul.f32 %v2359, %v2381
        %v2393 = vmul.f32 %v2362, %v2381
        %v2394 = vmul.f32 %v2365, %v2381
        %v2395 = vmul.f32 %v2368, %v2381
        %v2396 = vmul.f32 %v2371, %v2381
        %v2397 = vmul.f32 %v2374, %v2381
        %v2398 = vmul.f32 %v2377, %v2381
        %v2399 = vld [vmem:[%s12] sm:$0x1]
        %v2401 = vperm.slane %v2399, 0
        %v2403 = vadd.f32 %v2383, %v2401
        %v2404 = vadd.f32 %v2384, %v2401
        %v2405 = vadd.f32 %v2385, %v2401
        %v2406 = vadd.f32 %v2386, %v2401
        %v2407 = vadd.f32 %v2387, %v2401
        %v2408 = vadd.f32 %v2388, %v2401
        %v2409 = vadd.f32 %v2389, %v2401
        %v2410 = vadd.f32 %v2390, %v2401
        %v2411 = vadd.f32 %v2391, %v2401
        %v2412 = vadd.f32 %v2392, %v2401
        %v2413 = vadd.f32 %v2393, %v2401
        %v2414 = vadd.f32 %v2394, %v2401
        %v2415 = vadd.f32 %v2395, %v2401
        %v2416 = vadd.f32 %v2396, %v2401
        %v2417 = vadd.f32 %v2397, %v2401
        %v2418 = vadd.f32 %v2398, %v2401
        %v2419 = vld [vmem:[#allocation12] sm:$0xff]
        %v2420 = vld [vmem:[#allocation12 + $0x8] sm:$0xff]
        %v2421 = vld [vmem:[#allocation12 + $0x10] sm:$0xff]
        %v2422 = vld [vmem:[#allocation12 + $0x18] sm:$0xff]
        %v2423 = vld [vmem:[#allocation12 + $0x20] sm:$0xff]
        %v2424 = vld [vmem:[#allocation12 + $0x28] sm:$0xff]
        %v2425 = vld [vmem:[#allocation12 + $0x30] sm:$0xff]
        %v2426 = vld [vmem:[#allocation12 + $0x38] sm:$0xff]
        %v2427 = vld [vmem:[#allocation12 + $0x40] sm:$0xff]
        %v2428 = vld [vmem:[#allocation12 + $0x48] sm:$0xff]
        %v2429 = vld [vmem:[#allocation12 + $0x50] sm:$0xff]
        %v2430 = vld [vmem:[#allocation12 + $0x58] sm:$0xff]
        %v2431 = vld [vmem:[#allocation12 + $0x60] sm:$0xff]
        %v2432 = vld [vmem:[#allocation12 + $0x68] sm:$0xff]
        %v2433 = vld [vmem:[#allocation12 + $0x70] sm:$0xff]
        %v2434 = vld [vmem:[#allocation12 + $0x78] sm:$0xff]
        %2435 = vmatpush.msra.mxu0 %v2434
        %2436 = vmatpush.msra.mxu0 %v2433
        %2437 = vmatpush.msra.mxu0 %v2432
        %2438 = vmatpush.msra.mxu0 %v2431
        %2439 = vmatpush.msra.mxu0 %v2430
        %2440 = vmatpush.msra.mxu0 %v2429
        %2441 = vmatpush.msra.mxu0 %v2428
        %2442 = vmatpush.msra.mxu0 %v2427
        %2443 = vmatpush.msra.mxu0 %v2426
        %2444 = vmatpush.msra.mxu0 %v2425
        %2445 = vmatpush.msra.mxu0 %v2424
        %2446 = vmatpush.msra.mxu0 %v2423
        %2447 = vmatpush.msra.mxu0 %v2422
        %2448 = vmatpush.msra.mxu0 %v2421
        %2449 = vmatpush.msra.mxu0 %v2420
        %2450 = vmatpush.msra.mxu0 %v2419
        %2451 = vmatmul.f32.gmra.mxu0 %v752
        %v2452 = vpop.f32.mrf.mxu0
        %v2453 = vadd.f32 0.0, %v2452
        %2454 = vmatmul.f32.gmra.mxu0 %v753
        %v2455 = vpop.f32.mrf.mxu0
        %v2456 = vadd.f32 0.0, %v2455
        %2457 = vmatmul.f32.gmra.mxu0 %v754
        %v2458 = vpop.f32.mrf.mxu0
        %v2459 = vadd.f32 0.0, %v2458
        %2460 = vmatmul.f32.gmra.mxu0 %v755
        %v2461 = vpop.f32.mrf.mxu0
        %v2462 = vadd.f32 0.0, %v2461
        %2463 = vmatmul.f32.gmra.mxu0 %v756
        %v2464 = vpop.f32.mrf.mxu0
        %v2465 = vadd.f32 0.0, %v2464
        %2466 = vmatmul.f32.gmra.mxu0 %v757
        %v2467 = vpop.f32.mrf.mxu0
        %v2468 = vadd.f32 0.0, %v2467
        %2469 = vmatmul.f32.gmra.mxu0 %v758
        %v2470 = vpop.f32.mrf.mxu0
        %v2471 = vadd.f32 0.0, %v2470
        %2472 = vmatmul.f32.gmra.mxu0 %v759
        %v2473 = vpop.f32.mrf.mxu0
        %v2474 = vadd.f32 0.0, %v2473
        %2475 = vmatmul.f32.gmra.mxu0 %v760
        %v2476 = vpop.f32.mrf.mxu0
        %v2477 = vadd.f32 0.0, %v2476
        %2478 = vmatmul.f32.gmra.mxu0 %v761
        %v2479 = vpop.f32.mrf.mxu0
        %v2480 = vadd.f32 0.0, %v2479
        %2481 = vmatmul.f32.gmra.mxu0 %v762
        %v2482 = vpop.f32.mrf.mxu0
        %v2483 = vadd.f32 0.0, %v2482
        %2484 = vmatmul.f32.gmra.mxu0 %v763
        %v2485 = vpop.f32.mrf.mxu0
        %v2486 = vadd.f32 0.0, %v2485
        %2487 = vmatmul.f32.gmra.mxu0 %v764
        %v2488 = vpop.f32.mrf.mxu0
        %v2489 = vadd.f32 0.0, %v2488
        %2490 = vmatmul.f32.gmra.mxu0 %v765
        %v2491 = vpop.f32.mrf.mxu0
        %v2492 = vadd.f32 0.0, %v2491
        %2493 = vmatmul.f32.gmra.mxu0 %v766
        %v2494 = vpop.f32.mrf.mxu0
        %v2495 = vadd.f32 0.0, %v2494
        %2496 = vmatmul.f32.gmra.mxu0 %v767
        %v2497 = vpop.f32.mrf.mxu0
        %v2498 = vadd.f32 0.0, %v2497
        %2499 = vdwg.mxu0
        %v2500 = vld [vmem:[%s14] sm:$0x1]
        %v2502 = vperm.slane %v2500, 0
        %v2504 = vmul.f32 %v2453, %v2502
        %v2505 = vmul.f32 %v2456, %v2502
        %v2506 = vmul.f32 %v2459, %v2502
        %v2507 = vmul.f32 %v2462, %v2502
        %v2508 = vmul.f32 %v2465, %v2502
        %v2509 = vmul.f32 %v2468, %v2502
        %v2510 = vmul.f32 %v2471, %v2502
        %v2511 = vmul.f32 %v2474, %v2502
        %v2512 = vmul.f32 %v2477, %v2502
        %v2513 = vmul.f32 %v2480, %v2502
        %v2514 = vmul.f32 %v2483, %v2502
        %v2515 = vmul.f32 %v2486, %v2502
        %v2516 = vmul.f32 %v2489, %v2502
        %v2517 = vmul.f32 %v2492, %v2502
        %v2518 = vmul.f32 %v2495, %v2502
        %v2519 = vmul.f32 %v2498, %v2502
        %v2520 = vld [vmem:[%s15] sm:$0x1]
        %v2522 = vperm.slane %v2520, 0
        %v2524 = vadd.f32 %v2504, %v2522
        %v2525 = vadd.f32 %v2505, %v2522
        %v2526 = vadd.f32 %v2506, %v2522
        %v2527 = vadd.f32 %v2507, %v2522
        %v2528 = vadd.f32 %v2508, %v2522
        %v2529 = vadd.f32 %v2509, %v2522
        %v2530 = vadd.f32 %v2510, %v2522
        %v2531 = vadd.f32 %v2511, %v2522
        %v2532 = vadd.f32 %v2512, %v2522
        %v2533 = vadd.f32 %v2513, %v2522
        %v2534 = vadd.f32 %v2514, %v2522
        %v2535 = vadd.f32 %v2515, %v2522
        %v2536 = vadd.f32 %v2516, %v2522
        %v2537 = vadd.f32 %v2517, %v2522
        %v2538 = vadd.f32 %v2518, %v2522
        %v2539 = vadd.f32 %v2519, %v2522
        %v2540 = vadd.f32 %v2403, %v2524
        %v2541 = vadd.f32 %v2404, %v2525
        %v2542 = vadd.f32 %v2405, %v2526
        %v2543 = vadd.f32 %v2406, %v2527
        %v2544 = vadd.f32 %v2407, %v2528
        %v2545 = vadd.f32 %v2408, %v2529
        %v2546 = vadd.f32 %v2409, %v2530
        %v2547 = vadd.f32 %v2410, %v2531
        %v2548 = vadd.f32 %v2411, %v2532
        %v2549 = vadd.f32 %v2412, %v2533
        %v2550 = vadd.f32 %v2413, %v2534
        %v2551 = vadd.f32 %v2414, %v2535
        %v2552 = vadd.f32 %v2415, %v2536
        %v2553 = vadd.f32 %v2416, %v2537
        %v2554 = vadd.f32 %v2417, %v2538
        %v2555 = vadd.f32 %v2418, %v2539
        %v2556 = vmax.f32 %v2540, 0.0
        %v2557 = vmax.f32 %v2541, 0.0
        %v2558 = vmax.f32 %v2542, 0.0
        %v2559 = vmax.f32 %v2543, 0.0
        %v2560 = vmax.f32 %v2544, 0.0
        %v2561 = vmax.f32 %v2545, 0.0
        %v2562 = vmax.f32 %v2546, 0.0
        %v2563 = vmax.f32 %v2547, 0.0
        %v2564 = vmax.f32 %v2548, 0.0
        %v2565 = vmax.f32 %v2549, 0.0
        %v2566 = vmax.f32 %v2550, 0.0
        %v2567 = vmax.f32 %v2551, 0.0
        %v2568 = vmax.f32 %v2552, 0.0
        %v2569 = vmax.f32 %v2553, 0.0
        %v2570 = vmax.f32 %v2554, 0.0
        %v2571 = vmax.f32 %v2555, 0.0
        %2572 = vst [vmem:[%s723] sm:$0xff] %v2556
        %2573 = vst [vmem:[%s723 + $0x8] sm:$0xff] %v2557
        %2574 = vst [vmem:[%s723 + $0x10] sm:$0xff] %v2558
        %2575 = vst [vmem:[%s723 + $0x18] sm:$0xff] %v2559
        %2576 = vst [vmem:[%s723 + $0x20] sm:$0xff] %v2560
        %2577 = vst [vmem:[%s723 + $0x28] sm:$0xff] %v2561
        %2578 = vst [vmem:[%s723 + $0x30] sm:$0xff] %v2562
        %2579 = vst [vmem:[%s723 + $0x38] sm:$0xff] %v2563
        %2580 = vst [vmem:[%s723 + $0x40] sm:$0xff] %v2564
        %2581 = vst [vmem:[%s723 + $0x48] sm:$0xff] %v2565
        %2582 = vst [vmem:[%s723 + $0x50] sm:$0xff] %v2566
        %2583 = vst [vmem:[%s723 + $0x58] sm:$0xff] %v2567
        %2584 = vst [vmem:[%s723 + $0x60] sm:$0xff] %v2568
        %2585 = vst [vmem:[%s723 + $0x68] sm:$0xff] %v2569
        %2586 = vst [vmem:[%s723 + $0x70] sm:$0xff] %v2570
        %2587 = vst [vmem:[%s723 + $0x78] sm:$0xff] %v2571
        %s2588 = sand.u32 %s433, 1
        %s2589 = scalar_lea.sflag [#allocation5], %s2588
        %s2590 = sand.u32 %s433, 1
        %s2591 = smul.addr %s2590, 128
        %s2592 = scalar_lea.vmem [#allocation14], %s2591
        // Predicated region
        $region125: #{tpu_custom_call.1} parent=83 // pred_check
          %p2593 = pneg %p443
        $region126: #{tpu_custom_call.1} parent=83 // pred_check_branch
          %2595 = sbr.rel (%p2593) target = $region128
        $region127: #{tpu_custom_call.1} parent=83 // pred_region
          %s2596 = smul.u32 8, %s43
          %2598 = vsyncadd %s2589, 0
          %s2599 = smul.addr %s2596, 2
          %s2600 = smul.addr %s42, 32
          %s2601 = sadd.s32 %s2599, %s2600
          %s2602 = smul.addr %s2601, 8
          %s2603 = scalar_lea.hbm %s16, %s2602
          %s2604 = sshll.u32 %s2592, 4
          %s2605 = int_to_ptr.vmem [resolvable:$true] %s2604
          %s2606 = sshll.u32 %s2603, 4
          %s2607 = int_to_ptr.hbm [resolvable:$true] %s2606
          %2612 = dma.vmem_to_hbm [thread:$0]  %s2605, 2048, %s2607, %s2589, 128, 128, 8
        $region128: #{tpu_custom_call.1} parent=83 // pred_fallthru
          _
      $region84: #{tpu_custom_call.1} parent=5 // pred_fallthru
        _
      %p2613 = scmp.le.s32.totalorder 2, %s33
      // Predicated region
      $region129: #{tpu_custom_call.1} parent=5 // pred_check
        %p2614 = pneg %p2613
      $region130: #{tpu_custom_call.1} parent=5 // pred_check_branch
        %2616 = sbr.rel (%p2614) target = $region132
      $region131: #{tpu_custom_call.1} parent=5 // pred_region
        %s2617 = ssub.s32 %s33, 2
        // Predicated region
        $region133: #{tpu_custom_call.1} parent=131 // pred_check
          %p2618 = pneg %p449
        $region134: #{tpu_custom_call.1} parent=131 // pred_check_branch
          %2620 = sbr.rel (%p2618) target = $region136
        $region135: #{tpu_custom_call.1} parent=131 // pred_region
          %s2621 = sand.u32 %s434, 1
          %s2622 = scalar_lea.sflag [#allocation5], %s2621
          %s2623 = sand.u32 %s434, 1
          %s2624 = smul.addr %s2623, 128
          %s2625 = scalar_lea.vmem [#allocation14], %s2624
          %2627 = dma.done %s2622, 2048
        $region136: #{tpu_custom_call.1} parent=131 // pred_fallthru
          _
      $region132: #{tpu_custom_call.1} parent=5 // pred_fallthru
        _
    $region6: #{tpu_custom_call.1} parent=1 // loop_footer
      %s37 = sadd.s32 1, %s33
    $region7: #{tpu_custom_call.1} parent=1 // loop_footer_branch
      %32 = sbr.rel target = $region3
    $region8: #{tpu_custom_call.1} parent=1 // loop_exit
      _
    %2628 = vsyncpa [#allocation4], 1
    %s2629 = scalar_lea.sflag [#allocation4], 1
    %2630 = vsyncpa %s2629, 1
    %2631 = vsyncpa [#allocation7], 1
    %s2632 = scalar_lea.sflag [#allocation7], 1
    %2633 = vsyncpa %s2632, 1
    %2634 = vsyncpa [#allocation10], 1
    %2635 = vsyncpa [#allocation13], 1
    %2636 = vsyncpa [#allocation5], 1
    %s2637 = scalar_lea.sflag [#allocation5], 1
    %2638 = vsyncpa %s2637, 1

</llo_original>
